<compile_context>
chip_gen: v7x
topology: tpu7x:2x2x1
jax: 0.10.0
libtpu: 0.0.40
codegen_flags: <defaults>
</compile_context>

<pallas_src>
import jax
import jax.numpy as jnp
import numpy as np
from jax.experimental import pallas as pl
from jax.experimental.pallas import tpu as pltpu

GROUPS = 32
EPS = 1e-6


# ---------------------------------------------------------------------------
# Kernel 1: per-channel partial sum / sum-of-squares over one HW tile.
# Fully "parallel" grid (B, n_tiles); tiny reductions finish in the wrapper.
# ---------------------------------------------------------------------------
def _group_stats_kernel(x_ref, sum_ref, sq_ref):
    x = x_ref[0]                                          # (C, ts) f32
    sum_ref[0, 0] = jnp.sum(x, axis=-1, keepdims=True)    # (C, 1)
    sq_ref[0, 0] = jnp.sum(x * x, axis=-1, keepdims=True)


# ---------------------------------------------------------------------------
# Kernel 2: GroupNorm affine (precomputed per-channel scale/shift) + fused QKV.
# q, v stored channel-major (C, ts) -> lane-dense unmasked stores; k stored
# position-major (ts, C) (single transpose) so the attention kernel's matmuls
# are all canonical (no transposed contractions anywhere).
# ---------------------------------------------------------------------------
def _norm_qkv_kernel(x_ref, scale_ref, shift_ref, w_ref, b_ref,
                     q_ref, k_ref, v_ref):
    C = x_ref.shape[1]
    x = x_ref[0]                                                  # (C, ts) f32
    # GroupNorm as a single per-channel FMA (stats folded in the wrapper).
    h = (x * scale_ref[0] + shift_ref[0]).astype(jnp.bfloat16)    # (C, ts) bf16
    # One fused MXU matmul for q|k|v (softmax scale folded into Wq/bq).
    qkv = jnp.dot(w_ref[...], h, preferred_element_type=jnp.float32)
    qkv = qkv + b_ref[...]                                        # (3C, ts) f32
    q_ref[0] = qkv[:C].astype(jnp.bfloat16)                       # (C, ts)
    k_ref[0] = jnp.transpose(qkv[C:2 * C]).astype(jnp.bfloat16)   # (ts, C)
    v_ref[0] = qkv[2 * C:].astype(jnp.bfloat16)                   # (C, ts)


# ---------------------------------------------------------------------------
# Kernel 3a: single-pass attention (whole K/V resident, no scratch / rescale).
# ---------------------------------------------------------------------------
def _make_flash_single(hw_valid, hw_padded):
    mask_keys = hw_valid != hw_padded

    def kernel(q_ref, k_ref, v_ref, x_ref, o_ref):
        q = q_ref[0]                                      # (C, tq)   bf16
        k = k_ref[0]                                      # (HWp, C)  bf16
        v = v_ref[0]                                      # (C, HWp)  bf16
        s = jnp.dot(k, q, preferred_element_type=jnp.float32)   # (HWp, tq)
        if mask_keys:
            kid = jax.lax.broadcasted_iota(jnp.int32, s.shape, 0)
            s = jnp.where(kid < hw_valid, s, -jnp.inf)
        m = jnp.max(s, axis=0, keepdims=True)             # (1, tq)
        p = jnp.exp(s - m)                                # (HWp, tq) f32
        l = jnp.sum(p, axis=0, keepdims=True)             # (1, tq)
        a = jnp.dot(v, p.astype(jnp.bfloat16),
                    preferred_element_type=jnp.float32)   # (C, tq)
        o_ref[0] = x_ref[0] + a * pl.reciprocal(l, approx=True)  # residual, NCHW

    return kernel


# ---------------------------------------------------------------------------
# Kernel 3b: online-softmax fallback when K/V do not fit the VMEM budget.
# ---------------------------------------------------------------------------
def _make_flash_multi(hw_valid, hw_padded, tk):
    mask_keys = hw_valid != hw_padded

    def kernel(q_ref, k_ref, v_ref, x_ref, o_ref, m_scr, l_scr, acc_scr):
        j = pl.program_id(2)

        @pl.when(j == 0)
        def _():
            m_scr[...] = jnp.full(m_scr.shape, -jnp.inf, dtype=m_scr.dtype)
            l_scr[...] = jnp.zeros(l_scr.shape, dtype=l_scr.dtype)
            acc_scr[...] = jnp.zeros(acc_scr.shape, dtype=acc_scr.dtype)

        q = q_ref[0]                                      # (C, tq)  bf16
        k = k_ref[0]                                      # (tk, C)  bf16
        v = v_ref[0]                                      # (C, tk)  bf16
        s = jnp.dot(k, q, preferred_element_type=jnp.float32)   # (tk, tq)
        if mask_keys:
            kid = jax.lax.broadcasted_iota(jnp.int32, s.shape, 0) + j * tk
            s = jnp.where(kid < hw_valid, s, -jnp.inf)
        m_prev = m_scr[...]                               # (1, tq)
        m_new = jnp.maximum(m_prev, jnp.max(s, axis=0, keepdims=True))
        alpha = jnp.exp(m_prev - m_new)                   # (1, tq)
        p = jnp.exp(s - m_new)                            # (tk, tq) f32
        l_scr[...] = alpha * l_scr[...] + jnp.sum(p, axis=0, keepdims=True)
        acc_scr[...] = alpha * acc_scr[...] + jnp.dot(
            v, p.astype(jnp.bfloat16), preferred_element_type=jnp.float32)
        m_scr[...] = m_new

        @pl.when(j == pl.num_programs(2) - 1)
        def _():
            o_ref[0] = x_ref[0] + acc_scr[...] * pl.reciprocal(l_scr[...],
                                                               approx=True)

    return kernel


# ---------------------------------------------------------------------------
# Generation-aware planning (VMEM budget + tile sizes).
# ---------------------------------------------------------------------------
def _vmem_budget_bytes():
    """~3/4 of physical VMEM, capped at 96 MiB (v5e/v6e: 128 MiB, v7x: 64)."""
    phys = None
    try:
        phys = getattr(pltpu.get_tpu_info(), "vmem_capacity_bytes", None)
    except Exception:
        phys = None
    if not phys:
        phys = 64 * 1024 * 1024           # conservative: v7x per-core VMEM
    return min(int(phys) * 3 // 4, 96 * 1024 * 1024)


def _tile_candidates(n, cap):
    """Multiples of 128 that divide n (n is a multiple of 128), descending."""
    cap = max(128, min(cap, n))
    c = [t for t in range(128, cap + 1, 128) if n % t == 0]
    return sorted(c, reverse=True) or [n]


def _plan_norm_qkv(C, HWp, budget):
    slack = 2 * 1024 * 1024
    for ts in _tile_candidates(HWp, 1024):
        need = (2 * C * ts * 4            # x block (double-buffered)
                + 3 * 2 * C * ts * 2      # q/k/v output blocks
                + 3 * C * ts * 4          # qkv f32 intermediate
                + C * ts * 2              # normalized h (bf16)
                + 2 * 3 * C * C * 2       # W_qkv
                + slack)
        if need <= budget:
            return ts
    return 128


def _plan_flash(C, HWp, budget):
    slack = 2 * 1024 * 1024
    # Preferred: single pass with the whole K/V resident (no HBM re-reads).
    for tq in _tile_candidates(HWp, 1024):
        need = (2 * 2 * C * HWp * 2       # k + v blocks (double-buffered)
                + 2 * C * tq * 2          # q block
                + 2 * 2 * C * tq * 4      # x + out blocks
                + HWp * tq * 10           # scores f32 + exp + bf16 copy
                + slack)
        if need <= budget:
            return "single", tq, HWp
    # Fallback: online softmax; maximize tq first (cuts K/V HBM re-reads).
    for tq in _tile_candidates(HWp, 1024):
        for tk in _tile_candidates(HWp, 2048):
            need = (2 * 2 * C * tk * 2
                    + 2 * C * tq * 2
                    + 2 * 2 * C * tq * 4
                    + C * tq * 4 + 2 * 8 * tq * 4     # acc / m / l scratch
                    + tk * tq * 10
                    + slack)
            if need <= budget:
                return "multi", tq, tk
    return "multi", 128, 128


# ---------------------------------------------------------------------------
# Wrapper
# ---------------------------------------------------------------------------
def non_local_attn(x_nchw, params):
    """x_nchw: (B, C, H, W) float32.  Returns (B, C, H, W) float32."""
    B, C, H, W = x_nchw.shape
    assert C % GROUPS == 0, "GroupNorm(32) requires channels divisible by 32"
    HW = H * W
    HWp = ((HW + 127) // 128) * 128       # pad spatial axis to a lane multiple
    x = x_nchw.reshape(B, C, HW).astype(jnp.float32)   # free reshape, NCHW
    if HWp != HW:
        x = jnp.pad(x, ((0, 0), (0, 0), (0, HWp - HW)))   # zeros: exact stats

    budget = _vmem_budget_bytes()
    ts = _plan_norm_qkv(C, HWp, budget)
    mode, tq, tk = _plan_flash(C, HWp, budget)

    # ---- kernel 1: per-tile partial GroupNorm statistics --------------------
    n_tiles = HWp // ts
    sums, sqs = pl.pallas_call(
        _group_stats_kernel,
        grid=(B, n_tiles),
        in_specs=[pl.BlockSpec((1, C, ts), lambda b, t: (b, 0, t))],
        out_specs=(pl.BlockSpec((1, 1, C, 1), lambda b, t: (b, t, 0, 0)),
                   pl.BlockSpec((1, 1, C, 1), lambda b, t: (b, t, 0, 0))),
        out_shape=(jax.ShapeDtypeStruct((B, n_tiles, C, 1), jnp.float32),
                   jax.ShapeDtypeStruct((B, n_tiles, C, 1), jnp.float32)),
        compiler_params=pltpu.CompilerParams(
            dimension_semantics=("parallel", "parallel"),
            vmem_limit_bytes=budget),
    )(x)

    # ---- tiny (B,C) glue: collapse groups, fold GroupNorm into scale/shift --
    g = C // GROUPS
    cnt = float(g * HW)                   # true count (padding columns are 0)
    s1 = jnp.sum(sums[..., 0], axis=1)    # (B, C)
    s2 = jnp.sum(sqs[..., 0], axis=1)
    gs1 = s1.reshape(B, GROUPS, g).sum(axis=-1)
    gs2 = s2.reshape(B, GROUPS, g).sum(axis=-1)
    mean = gs1 / cnt
    # Single-pass E[x^2]-E[x]^2 in f32; clamp guards cancellation.
    var = jnp.maximum(gs2 / cnt - mean * mean, 0.0)
    inv = jax.lax.rsqrt(var + EPS)
    mean_c = jnp.repeat(mean, g, axis=1)                  # (B, C)
    inv_c = jnp.repeat(inv, g, axis=1)
    gamma, beta = params["gamma"], params["beta"]
    scale = (gamma[None, :] * inv_c).reshape(B, C, 1).astype(jnp.float32)
    shift = (beta[None, :] - gamma[None, :] * inv_c * mean_c
             ).reshape(B, C, 1).astype(jnp.float32)

    # ---- kernel 2: norm + fused QKV projection (bf16 MXU) -------------------
    q, k, v = pl.pallas_call(
        _norm_qkv_kernel,
        grid=(B, HWp // ts),
        in_specs=[
            pl.BlockSpec((1, C, ts), lambda b, t: (b, 0, t)),   # x
            pl.BlockSpec((1, C, 1), lambda b, t: (b, 0, 0)),    # scale
            pl.BlockSpec((1, C, 1), lambda b, t: (b, 0, 0)),    # shift
            pl.BlockSpec((3 * C, C), lambda b, t: (0, 0)),      # W_qkv (bf16)
            pl.BlockSpec((3 * C, 1), lambda b, t: (0, 0)),      # b_qkv (f32)
        ],
        out_specs=(
            pl.BlockSpec((1, C, ts), lambda b, t: (b, 0, t)),   # q channel-major
            pl.BlockSpec((1, ts, C), lambda b, t: (b, t, 0)),   # k position-major
            pl.BlockSpec((1, C, ts), lambda b, t: (b, 0, t)),   # v channel-major
        ),
        out_shape=(
            jax.ShapeDtypeStruct((B, C, HWp), jnp.bfloat16),
            jax.ShapeDtypeStruct((B, HWp, C), jnp.bfloat16),
            jax.ShapeDtypeStruct((B, C, HWp), jnp.bfloat16),
        ),
        compiler_params=pltpu.CompilerParams(
            dimension_semantics=("parallel", "parallel"),
            vmem_limit_bytes=budget),
    )(x, scale, shift, params["w_qkv"], params["b_qkv"])

    # ---- kernel 3: attention over spatial positions + residual --------------
    if mode == "single":
        out = pl.pallas_call(
            _make_flash_single(HW, HWp),
            grid=(B, HWp // tq),
            in_specs=[
                pl.BlockSpec((1, C, tq), lambda b, i: (b, 0, i)),    # q
                pl.BlockSpec((1, HWp, C), lambda b, i: (b, 0, 0)),   # k (all keys)
                pl.BlockSpec((1, C, HWp), lambda b, i: (b, 0, 0)),   # v (all keys)
                pl.BlockSpec((1, C, tq), lambda b, i: (b, 0, i)),    # x residual
            ],
            out_specs=pl.BlockSpec((1, C, tq), lambda b, i: (b, 0, i)),
            out_shape=jax.ShapeDtypeStruct((B, C, HWp), jnp.float32),
            compiler_params=pltpu.CompilerParams(
                dimension_semantics=("parallel", "parallel"),
                vmem_limit_bytes=budget),
        )(q, k, v, x)
    else:
        out = pl.pallas_call(
            _make_flash_multi(HW, HWp, tk),
            grid=(B, HWp // tq, HWp // tk),
            in_specs=[
                pl.BlockSpec((1, C, tq), lambda b, i, j: (b, 0, i)),   # q
                pl.BlockSpec((1, tk, C), lambda b, i, j: (b, j, 0)),   # k
                pl.BlockSpec((1, C, tk), lambda b, i, j: (b, 0, j)),   # v
                pl.BlockSpec((1, C, tq), lambda b, i, j: (b, 0, i)),   # x
            ],
            out_specs=pl.BlockSpec((1, C, tq), lambda b, i, j: (b, 0, i)),
            out_shape=jax.ShapeDtypeStruct((B, C, HWp), jnp.float32),
            scratch_shapes=[
                pltpu.VMEM((1, tq), jnp.float32),   # running max  (lane-major)
                pltpu.VMEM((1, tq), jnp.float32),   # running denom
                pltpu.VMEM((C, tq), jnp.float32),   # output accumulator
            ],
            compiler_params=pltpu.CompilerParams(
                dimension_semantics=("parallel", "parallel", "arbitrary"),
                vmem_limit_bytes=budget),
        )(q, k, v, x)

    if HWp != HW:
        out = out[:, :, :HW]
    return out.reshape(B, C, H, W)


# ---------------------------------------------------------------------------
# Parameters / reference
# ---------------------------------------------------------------------------
def make_params(key, C):
    assert C % GROUPS == 0
    ks = jax.random.split(key, 8)
    wq = jax.random.normal(ks[0], (C, C), jnp.float32) * 0.05   # (C_out, C_in)
    wk = jax.random.normal(ks[1], (C, C), jnp.float32) * 0.05
    wv = jax.random.normal(ks[2], (C, C), jnp.float32) * 0.05
    bq = jax.random.normal(ks[3], (C,), jnp.float32) * 0.05
    bk = jax.random.normal(ks[4], (C,), jnp.float32) * 0.05
    bv = jax.random.normal(ks[5], (C,), jnp.float32) * 0.05
    gamma = 1.0 + 0.1 * jax.random.normal(ks[6], (C,), jnp.float32)
    beta = 0.1 * jax.random.normal(ks[7], (C,), jnp.float32)

    # Fold the softmax scale C**-0.5 into Wq/bq; fuse q|k|v into one matmul.
    sm = float(C) ** -0.5
    w_qkv = jnp.concatenate([wq * sm, wk, wv], axis=0).astype(jnp.bfloat16)  # (3C, C)
    b_qkv = jnp.concatenate([bq * sm, bk, bv]).reshape(3 * C, 1).astype(jnp.float32)

    return dict(wq=wq, wk=wk, wv=wv, bq=bq, bk=bk, bv=bv,
                gamma=gamma, beta=beta, w_qkv=w_qkv, b_qkv=b_qkv)


def reference(x_nchw, params):
    """Pure-JAX f32 reference matching the PyTorch module (NCHW)."""
    B, C, H, W = x_nchw.shape
    g = C // GROUPS
    xg = x_nchw.reshape(B, GROUPS, g, H, W)
    mean = jnp.mean(xg, axis=(2, 3, 4), keepdims=True)
    var = jnp.mean((xg - mean) ** 2, axis=(2, 3, 4), keepdims=True)
    hn = ((xg - mean) / jnp.sqrt(var + EPS)).reshape(B, C, H, W)
    hn = hn * params["gamma"][None, :, None, None] + params["beta"][None, :, None, None]

    def conv(h, w, b):  # 1x1 conv, NCHW
        return jnp.einsum("oc,bchw->bohw", w, h) + b[None, :, None, None]

    q = conv(hn, params["wq"], params["bq"])
    k = conv(hn, params["wk"], params["bk"])
    v = conv(hn, params["wv"], params["bv"])
    HW = H * W
    q = q.reshape(B, C, HW).transpose(0, 2, 1)   # (B, HW, C)
    k = k.reshape(B, C, HW)                      # (B, C, HW)
    v = v.reshape(B, C, HW)                      # (B, C, HW)
    attn = jnp.einsum("bic,bcj->bij", q, k) * (float(C) ** -0.5)
    attn = jax.nn.softmax(attn, axis=2)
    A = jnp.einsum("bcj,bij->bci", v, attn).reshape(B, C, H, W)
    return x_nchw + A


if __name__ == "__main__":
    B, C, H, W = 2, 64, 16, 16     # GroupNorm(32) => C must be a multiple of 32
    key = jax.random.PRNGKey(0)
    kx, kp = jax.random.split(key)
    x = jax.random.normal(kx, (B, C, H, W), jnp.float32)
    params = make_params(kp, C)

    out = jax.block_until_ready(jax.jit(non_local_attn)(x, params))
    ref = jax.block_until_ready(reference(x, params))

    # bf16 MXU operands + approx reciprocal => loosened tolerance vs f32 ref.
    np.testing.assert_allclose(np.asarray(out), np.asarray(ref),
                               atol=2e-2, rtol=2e-2)
    print("KERNEL_OK")
</pallas_src>

<mosaic_0001>
module attributes {stable_mosaic.version = 11 : i64} {
  func.func @_group_stats_kernel(%arg0: i32, %arg1: i32, %arg2: memref<1x64x256xf32, #tpu.memory_space<vmem>>, %arg3: memref<1x1x64x1xf32, #tpu.memory_space<vmem>>, %arg4: memref<1x1x64x1xf32, #tpu.memory_space<vmem>>) attributes {dimension_semantics = [#tpu.dimension_semantics<parallel>, #tpu.dimension_semantics<parallel>], iteration_bounds = array<i64: 2, 1>, scalar_prefetch = 0 : i64, scratch_operands = 0 : i64, tpu.core_type = #tpu.core_type<tc>, window_params = [{transform_indices = @transform_0, window_bounds = array<i64: 1, 64, 256>}, {transform_indices = @transform_1, window_bounds = array<i64: 1, 1, 64, 1>}, {transform_indices = @transform_2, window_bounds = array<i64: 1, 1, 64, 1>}]} {
    %c0 = arith.constant 0 : index
    %c0_0 = arith.constant 0 : index
    %c0_1 = arith.constant 0 : index
    %0 = vector.load %arg2[%c0, %c0_0, %c0_1] : memref<1x64x256xf32, #tpu.memory_space<vmem>>, vector<1x64x256xf32>
    %1 = vector.shape_cast %0 : vector<1x64x256xf32> to vector<64x256xf32>
    %cst = arith.constant dense<0.000000e+00> : vector<64xf32>
    %2 = vector.multi_reduction <add>, %1, %cst [1] : vector<64x256xf32> to vector<64xf32>
    %3 = vector.shape_cast %2 : vector<64xf32> to vector<64x1xf32>
    %c0_2 = arith.constant 0 : index
    %c0_3 = arith.constant 0 : index
    %c0_4 = arith.constant 0 : index
    %c0_5 = arith.constant 0 : index
    %4 = vector.load %arg3[%c0_2, %c0_3, %c0_4, %c0_5] : memref<1x1x64x1xf32, #tpu.memory_space<vmem>>, vector<1x1x64x1xf32>
    %5 = vector.shape_cast %4 : vector<1x1x64x1xf32> to vector<64x1xf32>
    %6 = vector.shape_cast %3 : vector<64x1xf32> to vector<1x1x64x1xf32>
    tpu.vector_store %arg3[%c0_2, %c0_3, %c0_4, %c0_5], %6 {strides = array<i32>} : memref<1x1x64x1xf32, #tpu.memory_space<vmem>>, vector<1x1x64x1xf32>,
    %7 = arith.mulf %1, %1 : vector<64x256xf32>
    %cst_6 = arith.constant dense<0.000000e+00> : vector<64xf32>
    %8 = vector.multi_reduction <add>, %7, %cst_6 [1] : vector<64x256xf32> to vector<64xf32>
    %9 = vector.shape_cast %8 : vector<64xf32> to vector<64x1xf32>
    %c0_7 = arith.constant 0 : index
    %c0_8 = arith.constant 0 : index
    %c0_9 = arith.constant 0 : index
    %c0_10 = arith.constant 0 : index
    %10 = vector.load %arg4[%c0_7, %c0_8, %c0_9, %c0_10] : memref<1x1x64x1xf32, #tpu.memory_space<vmem>>, vector<1x1x64x1xf32>
    %11 = vector.shape_cast %10 : vector<1x1x64x1xf32> to vector<64x1xf32>
    %12 = vector.shape_cast %9 : vector<64x1xf32> to vector<1x1x64x1xf32>
    tpu.vector_store %arg4[%c0_7, %c0_8, %c0_9, %c0_10], %12 {strides = array<i32>} : memref<1x1x64x1xf32, #tpu.memory_space<vmem>>, vector<1x1x64x1xf32>,
    return
  }
  func.func @transform_0(%arg0: i32, %arg1: i32) -> (i32, i32, i32) {
    %c0_i32 = arith.constant 0 : i32
    %c0_i32_0 = arith.constant 0 : i32
    return %arg0, %c0_i32, %arg1 : i32, i32, i32
  }
  func.func @transform_1(%arg0: i32, %arg1: i32) -> (i32, i32, i32, i32) {
    %c0_i32 = arith.constant 0 : i32
    %c0_i32_0 = arith.constant 0 : i32
    %c0_i32_1 = arith.constant 0 : i32
    return %arg0, %arg1, %c0_i32, %c0_i32_0 : i32, i32, i32, i32
  }
  func.func @transform_2(%arg0: i32, %arg1: i32) -> (i32, i32, i32, i32) {
    %c0_i32 = arith.constant 0 : i32
    %c0_i32_0 = arith.constant 0 : i32
    %c0_i32_1 = arith.constant 0 : i32
    return %arg0, %arg1, %c0_i32, %c0_i32_0 : i32, i32, i32, i32
  }
}

module attributes {stable_mosaic.version = 11 : i64} {
  func.func @_norm_qkv_kernel(%arg0: i32, %arg1: i32, %arg2: memref<1x64x256xf32, #tpu.memory_space<vmem>>, %arg3: memref<1x64x1xf32, #tpu.memory_space<vmem>>, %arg4: memref<1x64x1xf32, #tpu.memory_space<vmem>>, %arg5: memref<192x64xbf16, #tpu.memory_space<vmem>>, %arg6: memref<192x1xf32, #tpu.memory_space<vmem>>, %arg7: memref<1x64x256xbf16, #tpu.memory_space<vmem>>, %arg8: memref<1x256x64xbf16, #tpu.memory_space<vmem>>, %arg9: memref<1x64x256xbf16, #tpu.memory_space<vmem>>) attributes {dimension_semantics = [#tpu.dimension_semantics<parallel>, #tpu.dimension_semantics<parallel>], iteration_bounds = array<i64: 2, 1>, scalar_prefetch = 0 : i64, scratch_operands = 0 : i64, tpu.core_type = #tpu.core_type<tc>, window_params = [{transform_indices = @transform_0, window_bounds = array<i64: 1, 64, 256>}, {transform_indices = @transform_1, window_bounds = array<i64: 1, 64, 1>}, {transform_indices = @transform_2, window_bounds = array<i64: 1, 64, 1>}, {pipeline_mode = #tpu.pipeline_mode<synchronous>, transform_indices = @transform_3, window_bounds = array<i64: 192, 64>}, {pipeline_mode = #tpu.pipeline_mode<synchronous>, transform_indices = @transform_4, window_bounds = array<i64: 192, 1>}, {transform_indices = @transform_5, window_bounds = array<i64: 1, 64, 256>}, {transform_indices = @transform_6, window_bounds = array<i64: 1, 256, 64>}, {transform_indices = @transform_7, window_bounds = array<i64: 1, 64, 256>}]} {
    %c0 = arith.constant 0 : index
    %c0_0 = arith.constant 0 : index
    %c0_1 = arith.constant 0 : index
    %0 = vector.load %arg2[%c0, %c0_0, %c0_1] : memref<1x64x256xf32, #tpu.memory_space<vmem>>, vector<1x64x256xf32>
    %1 = vector.shape_cast %0 : vector<1x64x256xf32> to vector<64x256xf32>
    %c0_2 = arith.constant 0 : index
    %c0_3 = arith.constant 0 : index
    %c0_4 = arith.constant 0 : index
    %2 = vector.load %arg3[%c0_2, %c0_3, %c0_4] : memref<1x64x1xf32, #tpu.memory_space<vmem>>, vector<1x64x1xf32>
    %3 = vector.shape_cast %2 : vector<1x64x1xf32> to vector<64x1xf32>
    %4 = vector.broadcast %3 : vector<64x1xf32> to vector<64x256xf32>
    %5 = arith.mulf %1, %4 : vector<64x256xf32>
    %c0_5 = arith.constant 0 : index
    %c0_6 = arith.constant 0 : index
    %c0_7 = arith.constant 0 : index
    %6 = vector.load %arg4[%c0_5, %c0_6, %c0_7] : memref<1x64x1xf32, #tpu.memory_space<vmem>>, vector<1x64x1xf32>
    %7 = vector.shape_cast %6 : vector<1x64x1xf32> to vector<64x1xf32>
    %8 = vector.broadcast %7 : vector<64x1xf32> to vector<64x256xf32>
    %9 = arith.addf %5, %8 : vector<64x256xf32>
    %10 = arith.truncf %9 : vector<64x256xf32> to vector<64x256xbf16>
    %c0_8 = arith.constant 0 : index
    %c0_9 = arith.constant 0 : index
    %11 = vector.load %arg5[%c0_8, %c0_9] : memref<192x64xbf16, #tpu.memory_space<vmem>>, vector<192x64xbf16>
    %cst = arith.constant dense<0.000000e+00> : vector<192x256xf32>
    %12 = tpu.matmul %11, %10, %cst {dimension_numbers = #tpu.dot_dimension_numbers<[1], [0], [0], [1], [0, 0, 1, 1], [], []>} : vector<192x64xbf16>, vector<64x256xbf16>, vector<192x256xf32> -> vector<192x256xf32>
    %c0_10 = arith.constant 0 : index
    %c0_11 = arith.constant 0 : index
    %13 = vector.load %arg6[%c0_10, %c0_11] : memref<192x1xf32, #tpu.memory_space<vmem>>, vector<192x1xf32>
    %14 = vector.broadcast %13 : vector<192x1xf32> to vector<192x256xf32>
    %15 = arith.addf %12, %14 : vector<192x256xf32>
    %16 = vector.extract_strided_slice %15 {offsets = [0, 0], sizes = [64, 256], strides = [1, 1]} : vector<192x256xf32> to vector<64x256xf32>
    %17 = arith.truncf %16 : vector<64x256xf32> to vector<64x256xbf16>
    %c0_12 = arith.constant 0 : index
    %c0_13 = arith.constant 0 : index
    %c0_14 = arith.constant 0 : index
    %18 = vector.load %arg7[%c0_12, %c0_13, %c0_14] : memref<1x64x256xbf16, #tpu.memory_space<vmem>>, vector<1x64x256xbf16>
    %19 = vector.shape_cast %18 : vector<1x64x256xbf16> to vector<64x256xbf16>
    %20 = vector.shape_cast %17 : vector<64x256xbf16> to vector<1x64x256xbf16>
    tpu.vector_store %arg7[%c0_12, %c0_13, %c0_14], %20 {strides = array<i32>} : memref<1x64x256xbf16, #tpu.memory_space<vmem>>, vector<1x64x256xbf16>,
    %21 = vector.extract_strided_slice %15 {offsets = [64, 0], sizes = [64, 256], strides = [1, 1]} : vector<192x256xf32> to vector<64x256xf32>
    %22 = tpu.transpose %21, [1, 0] : vector<64x256xf32> -> vector<256x64xf32>
    %23 = arith.truncf %22 : vector<256x64xf32> to vector<256x64xbf16>
    %c0_15 = arith.constant 0 : index
    %c0_16 = arith.constant 0 : index
    %c0_17 = arith.constant 0 : index
    %24 = vector.load %arg8[%c0_15, %c0_16, %c0_17] : memref<1x256x64xbf16, #tpu.memory_space<vmem>>, vector<1x256x64xbf16>
    %25 = vector.shape_cast %24 : vector<1x256x64xbf16> to vector<256x64xbf16>
    %26 = vector.shape_cast %23 : vector<256x64xbf16> to vector<1x256x64xbf16>
    tpu.vector_store %arg8[%c0_15, %c0_16, %c0_17], %26 {strides = array<i32>} : memref<1x256x64xbf16, #tpu.memory_space<vmem>>, vector<1x256x64xbf16>,
    %27 = vector.extract_strided_slice %15 {offsets = [128, 0], sizes = [64, 256], strides = [1, 1]} : vector<192x256xf32> to vector<64x256xf32>
    %28 = arith.truncf %27 : vector<64x256xf32> to vector<64x256xbf16>
    %c0_18 = arith.constant 0 : index
    %c0_19 = arith.constant 0 : index
    %c0_20 = arith.constant 0 : index
    %29 = vector.load %arg9[%c0_18, %c0_19, %c0_20] : memref<1x64x256xbf16, #tpu.memory_space<vmem>>, vector<1x64x256xbf16>
    %30 = vector.shape_cast %29 : vector<1x64x256xbf16> to vector<64x256xbf16>
    %31 = vector.shape_cast %28 : vector<64x256xbf16> to vector<1x64x256xbf16>
    tpu.vector_store %arg9[%c0_18, %c0_19, %c0_20], %31 {strides = array<i32>} : memref<1x64x256xbf16, #tpu.memory_space<vmem>>, vector<1x64x256xbf16>,
    return
  }
  func.func @transform_0(%arg0: i32, %arg1: i32) -> (i32, i32, i32) {
    %c0_i32 = arith.constant 0 : i32
    %c0_i32_0 = arith.constant 0 : i32
    return %arg0, %c0_i32, %arg1 : i32, i32, i32
  }
  func.func @transform_1(%arg0: i32, %arg1: i32) -> (i32, i32, i32) {
    %c0_i32 = arith.constant 0 : i32
    %c0_i32_0 = arith.constant 0 : i32
    %c0_i32_1 = arith.constant 0 : i32
    return %arg0, %c0_i32, %c0_i32_0 : i32, i32, i32
  }
  func.func @transform_2(%arg0: i32, %arg1: i32) -> (i32, i32, i32) {
    %c0_i32 = arith.constant 0 : i32
    %c0_i32_0 = arith.constant 0 : i32
    %c0_i32_1 = arith.constant 0 : i32
    return %arg0, %c0_i32, %c0_i32_0 : i32, i32, i32
  }
  func.func @transform_3(%arg0: i32, %arg1: i32) -> (i32, i32) {
    %c0_i32 = arith.constant 0 : i32
    %c0_i32_0 = arith.constant 0 : i32
    %c0_i32_1 = arith.constant 0 : i32
    return %c0_i32, %c0_i32_0 : i32, i32
  }
  func.func @transform_4(%arg0: i32, %arg1: i32) -> (i32, i32) {
    %c0_i32 = arith.constant 0 : i32
    %c0_i32_0 = arith.constant 0 : i32
    %c0_i32_1 = arith.constant 0 : i32
    return %c0_i32, %c0_i32_0 : i32, i32
  }
  func.func @transform_5(%arg0: i32, %arg1: i32) -> (i32, i32, i32) {
    %c0_i32 = arith.constant 0 : i32
    %c0_i32_0 = arith.constant 0 : i32
    return %arg0, %c0_i32, %arg1 : i32, i32, i32
  }
  func.func @transform_6(%arg0: i32, %arg1: i32) -> (i32, i32, i32) {
    %c0_i32 = arith.constant 0 : i32
    %c0_i32_0 = arith.constant 0 : i32
    return %arg0, %arg1, %c0_i32 : i32, i32, i32
  }
  func.func @transform_7(%arg0: i32, %arg1: i32) -> (i32, i32, i32) {
    %c0_i32 = arith.constant 0 : i32
    %c0_i32_0 = arith.constant 0 : i32
    return %arg0, %c0_i32, %arg1 : i32, i32, i32
  }
}

module attributes {stable_mosaic.version = 11 : i64} {
  func.func @kernel(%arg0: i32, %arg1: i32, %arg2: memref<1x64x256xbf16, #tpu.memory_space<vmem>>, %arg3: memref<1x256x64xbf16, #tpu.memory_space<vmem>>, %arg4: memref<1x64x256xbf16, #tpu.memory_space<vmem>>, %arg5: memref<1x64x256xf32, #tpu.memory_space<vmem>>, %arg6: memref<1x64x256xf32, #tpu.memory_space<vmem>>) attributes {dimension_semantics = [#tpu.dimension_semantics<parallel>, #tpu.dimension_semantics<parallel>], iteration_bounds = array<i64: 2, 1>, scalar_prefetch = 0 : i64, scratch_operands = 0 : i64, tpu.core_type = #tpu.core_type<tc>, window_params = [{transform_indices = @transform_0, window_bounds = array<i64: 1, 64, 256>}, {transform_indices = @transform_1, window_bounds = array<i64: 1, 256, 64>}, {transform_indices = @transform_2, window_bounds = array<i64: 1, 64, 256>}, {transform_indices = @transform_3, window_bounds = array<i64: 1, 64, 256>}, {transform_indices = @transform_4, window_bounds = array<i64: 1, 64, 256>}]} {
    %c0 = arith.constant 0 : index
    %c0_0 = arith.constant 0 : index
    %c0_1 = arith.constant 0 : index
    %0 = vector.load %arg2[%c0, %c0_0, %c0_1] : memref<1x64x256xbf16, #tpu.memory_space<vmem>>, vector<1x64x256xbf16>
    %1 = vector.shape_cast %0 : vector<1x64x256xbf16> to vector<64x256xbf16>
    %c0_2 = arith.constant 0 : index
    %c0_3 = arith.constant 0 : index
    %c0_4 = arith.constant 0 : index
    %2 = vector.load %arg3[%c0_2, %c0_3, %c0_4] : memref<1x256x64xbf16, #tpu.memory_space<vmem>>, vector<1x256x64xbf16>
    %3 = vector.shape_cast %2 : vector<1x256x64xbf16> to vector<256x64xbf16>
    %c0_5 = arith.constant 0 : index
    %c0_6 = arith.constant 0 : index
    %c0_7 = arith.constant 0 : index
    %4 = vector.load %arg4[%c0_5, %c0_6, %c0_7] : memref<1x64x256xbf16, #tpu.memory_space<vmem>>, vector<1x64x256xbf16>
    %5 = vector.shape_cast %4 : vector<1x64x256xbf16> to vector<64x256xbf16>
    %cst = arith.constant dense<0.000000e+00> : vector<256x256xf32>
    %6 = tpu.matmul %3, %1, %cst {dimension_numbers = #tpu.dot_dimension_numbers<[1], [0], [0], [1], [0, 0, 1, 1], [], []>} : vector<256x64xbf16>, vector<64x256xbf16>, vector<256x256xf32> -> vector<256x256xf32>
    %cst_8 = arith.constant dense<0xFF800000> : vector<256xf32>
    %7 = vector.multi_reduction <maximumf>, %6, %cst_8 [0] : vector<256x256xf32> to vector<256xf32>
    %8 = vector.shape_cast %7 : vector<256xf32> to vector<1x256xf32>
    %9 = vector.broadcast %8 : vector<1x256xf32> to vector<256x256xf32>
    %10 = arith.subf %6, %9 : vector<256x256xf32>
    %11 = math.exp %10 : vector<256x256xf32>
    %cst_9 = arith.constant dense<0.000000e+00> : vector<256xf32>
    %12 = vector.multi_reduction <add>, %11, %cst_9 [0] : vector<256x256xf32> to vector<256xf32>
    %13 = vector.shape_cast %12 : vector<256xf32> to vector<1x256xf32>
    %14 = arith.truncf %11 : vector<256x256xf32> to vector<256x256xbf16>
    %cst_10 = arith.constant dense<0.000000e+00> : vector<64x256xf32>
    %15 = tpu.matmul %5, %14, %cst_10 {dimension_numbers = #tpu.dot_dimension_numbers<[1], [0], [0], [1], [0, 0, 1, 1], [], []>} : vector<64x256xbf16>, vector<256x256xbf16>, vector<64x256xf32> -> vector<64x256xf32>
    %c0_11 = arith.constant 0 : index
    %c0_12 = arith.constant 0 : index
    %c0_13 = arith.constant 0 : index
    %16 = vector.load %arg5[%c0_11, %c0_12, %c0_13] : memref<1x64x256xf32, #tpu.memory_space<vmem>>, vector<1x64x256xf32>
    %17 = vector.shape_cast %16 : vector<1x64x256xf32> to vector<64x256xf32>
    %18 = tpu.reciprocal %13 {approx = true} : vector<1x256xf32> -> vector<1x256xf32>
    %19 = vector.broadcast %18 : vector<1x256xf32> to vector<64x256xf32>
    %20 = arith.mulf %15, %19 : vector<64x256xf32>
    %21 = arith.addf %17, %20 : vector<64x256xf32>
    %c0_14 = arith.constant 0 : index
    %c0_15 = arith.constant 0 : index
    %c0_16 = arith.constant 0 : index
    %22 = vector.load %arg6[%c0_14, %c0_15, %c0_16] : memref<1x64x256xf32, #tpu.memory_space<vmem>>, vector<1x64x256xf32>
    %23 = vector.shape_cast %22 : vector<1x64x256xf32> to vector<64x256xf32>
    %24 = vector.shape_cast %21 : vector<64x256xf32> to vector<1x64x256xf32>
    tpu.vector_store %arg6[%c0_14, %c0_15, %c0_16], %24 {strides = array<i32>} : memref<1x64x256xf32, #tpu.memory_space<vmem>>, vector<1x64x256xf32>,
    return
  }
  func.func @transform_0(%arg0: i32, %arg1: i32) -> (i32, i32, i32) {
    %c0_i32 = arith.constant 0 : i32
    %c0_i32_0 = arith.constant 0 : i32
    return %arg0, %c0_i32, %arg1 : i32, i32, i32
  }
  func.func @transform_1(%arg0: i32, %arg1: i32) -> (i32, i32, i32) {
    %c0_i32 = arith.constant 0 : i32
    %c0_i32_0 = arith.constant 0 : i32
    %c0_i32_1 = arith.constant 0 : i32
    return %arg0, %c0_i32, %c0_i32_0 : i32, i32, i32
  }
  func.func @transform_2(%arg0: i32, %arg1: i32) -> (i32, i32, i32) {
    %c0_i32 = arith.constant 0 : i32
    %c0_i32_0 = arith.constant 0 : i32
    %c0_i32_1 = arith.constant 0 : i32
    return %arg0, %c0_i32, %c0_i32_0 : i32, i32, i32
  }
  func.func @transform_3(%arg0: i32, %arg1: i32) -> (i32, i32, i32) {
    %c0_i32 = arith.constant 0 : i32
    %c0_i32_0 = arith.constant 0 : i32
    return %arg0, %c0_i32, %arg1 : i32, i32, i32
  }
  func.func @transform_4(%arg0: i32, %arg1: i32) -> (i32, i32, i32) {
    %c0_i32 = arith.constant 0 : i32
    %c0_i32_0 = arith.constant 0 : i32
    return %arg0, %c0_i32, %arg1 : i32, i32, i32
  }
}

</mosaic_0001>

<llo_original>
// kernel: non_local_attn.3
$region0: #{non_local_attn.3}
  #allocation0 [shape = 'u32[]', space=smem, size = 0x4, offset = 0x4, fixed_abs, tag = 'smem constant byte address 0x4 - core index']
  #allocation1 [shape = 'u32[144,128]{1,0:T(1,128)}', space=vmem, size = 0x12000, scoped, tag = 'internal scratch']
  %s0 = inlined_call_operand.vmem [shape: f32[2,64,256], index: 0, kind: input, shape index: {}]
  %s1 = inlined_call_operand.vmem [shape: f32[2,1,64,1], index: 1, kind: output, shape index: {0}]
  %s2 = inlined_call_operand.vmem [shape: f32[2,1,64,1], index: 2, kind: output, shape index: {1}]
  %3 = xla_tuple %s1, %s2
  %s4 = sld [smem:[#allocation0]]
  $region45: #{non_local_attn.3} parent=0
    _
  %s6 = ssub.s32 1, %s4
  %s7 = scalar_select 0, %s6, %s4
  loop: start=0, step=1, limit=4
  $region2: #{non_local_attn.3} parent=0 // loop_pre_header
    _
  $region3: #{non_local_attn.3} parent=0 // loop_header
    %s9 = sphi 0, %s13
    %p10 = scmp.ge.s32.totalorder %s9, 4
    %s16 = sphi 0, %s28
    %s17 = sphi 0, %s24
    %s18 = sphi 0, %s16
    %s19 = sphi 0, %s17
    %s20 = sphi 0, %s18
    %s21 = sphi 0, %s19
    %s33 = sphi 0, %s35
    %s36 = sphi 0, %s33
    %s37 = sphi 0, %s36
    %s53 = sphi 0, %s37
    %s61 = sphi 0, %s63
    %s64 = sphi 0, %s61
    %s65 = sphi 0, %s64
    %s81 = sphi 0, %s65
    %s89 = sphi 0, %s91
    %s92 = sphi 0, %s89
    %s93 = sphi 0, %s92
    %s109 = sphi 0, %s93
  $region4: #{non_local_attn.3} parent=0 // loop_header_branch
    %12 = sbr.rel (%p10) target = $region8
  $region5: #{non_local_attn.3} parent=0 // loop_body
    %s14 = ssub.s32 %s9, 1
    %s15 = ssub.s32 %s9, 2
    %s22 = sadd.s32 1, %s17
    %p23 = scmp.ge.s32.totalorder %s22, 1
    %s24 = scalar_select %p23, 0, %s22
    %s25 = sadd.s32 1, %s16
    %s26 = scalar_select %p23, %s25, %s16
    %p27 = scmp.ge.s32.totalorder %s26, 2
    %s28 = scalar_select %p27, 0, %s26
    %s29 = ssub.s32 %s16, %s28
    %s30 = ssub.s32 %s17, %s24
    %s31 = sor.u32 %s29, %s30
    %p32 = scmp.eq.s32.totalorder %s31, 0
    %s34 = sadd.s32 %s33, 1
    %s35 = scalar_select %p32, %s33, %s34
    %p38 = pneg %p32
    %p39 = scmp.eq.s32.totalorder %s9, 1
    %p40 = por %p38, %p39
    %p41 = scmp.ne.s32.totalorder %s33, %s36
    %p42 = scmp.eq.s32.totalorder %s9, 0
    %p43 = por %p41, %p42
    %p44 = scmp.ne.s32.totalorder %s33, %s36
    %p45 = scmp.eq.s32.totalorder %s14, 1
    %p46 = por %p44, %p45
    %p47 = scmp.ne.s32.totalorder %s36, %s37
    %p48 = scmp.eq.s32.totalorder %s14, 0
    %p49 = por %p47, %p48
    %p50 = scmp.ne.s32.totalorder %s36, %s37
    %p51 = scmp.eq.s32.totalorder %s15, 1
    %p52 = por %p50, %p51
    %p54 = scmp.ne.s32.totalorder %s37, %s53
    %p55 = scmp.eq.s32.totalorder %s15, 0
    %p56 = por %p54, %p55
    %s57 = ssub.s32 %s16, %s28
    %s58 = ssub.s32 %s17, %s24
    %s59 = sor.u32 %s57, %s58
    %p60 = scmp.eq.s32.totalorder %s59, 0
    %s62 = sadd.s32 %s61, 1
    %s63 = scalar_select %p60, %s61, %s62
    %p66 = pneg %p60
    %p67 = scmp.eq.s32.totalorder %s9, 1
    %p68 = por %p66, %p67
    %p69 = scmp.ne.s32.totalorder %s61, %s64
    %p70 = scmp.eq.s32.totalorder %s9, 0
    %p71 = por %p69, %p70
    %p72 = scmp.ne.s32.totalorder %s61, %s64
    %p73 = scmp.eq.s32.totalorder %s14, 1
    %p74 = por %p72, %p73
    %p75 = scmp.ne.s32.totalorder %s64, %s65
    %p76 = scmp.eq.s32.totalorder %s14, 0
    %p77 = por %p75, %p76
    %p78 = scmp.ne.s32.totalorder %s64, %s65
    %p79 = scmp.eq.s32.totalorder %s15, 1
    %p80 = por %p78, %p79
    %p82 = scmp.ne.s32.totalorder %s65, %s81
    %p83 = scmp.eq.s32.totalorder %s15, 0
    %p84 = por %p82, %p83
    %s85 = ssub.s32 %s16, %s28
    %s86 = ssub.s32 %s17, %s24
    %s87 = sor.u32 %s85, %s86
    %p88 = scmp.eq.s32.totalorder %s87, 0
    %s90 = sadd.s32 %s89, 1
    %s91 = scalar_select %p88, %s89, %s90
    %p94 = pneg %p88
    %p95 = scmp.eq.s32.totalorder %s9, 1
    %p96 = por %p94, %p95
    %p97 = scmp.ne.s32.totalorder %s89, %s92
    %p98 = scmp.eq.s32.totalorder %s9, 0
    %p99 = por %p97, %p98
    %p100 = scmp.ne.s32.totalorder %s89, %s92
    %p101 = scmp.eq.s32.totalorder %s14, 1
    %p102 = por %p100, %p101
    %p103 = scmp.ne.s32.totalorder %s92, %s93
    %p104 = scmp.eq.s32.totalorder %s14, 0
    %p105 = por %p103, %p104
    %p106 = scmp.ne.s32.totalorder %s92, %s93
    %p107 = scmp.eq.s32.totalorder %s15, 1
    %p108 = por %p106, %p107
    %p110 = scmp.ne.s32.totalorder %s93, %s109
    %p111 = scmp.eq.s32.totalorder %s15, 0
    %p112 = por %p110, %p111
    %p113 = scmp.le.s32.totalorder 1, %s9
    %p114 = scmp.lt.s32.totalorder %s9, 3
    %p115 = pnand %p113, %p114
    %p116 = pneg %p115
    // Predicated region
    $region9: #{non_local_attn.3} parent=5 // pred_check
      _
    $region10: #{non_local_attn.3} parent=5 // pred_check_branch
      %118 = sbr.rel (%p115) target = $region12
    $region11: #{non_local_attn.3} parent=5 // pred_region
      %s119 = ssub.s32 %s9, 1
    $region12: #{non_local_attn.3} parent=5 // pred_fallthru
      _
    %p120 = scmp.lt.s32.totalorder %s9, 2
    // Predicated region
    $region13: #{non_local_attn.3} parent=5 // pred_check
      %p121 = pneg %p120
    $region14: #{non_local_attn.3} parent=5 // pred_check_branch
      %123 = sbr.rel (%p121) target = $region16
    $region15: #{non_local_attn.3} parent=5 // pred_region
      // Predicated region
      $region17: #{non_local_attn.3} parent=15 // pred_check
        %p124 = pneg %p43
      $region18: #{non_local_attn.3} parent=15 // pred_check_branch
        %126 = sbr.rel (%p124) target = $region20
      $region19: #{non_local_attn.3} parent=15 // pred_region
        %s127 = smul.u32 2, %s17
        %p128 = scmp.lt.s32.totalorder %s16, 1
        %s129 = scalar_select %p128, %s16, 1
        %p130 = scmp.lt.s32.totalorder %s127, 1
        %s131 = scalar_select %p130, %s127, 1
        %s132 = smul.addr %s129, 16
        %s133 = sadd.s32 %s131, %s132
        %s134 = smul.addr %s133, 8
        %s135 = scalar_lea.vmem %s0, %s134
        %s136 = smul.u32 2, %s17
      $region20: #{non_local_attn.3} parent=15 // pred_fallthru
        _
    $region16: #{non_local_attn.3} parent=5 // pred_fallthru
      _
    %p137 = scmp.le.s32.totalorder 1, %s9
    %p138 = scmp.lt.s32.totalorder %s9, 3
    %p139 = pnand %p137, %p138
    %p140 = pneg %p139
    // Predicated region
    $region21: #{non_local_attn.3} parent=5 // pred_check
      _
    $region22: #{non_local_attn.3} parent=5 // pred_check_branch
      %142 = sbr.rel (%p139) target = $region24
    $region23: #{non_local_attn.3} parent=5 // pred_region
      %s143 = ssub.s32 %s9, 1
      %s144 = smul.u32 2, %s19
      %p145 = scmp.lt.s32.totalorder %s18, 1
      %s146 = scalar_select %p145, %s18, 1
      %p147 = scmp.lt.s32.totalorder %s144, 1
      %s148 = scalar_select %p147, %s144, 1
      %s149 = smul.addr %s146, 16
      %s150 = sadd.s32 %s148, %s149
      %s151 = smul.addr %s150, 8
      %s152 = scalar_lea.vmem %s0, %s151
      %p153 = pneg %p49
      %p154 = pneg %p46
      %p155 = pneg %p77
      %p156 = pneg %p74
      %p157 = scmp.lt.s32.totalorder %s18, 1
      %s158 = scalar_select %p157, %s18, 1
      %p159 = scmp.lt.s32.totalorder %s19, 0
      %s160 = scalar_select %p159, %s19, 0
      %s161 = smul.addr %s160, 8
      %s162 = smul.addr %s158, 8
      %s163 = sadd.s32 %s161, %s162
      %s164 = smul.addr %s163, 8
      %s165 = scalar_lea.vmem %s1, %s164
      %p166 = pneg %p105
      %p167 = pneg %p102
      %p168 = scmp.lt.s32.totalorder %s18, 1
      %s169 = scalar_select %p168, %s18, 1
      %p170 = scmp.lt.s32.totalorder %s19, 0
      %s171 = scalar_select %p170, %s19, 0
      %s172 = smul.addr %s171, 8
      %s173 = smul.addr %s169, 8
      %s174 = sadd.s32 %s172, %s173
      %s175 = smul.addr %s174, 8
      %s176 = scalar_lea.vmem %s2, %s175
      %s177 = smul.u32 2, %s19
      %p178 = scmp.lt.s32.totalorder %s18, 1
      %s179 = scalar_select %p178, %s18, 1
      %p180 = scmp.lt.s32.totalorder %s177, 1
      %s181 = scalar_select %p180, %s177, 1
      %s182 = smul.addr %s179, 16
      %s183 = sadd.s32 %s181, %s182
      %s184 = smul.addr %s183, 8
      %s185 = scalar_lea.vmem %s0, %s184
      %s186 = smul.u32 2, %s19
      %p187 = scmp.lt.s32.totalorder %s18, 1
      %s188 = scalar_select %p187, %s18, 1
      %p189 = scmp.lt.s32.totalorder %s19, 0
      %s190 = scalar_select %p189, %s19, 0
      %s191 = smul.addr %s190, 8
      %s192 = smul.addr %s188, 8
      %s193 = sadd.s32 %s191, %s192
      %s194 = smul.addr %s193, 8
      %s195 = scalar_lea.vmem %s1, %s194
      %p196 = scmp.lt.s32.totalorder %s18, 1
      %s197 = scalar_select %p196, %s18, 1
      %p198 = scmp.lt.s32.totalorder %s19, 0
      %s199 = scalar_select %p198, %s19, 0
      %s200 = smul.addr %s199, 8
      %s201 = smul.addr %s197, 8
      %s202 = sadd.s32 %s200, %s201
      %s203 = smul.addr %s202, 8
      %s204 = scalar_lea.vmem %s2, %s203
      %v205 = vld [vmem:[%s185] sm:$0xff]
      %v206 = vld [vmem:[%s185 + $0x8] sm:$0xff]
      %v207 = vld [vmem:[%s185 + $0x10] sm:$0xff]
      %v208 = vld [vmem:[%s185 + $0x18] sm:$0xff]
      %v209 = vld [vmem:[%s185 + $0x20] sm:$0xff]
      %v210 = vld [vmem:[%s185 + $0x28] sm:$0xff]
      %v211 = vld [vmem:[%s185 + $0x30] sm:$0xff]
      %v212 = vld [vmem:[%s185 + $0x38] sm:$0xff]
      %v213 = vld [vmem:[%s185 + $0x40] sm:$0xff]
      %v214 = vld [vmem:[%s185 + $0x48] sm:$0xff]
      %v215 = vld [vmem:[%s185 + $0x50] sm:$0xff]
      %v216 = vld [vmem:[%s185 + $0x58] sm:$0xff]
      %v217 = vld [vmem:[%s185 + $0x60] sm:$0xff]
      %v218 = vld [vmem:[%s185 + $0x68] sm:$0xff]
      %v219 = vld [vmem:[%s185 + $0x70] sm:$0xff]
      %v220 = vld [vmem:[%s185 + $0x78] sm:$0xff]
      %v221 = vadd.f32 %v205, %v206
      %222 = vadd.xlane.f32.xlu0 %v221
      %v223 = vpop.xlane.xlu0 %222
      %v224 = vadd.f32 %v207, %v208
      %225 = vadd.xlane.f32.xlu0 %v224
      %v226 = vpop.xlane.xlu0 %225
      %v227 = vadd.f32 %v209, %v210
      %228 = vadd.xlane.f32.xlu0 %v227
      %v229 = vpop.xlane.xlu0 %228
      %v230 = vadd.f32 %v211, %v212
      %231 = vadd.xlane.f32.xlu0 %v230
      %v232 = vpop.xlane.xlu0 %231
      %v233 = vadd.f32 %v213, %v214
      %234 = vadd.xlane.f32.xlu0 %v233
      %v235 = vpop.xlane.xlu0 %234
      %v236 = vadd.f32 %v215, %v216
      %237 = vadd.xlane.f32.xlu0 %v236
      %v238 = vpop.xlane.xlu0 %237
      %v239 = vadd.f32 %v217, %v218
      %240 = vadd.xlane.f32.xlu0 %v239
      %v241 = vpop.xlane.xlu0 %240
      %v242 = vadd.f32 %v219, %v220
      %243 = vadd.xlane.f32.xlu0 %v242
      %v244 = vpop.xlane.xlu0 %243
      %vm245 = vcmask 7168
      %246 = vst.msk [vmem:[%s195] sm:$0xff] %vm245, %v223
      %247 = vst.msk [vmem:[%s195 + $0x8] sm:$0xff] %vm245, %v226
      %248 = vst.msk [vmem:[%s195 + $0x10] sm:$0xff] %vm245, %v229
      %249 = vst.msk [vmem:[%s195 + $0x18] sm:$0xff] %vm245, %v232
      %250 = vst.msk [vmem:[%s195 + $0x20] sm:$0xff] %vm245, %v235
      %251 = vst.msk [vmem:[%s195 + $0x28] sm:$0xff] %vm245, %v238
      %252 = vst.msk [vmem:[%s195 + $0x30] sm:$0xff] %vm245, %v241
      %253 = vst.msk [vmem:[%s195 + $0x38] sm:$0xff] %vm245, %v244
      %v254 = vmul.f32 %v205, %v205
      %v255 = vmul.f32 %v206, %v206
      %v256 = vmul.f32 %v207, %v207
      %v257 = vmul.f32 %v208, %v208
      %v258 = vmul.f32 %v209, %v209
      %v259 = vmul.f32 %v210, %v210
      %v260 = vmul.f32 %v211, %v211
      %v261 = vmul.f32 %v212, %v212
      %v262 = vmul.f32 %v213, %v213
      %v263 = vmul.f32 %v214, %v214
      %v264 = vmul.f32 %v215, %v215
      %v265 = vmul.f32 %v216, %v216
      %v266 = vmul.f32 %v217, %v217
      %v267 = vmul.f32 %v218, %v218
      %v268 = vmul.f32 %v219, %v219
      %v269 = vmul.f32 %v220, %v220
      %v270 = vadd.f32 %v254, %v255
      %271 = vadd.xlane.f32.xlu0 %v270
      %v272 = vpop.xlane.xlu0 %271
      %v273 = vadd.f32 %v256, %v257
      %274 = vadd.xlane.f32.xlu0 %v273
      %v275 = vpop.xlane.xlu0 %274
      %v276 = vadd.f32 %v258, %v259
      %277 = vadd.xlane.f32.xlu0 %v276
      %v278 = vpop.xlane.xlu0 %277
      %v279 = vadd.f32 %v260, %v261
      %280 = vadd.xlane.f32.xlu0 %v279
      %v281 = vpop.xlane.xlu0 %280
      %v282 = vadd.f32 %v262, %v263
      %283 = vadd.xlane.f32.xlu0 %v282
      %v284 = vpop.xlane.xlu0 %283
      %v285 = vadd.f32 %v264, %v265
      %286 = vadd.xlane.f32.xlu0 %v285
      %v287 = vpop.xlane.xlu0 %286
      %v288 = vadd.f32 %v266, %v267
      %289 = vadd.xlane.f32.xlu0 %v288
      %v290 = vpop.xlane.xlu0 %289
      %v291 = vadd.f32 %v268, %v269
      %292 = vadd.xlane.f32.xlu0 %v291
      %v293 = vpop.xlane.xlu0 %292
      %294 = vst.msk [vmem:[%s204] sm:$0xff] %vm245, %v272
      %295 = vst.msk [vmem:[%s204 + $0x8] sm:$0xff] %vm245, %v275
      %296 = vst.msk [vmem:[%s204 + $0x10] sm:$0xff] %vm245, %v278
      %297 = vst.msk [vmem:[%s204 + $0x18] sm:$0xff] %vm245, %v281
      %298 = vst.msk [vmem:[%s204 + $0x20] sm:$0xff] %vm245, %v284
      %299 = vst.msk [vmem:[%s204 + $0x28] sm:$0xff] %vm245, %v287
      %300 = vst.msk [vmem:[%s204 + $0x30] sm:$0xff] %vm245, %v290
      %301 = vst.msk [vmem:[%s204 + $0x38] sm:$0xff] %vm245, %v293
      %p302 = scmp.lt.s32.totalorder %s18, 1
      %s303 = scalar_select %p302, %s18, 1
      %p304 = scmp.lt.s32.totalorder %s19, 0
      %s305 = scalar_select %p304, %s19, 0
      %s306 = smul.addr %s305, 8
      %s307 = smul.addr %s303, 8
      %s308 = sadd.s32 %s306, %s307
      %s309 = smul.addr %s308, 8
      %s310 = scalar_lea.vmem %s1, %s309
      %p311 = scmp.lt.s32.totalorder %s18, 1
      %s312 = scalar_select %p311, %s18, 1
      %p313 = scmp.lt.s32.totalorder %s19, 0
      %s314 = scalar_select %p313, %s19, 0
      %s315 = smul.addr %s314, 8
      %s316 = smul.addr %s312, 8
      %s317 = sadd.s32 %s315, %s316
      %s318 = smul.addr %s317, 8
      %s319 = scalar_lea.vmem %s2, %s318
      // Predicated region
      $region25: #{non_local_attn.3} parent=23 // pred_check
        %p320 = pneg %p74
      $region26: #{non_local_attn.3} parent=23 // pred_check_branch
        %322 = sbr.rel (%p320) target = $region28
      $region27: #{non_local_attn.3} parent=23 // pred_region
        _
      $region28: #{non_local_attn.3} parent=23 // pred_fallthru
        _
      // Predicated region
      $region29: #{non_local_attn.3} parent=23 // pred_check
        %p323 = pneg %p102
      $region30: #{non_local_attn.3} parent=23 // pred_check_branch
        %325 = sbr.rel (%p323) target = $region32
      $region31: #{non_local_attn.3} parent=23 // pred_region
        _
      $region32: #{non_local_attn.3} parent=23 // pred_fallthru
        _
    $region24: #{non_local_attn.3} parent=5 // pred_fallthru
      _
    %p326 = scmp.le.s32.totalorder 2, %s9
    // Predicated region
    $region33: #{non_local_attn.3} parent=5 // pred_check
      %p327 = pneg %p326
    $region34: #{non_local_attn.3} parent=5 // pred_check_branch
      %329 = sbr.rel (%p327) target = $region36
    $region35: #{non_local_attn.3} parent=5 // pred_region
      %s330 = ssub.s32 %s9, 2
      // Predicated region
      $region37: #{non_local_attn.3} parent=35 // pred_check
        %p331 = pneg %p80
      $region38: #{non_local_attn.3} parent=35 // pred_check_branch
        %333 = sbr.rel (%p331) target = $region40
      $region39: #{non_local_attn.3} parent=35 // pred_region
        %p334 = scmp.lt.s32.totalorder %s20, 1
        %s335 = scalar_select %p334, %s20, 1
        %p336 = scmp.lt.s32.totalorder %s21, 0
        %s337 = scalar_select %p336, %s21, 0
        %s338 = smul.addr %s337, 8
        %s339 = smul.addr %s335, 8
        %s340 = sadd.s32 %s338, %s339
        %s341 = smul.addr %s340, 8
        %s342 = scalar_lea.vmem %s1, %s341
      $region40: #{non_local_attn.3} parent=35 // pred_fallthru
        _
      // Predicated region
      $region41: #{non_local_attn.3} parent=35 // pred_check
        %p343 = pneg %p108
      $region42: #{non_local_attn.3} parent=35 // pred_check_branch
        %345 = sbr.rel (%p343) target = $region44
      $region43: #{non_local_attn.3} parent=35 // pred_region
        %p346 = scmp.lt.s32.totalorder %s20, 1
        %s347 = scalar_select %p346, %s20, 1
        %p348 = scmp.lt.s32.totalorder %s21, 0
        %s349 = scalar_select %p348, %s21, 0
        %s350 = smul.addr %s349, 8
        %s351 = smul.addr %s347, 8
        %s352 = sadd.s32 %s350, %s351
        %s353 = smul.addr %s352, 8
        %s354 = scalar_lea.vmem %s2, %s353
      $region44: #{non_local_attn.3} parent=35 // pred_fallthru
        _
    $region36: #{non_local_attn.3} parent=5 // pred_fallthru
      _
  $region6: #{non_local_attn.3} parent=0 // loop_footer
    %s13 = sadd.s32 1, %s9
  $region7: #{non_local_attn.3} parent=0 // loop_footer_branch
    %8 = sbr.rel target = $region3
  $region8: #{non_local_attn.3} parent=0 // loop_exit
    _

// kernel: non_local_attn.5
$region0: #{non_local_attn.5}
  #allocation0 [shape = 'u32[]', space=smem, size = 0x4, offset = 0x4, fixed_abs, tag = 'smem constant byte address 0x4 - core index']
  #allocation1 [shape = 'u32[144,128]{1,0:T(1,128)}', space=vmem, size = 0x12000, scoped, tag = 'internal scratch']
  %s0 = inlined_call_operand.vmem [shape: bf16[2,64,256], index: 0, kind: input, shape index: {}]
  %s1 = inlined_call_operand.vmem [shape: bf16[2,256,64], index: 1, kind: input, shape index: {}]
  %s2 = inlined_call_operand.vmem [shape: bf16[2,64,256], index: 2, kind: input, shape index: {}]
  %s3 = inlined_call_operand.vmem [shape: f32[2,64,256], index: 3, kind: input, shape index: {}]
  %s4 = inlined_call_operand.vmem [shape: f32[2,64,256], index: 4, kind: output, shape index: {}]
  %s5 = sld [smem:[#allocation0]]
  $region49: #{non_local_attn.5} parent=0
    _
  %s7 = ssub.s32 1, %s5
  %s8 = scalar_select 0, %s7, %s5
  loop: start=0, step=1, limit=4
  $region2: #{non_local_attn.5} parent=0 // loop_pre_header
    _
  $region3: #{non_local_attn.5} parent=0 // loop_header
    %s10 = sphi 0, %s14
    %p11 = scmp.ge.s32.totalorder %s10, 4
    %s17 = sphi 0, %s29
    %s18 = sphi 0, %s25
    %s19 = sphi 0, %s17
    %s20 = sphi 0, %s18
    %s21 = sphi 0, %s19
    %s22 = sphi 0, %s20
    %s34 = sphi 0, %s36
    %s37 = sphi 0, %s34
    %s38 = sphi 0, %s37
    %s54 = sphi 0, %s38
    %s60 = sphi 0, %s62
    %s63 = sphi 0, %s60
    %s64 = sphi 0, %s63
    %s80 = sphi 0, %s64
    %s86 = sphi 0, %s88
    %s89 = sphi 0, %s86
    %s90 = sphi 0, %s89
    %s106 = sphi 0, %s90
    %s114 = sphi 0, %s116
    %s117 = sphi 0, %s114
    %s118 = sphi 0, %s117
    %s134 = sphi 0, %s118
    %s142 = sphi 0, %s144
    %s145 = sphi 0, %s142
    %s146 = sphi 0, %s145
    %s162 = sphi 0, %s146
  $region4: #{non_local_attn.5} parent=0 // loop_header_branch
    %13 = sbr.rel (%p11) target = $region8
  $region5: #{non_local_attn.5} parent=0 // loop_body
    %s15 = ssub.s32 %s10, 1
    %s16 = ssub.s32 %s10, 2
    %s23 = sadd.s32 1, %s18
    %p24 = scmp.ge.s32.totalorder %s23, 1
    %s25 = scalar_select %p24, 0, %s23
    %s26 = sadd.s32 1, %s17
    %s27 = scalar_select %p24, %s26, %s17
    %p28 = scmp.ge.s32.totalorder %s27, 2
    %s29 = scalar_select %p28, 0, %s27
    %s30 = ssub.s32 %s17, %s29
    %s31 = ssub.s32 %s18, %s25
    %s32 = sor.u32 %s30, %s31
    %p33 = scmp.eq.s32.totalorder %s32, 0
    %s35 = sadd.s32 %s34, 1
    %s36 = scalar_select %p33, %s34, %s35
    %p39 = pneg %p33
    %p40 = scmp.eq.s32.totalorder %s10, 1
    %p41 = por %p39, %p40
    %p42 = scmp.ne.s32.totalorder %s34, %s37
    %p43 = scmp.eq.s32.totalorder %s10, 0
    %p44 = por %p42, %p43
    %p45 = scmp.ne.s32.totalorder %s34, %s37
    %p46 = scmp.eq.s32.totalorder %s15, 1
    %p47 = por %p45, %p46
    %p48 = scmp.ne.s32.totalorder %s37, %s38
    %p49 = scmp.eq.s32.totalorder %s15, 0
    %p50 = por %p48, %p49
    %p51 = scmp.ne.s32.totalorder %s37, %s38
    %p52 = scmp.eq.s32.totalorder %s16, 1
    %p53 = por %p51, %p52
    %p55 = scmp.ne.s32.totalorder %s38, %s54
    %p56 = scmp.eq.s32.totalorder %s16, 0
    %p57 = por %p55, %p56
    %s58 = ssub.s32 %s17, %s29
    %p59 = scmp.eq.s32.totalorder %s58, 0
    %s61 = sadd.s32 %s60, 1
    %s62 = scalar_select %p59, %s60, %s61
    %p65 = pneg %p59
    %p66 = scmp.eq.s32.totalorder %s10, 1
    %p67 = por %p65, %p66
    %p68 = scmp.ne.s32.totalorder %s60, %s63
    %p69 = scmp.eq.s32.totalorder %s10, 0
    %p70 = por %p68, %p69
    %p71 = scmp.ne.s32.totalorder %s60, %s63
    %p72 = scmp.eq.s32.totalorder %s15, 1
    %p73 = por %p71, %p72
    %p74 = scmp.ne.s32.totalorder %s63, %s64
    %p75 = scmp.eq.s32.totalorder %s15, 0
    %p76 = por %p74, %p75
    %p77 = scmp.ne.s32.totalorder %s63, %s64
    %p78 = scmp.eq.s32.totalorder %s16, 1
    %p79 = por %p77, %p78
    %p81 = scmp.ne.s32.totalorder %s64, %s80
    %p82 = scmp.eq.s32.totalorder %s16, 0
    %p83 = por %p81, %p82
    %s84 = ssub.s32 %s17, %s29
    %p85 = scmp.eq.s32.totalorder %s84, 0
    %s87 = sadd.s32 %s86, 1
    %s88 = scalar_select %p85, %s86, %s87
    %p91 = pneg %p85
    %p92 = scmp.eq.s32.totalorder %s10, 1
    %p93 = por %p91, %p92
    %p94 = scmp.ne.s32.totalorder %s86, %s89
    %p95 = scmp.eq.s32.totalorder %s10, 0
    %p96 = por %p94, %p95
    %p97 = scmp.ne.s32.totalorder %s86, %s89
    %p98 = scmp.eq.s32.totalorder %s15, 1
    %p99 = por %p97, %p98
    %p100 = scmp.ne.s32.totalorder %s89, %s90
    %p101 = scmp.eq.s32.totalorder %s15, 0
    %p102 = por %p100, %p101
    %p103 = scmp.ne.s32.totalorder %s89, %s90
    %p104 = scmp.eq.s32.totalorder %s16, 1
    %p105 = por %p103, %p104
    %p107 = scmp.ne.s32.totalorder %s90, %s106
    %p108 = scmp.eq.s32.totalorder %s16, 0
    %p109 = por %p107, %p108
    %s110 = ssub.s32 %s17, %s29
    %s111 = ssub.s32 %s18, %s25
    %s112 = sor.u32 %s110, %s111
    %p113 = scmp.eq.s32.totalorder %s112, 0
    %s115 = sadd.s32 %s114, 1
    %s116 = scalar_select %p113, %s114, %s115
    %p119 = pneg %p113
    %p120 = scmp.eq.s32.totalorder %s10, 1
    %p121 = por %p119, %p120
    %p122 = scmp.ne.s32.totalorder %s114, %s117
    %p123 = scmp.eq.s32.totalorder %s10, 0
    %p124 = por %p122, %p123
    %p125 = scmp.ne.s32.totalorder %s114, %s117
    %p126 = scmp.eq.s32.totalorder %s15, 1
    %p127 = por %p125, %p126
    %p128 = scmp.ne.s32.totalorder %s117, %s118
    %p129 = scmp.eq.s32.totalorder %s15, 0
    %p130 = por %p128, %p129
    %p131 = scmp.ne.s32.totalorder %s117, %s118
    %p132 = scmp.eq.s32.totalorder %s16, 1
    %p133 = por %p131, %p132
    %p135 = scmp.ne.s32.totalorder %s118, %s134
    %p136 = scmp.eq.s32.totalorder %s16, 0
    %p137 = por %p135, %p136
    %s138 = ssub.s32 %s17, %s29
    %s139 = ssub.s32 %s18, %s25
    %s140 = sor.u32 %s138, %s139
    %p141 = scmp.eq.s32.totalorder %s140, 0
    %s143 = sadd.s32 %s142, 1
    %s144 = scalar_select %p141, %s142, %s143
    %p147 = pneg %p141
    %p148 = scmp.eq.s32.totalorder %s10, 1
    %p149 = por %p147, %p148
    %p150 = scmp.ne.s32.totalorder %s142, %s145
    %p151 = scmp.eq.s32.totalorder %s10, 0
    %p152 = por %p150, %p151
    %p153 = scmp.ne.s32.totalorder %s142, %s145
    %p154 = scmp.eq.s32.totalorder %s15, 1
    %p155 = por %p153, %p154
    %p156 = scmp.ne.s32.totalorder %s145, %s146
    %p157 = scmp.eq.s32.totalorder %s15, 0
    %p158 = por %p156, %p157
    %p159 = scmp.ne.s32.totalorder %s145, %s146
    %p160 = scmp.eq.s32.totalorder %s16, 1
    %p161 = por %p159, %p160
    %p163 = scmp.ne.s32.totalorder %s146, %s162
    %p164 = scmp.eq.s32.totalorder %s16, 0
    %p165 = por %p163, %p164
    %p166 = scmp.le.s32.totalorder 1, %s10
    %p167 = scmp.lt.s32.totalorder %s10, 3
    %p168 = pnand %p166, %p167
    %p169 = pneg %p168
    // Predicated region
    $region9: #{non_local_attn.5} parent=5 // pred_check
      _
    $region10: #{non_local_attn.5} parent=5 // pred_check_branch
      %171 = sbr.rel (%p168) target = $region12
    $region11: #{non_local_attn.5} parent=5 // pred_region
      %s172 = ssub.s32 %s10, 1
    $region12: #{non_local_attn.5} parent=5 // pred_fallthru
      _
    %p173 = scmp.lt.s32.totalorder %s10, 2
    // Predicated region
    $region13: #{non_local_attn.5} parent=5 // pred_check
      %p174 = pneg %p173
    $region14: #{non_local_attn.5} parent=5 // pred_check_branch
      %176 = sbr.rel (%p174) target = $region16
    $region15: #{non_local_attn.5} parent=5 // pred_region
      // Predicated region
      $region17: #{non_local_attn.5} parent=15 // pred_check
        %p177 = pneg %p44
      $region18: #{non_local_attn.5} parent=15 // pred_check_branch
        %179 = sbr.rel (%p177) target = $region20
      $region19: #{non_local_attn.5} parent=15 // pred_region
        %s180 = smul.u32 2, %s18
        %p181 = scmp.lt.s32.totalorder %s17, 1
        %s182 = scalar_select %p181, %s17, 1
        %p183 = scmp.lt.s32.totalorder %s180, 1
        %s184 = scalar_select %p183, %s180, 1
        %s185 = smul.addr %s182, 16
        %s186 = sadd.s32 %s184, %s185
        %s187 = smul.addr %s186, 4
        %s188 = scalar_lea.vmem %s0, %s187
        %s189 = smul.u32 2, %s18
      $region20: #{non_local_attn.5} parent=15 // pred_fallthru
        _
      // Predicated region
      $region21: #{non_local_attn.5} parent=15 // pred_check
        %p190 = pneg %p70
      $region22: #{non_local_attn.5} parent=15 // pred_check_branch
        %192 = sbr.rel (%p190) target = $region24
      $region23: #{non_local_attn.5} parent=15 // pred_region
        %p193 = scmp.lt.s32.totalorder %s17, 1
        %s194 = scalar_select %p193, %s17, 1
        %s195 = smul.addr %s194, 32
        %s196 = smul.addr %s195, 4
        %s197 = scalar_lea.vmem %s1, %s196
      $region24: #{non_local_attn.5} parent=15 // pred_fallthru
        _
      // Predicated region
      $region25: #{non_local_attn.5} parent=15 // pred_check
        %p198 = pneg %p96
      $region26: #{non_local_attn.5} parent=15 // pred_check_branch
        %200 = sbr.rel (%p198) target = $region28
      $region27: #{non_local_attn.5} parent=15 // pred_region
        %p201 = scmp.lt.s32.totalorder %s17, 1
        %s202 = scalar_select %p201, %s17, 1
        %s203 = smul.addr %s202, 16
        %s204 = smul.addr %s203, 4
        %s205 = scalar_lea.vmem %s2, %s204
      $region28: #{non_local_attn.5} parent=15 // pred_fallthru
        _
      // Predicated region
      $region29: #{non_local_attn.5} parent=15 // pred_check
        %p206 = pneg %p124
      $region30: #{non_local_attn.5} parent=15 // pred_check_branch
        %208 = sbr.rel (%p206) target = $region32
      $region31: #{non_local_attn.5} parent=15 // pred_region
        %s209 = smul.u32 2, %s18
        %p210 = scmp.lt.s32.totalorder %s17, 1
        %s211 = scalar_select %p210, %s17, 1
        %p212 = scmp.lt.s32.totalorder %s209, 1
        %s213 = scalar_select %p212, %s209, 1
        %s214 = smul.addr %s211, 16
        %s215 = sadd.s32 %s213, %s214
        %s216 = smul.addr %s215, 8
        %s217 = scalar_lea.vmem %s3, %s216
        %s218 = smul.u32 2, %s18
      $region32: #{non_local_attn.5} parent=15 // pred_fallthru
        _
    $region16: #{non_local_attn.5} parent=5 // pred_fallthru
      _
    %p219 = scmp.le.s32.totalorder 1, %s10
    %p220 = scmp.lt.s32.totalorder %s10, 3
    %p221 = pnand %p219, %p220
    %p222 = pneg %p221
    // Predicated region
    $region33: #{non_local_attn.5} parent=5 // pred_check
      _
    $region34: #{non_local_attn.5} parent=5 // pred_check_branch
      %224 = sbr.rel (%p221) target = $region36
    $region35: #{non_local_attn.5} parent=5 // pred_region
      %s225 = ssub.s32 %s10, 1
      %s226 = smul.u32 2, %s20
      %p227 = scmp.lt.s32.totalorder %s19, 1
      %s228 = scalar_select %p227, %s19, 1
      %p229 = scmp.lt.s32.totalorder %s226, 1
      %s230 = scalar_select %p229, %s226, 1
      %s231 = smul.addr %s228, 16
      %s232 = sadd.s32 %s230, %s231
      %s233 = smul.addr %s232, 4
      %s234 = scalar_lea.vmem %s0, %s233
      %p235 = pneg %p50
      %p236 = pneg %p47
      %p237 = scmp.lt.s32.totalorder %s19, 1
      %s238 = scalar_select %p237, %s19, 1
      %s239 = smul.addr %s238, 32
      %s240 = smul.addr %s239, 4
      %s241 = scalar_lea.vmem %s1, %s240
      %p242 = pneg %p76
      %p243 = pneg %p73
      %p244 = scmp.lt.s32.totalorder %s19, 1
      %s245 = scalar_select %p244, %s19, 1
      %s246 = smul.addr %s245, 16
      %s247 = smul.addr %s246, 4
      %s248 = scalar_lea.vmem %s2, %s247
      %p249 = pneg %p102
      %p250 = pneg %p99
      %s251 = smul.u32 2, %s20
      %p252 = scmp.lt.s32.totalorder %s19, 1
      %s253 = scalar_select %p252, %s19, 1
      %p254 = scmp.lt.s32.totalorder %s251, 1
      %s255 = scalar_select %p254, %s251, 1
      %s256 = smul.addr %s253, 16
      %s257 = sadd.s32 %s255, %s256
      %s258 = smul.addr %s257, 8
      %s259 = scalar_lea.vmem %s3, %s258
      %p260 = pneg %p130
      %p261 = pneg %p127
      %p262 = pneg %p158
      %p263 = pneg %p155
      %s264 = smul.u32 2, %s20
      %p265 = scmp.lt.s32.totalorder %s19, 1
      %s266 = scalar_select %p265, %s19, 1
      %p267 = scmp.lt.s32.totalorder %s264, 1
      %s268 = scalar_select %p267, %s264, 1
      %s269 = smul.addr %s266, 16
      %s270 = sadd.s32 %s268, %s269
      %s271 = smul.addr %s270, 8
      %s272 = scalar_lea.vmem %s4, %s271
      %s273 = smul.u32 2, %s20
      %p274 = scmp.lt.s32.totalorder %s19, 1
      %s275 = scalar_select %p274, %s19, 1
      %p276 = scmp.lt.s32.totalorder %s273, 1
      %s277 = scalar_select %p276, %s273, 1
      %s278 = smul.addr %s275, 16
      %s279 = sadd.s32 %s277, %s278
      %s280 = smul.addr %s279, 4
      %s281 = scalar_lea.vmem %s0, %s280
      %s282 = smul.u32 2, %s20
      %p283 = scmp.lt.s32.totalorder %s19, 1
      %s284 = scalar_select %p283, %s19, 1
      %s285 = smul.addr %s284, 32
      %s286 = smul.addr %s285, 4
      %s287 = scalar_lea.vmem %s1, %s286
      %p288 = scmp.lt.s32.totalorder %s19, 1
      %s289 = scalar_select %p288, %s19, 1
      %s290 = smul.addr %s289, 16
      %s291 = smul.addr %s290, 4
      %s292 = scalar_lea.vmem %s2, %s291
      %s293 = smul.u32 2, %s20
      %p294 = scmp.lt.s32.totalorder %s19, 1
      %s295 = scalar_select %p294, %s19, 1
      %p296 = scmp.lt.s32.totalorder %s293, 1
      %s297 = scalar_select %p296, %s293, 1
      %s298 = smul.addr %s295, 16
      %s299 = sadd.s32 %s297, %s298
      %s300 = smul.addr %s299, 8
      %s301 = scalar_lea.vmem %s3, %s300
      %s302 = smul.u32 2, %s20
      %s303 = smul.u32 2, %s20
      %p304 = scmp.lt.s32.totalorder %s19, 1
      %s305 = scalar_select %p304, %s19, 1
      %p306 = scmp.lt.s32.totalorder %s303, 1
      %s307 = scalar_select %p306, %s303, 1
      %s308 = smul.addr %s305, 16
      %s309 = sadd.s32 %s307, %s308
      %s310 = smul.addr %s309, 8
      %s311 = scalar_lea.vmem %s4, %s310
      %s312 = smul.u32 2, %s20
      %v314 = vld [vmem:[%s281] sm:$0xff]
      %v315 = vld [vmem:[%s281 + $0x8] sm:$0xff]
      %v316 = vld [vmem:[%s281 + $0x10] sm:$0xff]
      %v317 = vld [vmem:[%s281 + $0x18] sm:$0xff]
      %v318 = vld [vmem:[%s281 + $0x20] sm:$0xff]
      %v319 = vld [vmem:[%s281 + $0x28] sm:$0xff]
      %v320 = vld [vmem:[%s281 + $0x30] sm:$0xff]
      %v321 = vld [vmem:[%s281 + $0x38] sm:$0xff]
      %v322 = vld [vmem:[%s287] sm:$0xf]
      %v323 = vld [vmem:[%s287 + $0x4] sm:$0xf]
      %v324 = vld [vmem:[%s287 + $0x8] sm:$0xf]
      %v325 = vld [vmem:[%s287 + $0xc] sm:$0xf]
      %v326 = vld [vmem:[%s287 + $0x10] sm:$0xf]
      %v327 = vld [vmem:[%s287 + $0x14] sm:$0xf]
      %v328 = vld [vmem:[%s287 + $0x18] sm:$0xf]
      %v329 = vld [vmem:[%s287 + $0x1c] sm:$0xf]
      %v330 = vld [vmem:[%s287 + $0x20] sm:$0xf]
      %v331 = vld [vmem:[%s287 + $0x24] sm:$0xf]
      %v332 = vld [vmem:[%s287 + $0x28] sm:$0xf]
      %v333 = vld [vmem:[%s287 + $0x2c] sm:$0xf]
      %v334 = vld [vmem:[%s287 + $0x30] sm:$0xf]
      %v335 = vld [vmem:[%s287 + $0x34] sm:$0xf]
      %v336 = vld [vmem:[%s287 + $0x38] sm:$0xf]
      %v337 = vld [vmem:[%s287 + $0x3c] sm:$0xf]
      %v338 = vld [vmem:[%s287 + $0x40] sm:$0xf]
      %v339 = vld [vmem:[%s287 + $0x44] sm:$0xf]
      %v340 = vld [vmem:[%s287 + $0x48] sm:$0xf]
      %v341 = vld [vmem:[%s287 + $0x4c] sm:$0xf]
      %v342 = vld [vmem:[%s287 + $0x50] sm:$0xf]
      %v343 = vld [vmem:[%s287 + $0x54] sm:$0xf]
      %v344 = vld [vmem:[%s287 + $0x58] sm:$0xf]
      %v345 = vld [vmem:[%s287 + $0x5c] sm:$0xf]
      %v346 = vld [vmem:[%s287 + $0x60] sm:$0xf]
      %v347 = vld [vmem:[%s287 + $0x64] sm:$0xf]
      %v348 = vld [vmem:[%s287 + $0x68] sm:$0xf]
      %v349 = vld [vmem:[%s287 + $0x6c] sm:$0xf]
      %v350 = vld [vmem:[%s287 + $0x70] sm:$0xf]
      %v351 = vld [vmem:[%s287 + $0x74] sm:$0xf]
      %v352 = vld [vmem:[%s287 + $0x78] sm:$0xf]
      %v353 = vld [vmem:[%s287 + $0x7c] sm:$0xf]
      %v354 = vld [vmem:[%s292] sm:$0xff]
      %v355 = vld [vmem:[%s292 + $0x8] sm:$0xff]
      %v356 = vld [vmem:[%s292 + $0x10] sm:$0xff]
      %v357 = vld [vmem:[%s292 + $0x18] sm:$0xff]
      %v358 = vld [vmem:[%s292 + $0x20] sm:$0xff]
      %v359 = vld [vmem:[%s292 + $0x28] sm:$0xff]
      %v360 = vld [vmem:[%s292 + $0x30] sm:$0xff]
      %v361 = vld [vmem:[%s292 + $0x38] sm:$0xff]
      %v394 = vunpack.c.l.b16 %v322
      %v395 = vunpack.c.l.b16 %v323
      %v396 = vunpack.c.l.b16 %v324
      %v397 = vunpack.c.l.b16 %v325
      %v398 = vunpack.c.l.b16 %v326
      %v399 = vunpack.c.l.b16 %v327
      %v400 = vunpack.c.l.b16 %v328
      %v401 = vunpack.c.l.b16 %v329
      %v402 = vunpack.c.l.b16 %v330
      %v403 = vunpack.c.l.b16 %v331
      %v404 = vunpack.c.l.b16 %v332
      %v405 = vunpack.c.l.b16 %v333
      %v406 = vunpack.c.l.b16 %v334
      %v407 = vunpack.c.l.b16 %v335
      %v408 = vunpack.c.l.b16 %v336
      %v409 = vunpack.c.l.b16 %v337
      %v410 = vunpack.c.l.b16 %v338
      %v411 = vunpack.c.l.b16 %v339
      %v412 = vunpack.c.l.b16 %v340
      %v413 = vunpack.c.l.b16 %v341
      %v414 = vunpack.c.l.b16 %v342
      %v415 = vunpack.c.l.b16 %v343
      %v416 = vunpack.c.l.b16 %v344
      %v417 = vunpack.c.l.b16 %v345
      %v418 = vunpack.c.l.b16 %v346
      %v419 = vunpack.c.l.b16 %v347
      %v420 = vunpack.c.l.b16 %v348
      %v421 = vunpack.c.l.b16 %v349
      %v422 = vunpack.c.l.b16 %v350
      %v423 = vunpack.c.l.b16 %v351
      %v424 = vunpack.c.l.b16 %v352
      %v425 = vunpack.c.l.b16 %v353
      %v426 = vpack.c.b16 %v395, %v394
      %v427 = vpack.c.b16 %v397, %v396
      %v428 = vpack.c.b16 %v399, %v398
      %v429 = vpack.c.b16 %v401, %v400
      %v430 = vpack.c.b16 %v403, %v402
      %v431 = vpack.c.b16 %v405, %v404
      %v432 = vpack.c.b16 %v407, %v406
      %v433 = vpack.c.b16 %v409, %v408
      %v434 = vpack.c.b16 %v411, %v410
      %v435 = vpack.c.b16 %v413, %v412
      %v436 = vpack.c.b16 %v415, %v414
      %v437 = vpack.c.b16 %v417, %v416
      %v438 = vpack.c.b16 %v419, %v418
      %v439 = vpack.c.b16 %v421, %v420
      %v440 = vpack.c.b16 %v423, %v422
      %v441 = vpack.c.b16 %v425, %v424
      %v450 = vunpack.c.l.b16 %v314
      %v451 = vunpack.c.h.b16 %v314
      %v452 = vunpack.c.l.b16 %v315
      %v453 = vunpack.c.h.b16 %v315
      %v454 = vunpack.c.l.b16 %v316
      %v455 = vunpack.c.h.b16 %v316
      %v456 = vunpack.c.l.b16 %v317
      %v457 = vunpack.c.h.b16 %v317
      %v458 = vunpack.c.l.b16 %v318
      %v459 = vunpack.c.h.b16 %v318
      %v460 = vunpack.c.l.b16 %v319
      %v461 = vunpack.c.h.b16 %v319
      %v462 = vunpack.c.l.b16 %v320
      %v463 = vunpack.c.h.b16 %v320
      %v464 = vunpack.c.l.b16 %v321
      %v465 = vunpack.c.h.b16 %v321
      %v466 = vpack.c.b16 %v452, %v450
      %v467 = vpack.c.b16 %v453, %v451
      %v468 = vpack.c.b16 %v456, %v454
      %v469 = vpack.c.b16 %v457, %v455
      %v470 = vpack.c.b16 %v460, %v458
      %v471 = vpack.c.b16 %v461, %v459
      %v472 = vpack.c.b16 %v464, %v462
      %v473 = vpack.c.b16 %v465, %v463
      %vm482 = vcmask 523264
      %v484 = vsel %vm482, %v426, 0
      %v487 = vsel %vm482, %v427, 0
      %v490 = vsel %vm482, %v428, 0
      %v493 = vsel %vm482, %v429, 0
      %v496 = vsel %vm482, %v430, 0
      %v499 = vsel %vm482, %v431, 0
      %v502 = vsel %vm482, %v432, 0
      %v505 = vsel %vm482, %v433, 0
      %v508 = vsel %vm482, %v434, 0
      %v511 = vsel %vm482, %v435, 0
      %v514 = vsel %vm482, %v436, 0
      %v517 = vsel %vm482, %v437, 0
      %v520 = vsel %vm482, %v438, 0
      %v523 = vsel %vm482, %v439, 0
      %v526 = vsel %vm482, %v440, 0
      %v529 = vsel %vm482, %v441, 0
      %531 = vmatprep.subr.bf16.mxu0 %v467
      %532 = vmatpush1.bf16.msra.mxu0 %v466
      %533 = vmatprep.subr.bf16.mxu0 %v469
      %534 = vmatpush1.bf16.msra.mxu0 %v468
      %535 = vmatprep.subr.bf16.mxu0 %v471
      %536 = vmatpush1.bf16.msra.mxu0 %v470
      %537 = vmatprep.subr.bf16.mxu0 %v473
      %538 = vmatpush1.bf16.msra.mxu0 %v472
      %539 = vmatprep.subr.bf16.mxu0 0
      %540 = vmatpush1.bf16.msra.mxu0 0
      %541 = vmatprep.subr.bf16.mxu0 0
      %542 = vmatpush1.bf16.msra.mxu0 0
      %543 = vmatprep.subr.bf16.mxu0 0
      %544 = vmatpush1.bf16.msra.mxu0 0
      %545 = vmatprep.subr.bf16.mxu0 0
      %546 = vmatpush1.bf16.msra.mxu0 0
      %547 = vmatprep.subr.bf16.mxu0 0
      %548 = vmatpush1.bf16.msra.mxu0 0
      %549 = vmatprep.subr.bf16.mxu0 0
      %550 = vmatpush1.bf16.msra.mxu0 0
      %551 = vmatprep.subr.bf16.mxu0 0
      %552 = vmatpush1.bf16.msra.mxu0 0
      %553 = vmatprep.subr.bf16.mxu0 0
      %554 = vmatpush1.bf16.msra.mxu0 0
      %555 = vmatprep.subr.bf16.mxu0 0
      %556 = vmatpush1.bf16.msra.mxu0 0
      %557 = vmatprep.subr.bf16.mxu0 0
      %558 = vmatpush1.bf16.msra.mxu0 0
      %559 = vmatprep.subr.bf16.mxu0 0
      %560 = vmatpush1.bf16.msra.mxu0 0
      %561 = vmatprep.subr.bf16.mxu0 0
      %562 = vmatpush1.bf16.msra.mxu0 0
      %563 = vmatprep.mubr.bf16.mxu0 0
      %564 = vmatmul.mubr.bf16.gmra.mrb[0].mxu0 %v484
      %v565 = vpop.f32.mrb[0].mxu0
      %v566 = vadd.f32 0.0, %v565
      %v567 = vpop.f32.mrb[0].mxu0
      %v568 = vadd.f32 0.0, %v567
      %v569 = vpop.f32.mrb[0].mxu0
      %v570 = vadd.f32 0.0, %v569
      %v571 = vpop.f32.mrb[0].mxu0
      %v572 = vadd.f32 0.0, %v571
      %573 = vmatprep.mubr.bf16.mxu0 0
      %574 = vmatmul.mubr.bf16.gmra.mrb[0].mxu0 %v487
      %v575 = vpop.f32.mrb[0].mxu0
      %v576 = vadd.f32 0.0, %v575
      %v577 = vpop.f32.mrb[0].mxu0
      %v578 = vadd.f32 0.0, %v577
      %v579 = vpop.f32.mrb[0].mxu0
      %v580 = vadd.f32 0.0, %v579
      %v581 = vpop.f32.mrb[0].mxu0
      %v582 = vadd.f32 0.0, %v581
      %583 = vmatprep.mubr.bf16.mxu0 0
      %584 = vmatmul.mubr.bf16.gmra.mrb[0].mxu0 %v490
      %v585 = vpop.f32.mrb[0].mxu0
      %v586 = vadd.f32 0.0, %v585
      %v587 = vpop.f32.mrb[0].mxu0
      %v588 = vadd.f32 0.0, %v587
      %v589 = vpop.f32.mrb[0].mxu0
      %v590 = vadd.f32 0.0, %v589
      %v591 = vpop.f32.mrb[0].mxu0
      %v592 = vadd.f32 0.0, %v591
      %593 = vmatprep.mubr.bf16.mxu0 0
      %594 = vmatmul.mubr.bf16.gmra.mrb[0].mxu0 %v493
      %v595 = vpop.f32.mrb[0].mxu0
      %v596 = vadd.f32 0.0, %v595
      %v597 = vpop.f32.mrb[0].mxu0
      %v598 = vadd.f32 0.0, %v597
      %v599 = vpop.f32.mrb[0].mxu0
      %v600 = vadd.f32 0.0, %v599
      %v601 = vpop.f32.mrb[0].mxu0
      %v602 = vadd.f32 0.0, %v601
      %603 = vmatprep.mubr.bf16.mxu0 0
      %604 = vmatmul.mubr.bf16.gmra.mrb[0].mxu0 %v496
      %v605 = vpop.f32.mrb[0].mxu0
      %v606 = vadd.f32 0.0, %v605
      %v607 = vpop.f32.mrb[0].mxu0
      %v608 = vadd.f32 0.0, %v607
      %v609 = vpop.f32.mrb[0].mxu0
      %v610 = vadd.f32 0.0, %v609
      %v611 = vpop.f32.mrb[0].mxu0
      %v612 = vadd.f32 0.0, %v611
      %613 = vmatprep.mubr.bf16.mxu0 0
      %614 = vmatmul.mubr.bf16.gmra.mrb[0].mxu0 %v499
      %v615 = vpop.f32.mrb[0].mxu0
      %v616 = vadd.f32 0.0, %v615
      %v617 = vpop.f32.mrb[0].mxu0
      %v618 = vadd.f32 0.0, %v617
      %v619 = vpop.f32.mrb[0].mxu0
      %v620 = vadd.f32 0.0, %v619
      %v621 = vpop.f32.mrb[0].mxu0
      %v622 = vadd.f32 0.0, %v621
      %623 = vmatprep.mubr.bf16.mxu0 0
      %624 = vmatmul.mubr.bf16.gmra.mrb[0].mxu0 %v502
      %v625 = vpop.f32.mrb[0].mxu0
      %v626 = vadd.f32 0.0, %v625
      %v627 = vpop.f32.mrb[0].mxu0
      %v628 = vadd.f32 0.0, %v627
      %v629 = vpop.f32.mrb[0].mxu0
      %v630 = vadd.f32 0.0, %v629
      %v631 = vpop.f32.mrb[0].mxu0
      %v632 = vadd.f32 0.0, %v631
      %633 = vmatprep.mubr.bf16.mxu0 0
      %634 = vmatmul.mubr.bf16.gmra.mrb[0].mxu0 %v505
      %v635 = vpop.f32.mrb[0].mxu0
      %v636 = vadd.f32 0.0, %v635
      %v637 = vpop.f32.mrb[0].mxu0
      %v638 = vadd.f32 0.0, %v637
      %v639 = vpop.f32.mrb[0].mxu0
      %v640 = vadd.f32 0.0, %v639
      %v641 = vpop.f32.mrb[0].mxu0
      %v642 = vadd.f32 0.0, %v641
      %643 = vmatprep.mubr.bf16.mxu0 0
      %644 = vmatmul.mubr.bf16.gmra.mrb[0].mxu0 %v508
      %v645 = vpop.f32.mrb[0].mxu0
      %v646 = vadd.f32 0.0, %v645
      %v647 = vpop.f32.mrb[0].mxu0
      %v648 = vadd.f32 0.0, %v647
      %v649 = vpop.f32.mrb[0].mxu0
      %v650 = vadd.f32 0.0, %v649
      %v651 = vpop.f32.mrb[0].mxu0
      %v652 = vadd.f32 0.0, %v651
      %653 = vmatprep.mubr.bf16.mxu0 0
      %654 = vmatmul.mubr.bf16.gmra.mrb[0].mxu0 %v511
      %v655 = vpop.f32.mrb[0].mxu0
      %v656 = vadd.f32 0.0, %v655
      %v657 = vpop.f32.mrb[0].mxu0
      %v658 = vadd.f32 0.0, %v657
      %v659 = vpop.f32.mrb[0].mxu0
      %v660 = vadd.f32 0.0, %v659
      %v661 = vpop.f32.mrb[0].mxu0
      %v662 = vadd.f32 0.0, %v661
      %663 = vmatprep.mubr.bf16.mxu0 0
      %664 = vmatmul.mubr.bf16.gmra.mrb[0].mxu0 %v514
      %v665 = vpop.f32.mrb[0].mxu0
      %v666 = vadd.f32 0.0, %v665
      %v667 = vpop.f32.mrb[0].mxu0
      %v668 = vadd.f32 0.0, %v667
      %v669 = vpop.f32.mrb[0].mxu0
      %v670 = vadd.f32 0.0, %v669
      %v671 = vpop.f32.mrb[0].mxu0
      %v672 = vadd.f32 0.0, %v671
      %673 = vmatprep.mubr.bf16.mxu0 0
      %674 = vmatmul.mubr.bf16.gmra.mrb[0].mxu0 %v517
      %v675 = vpop.f32.mrb[0].mxu0
      %v676 = vadd.f32 0.0, %v675
      %v677 = vpop.f32.mrb[0].mxu0
      %v678 = vadd.f32 0.0, %v677
      %v679 = vpop.f32.mrb[0].mxu0
      %v680 = vadd.f32 0.0, %v679
      %v681 = vpop.f32.mrb[0].mxu0
      %v682 = vadd.f32 0.0, %v681
      %683 = vmatprep.mubr.bf16.mxu0 0
      %684 = vmatmul.mubr.bf16.gmra.mrb[0].mxu0 %v520
      %v685 = vpop.f32.mrb[0].mxu0
      %v686 = vadd.f32 0.0, %v685
      %v687 = vpop.f32.mrb[0].mxu0
      %v688 = vadd.f32 0.0, %v687
      %v689 = vpop.f32.mrb[0].mxu0
      %v690 = vadd.f32 0.0, %v689
      %v691 = vpop.f32.mrb[0].mxu0
      %v692 = vadd.f32 0.0, %v691
      %693 = vmatprep.mubr.bf16.mxu0 0
      %694 = vmatmul.mubr.bf16.gmra.mrb[0].mxu0 %v523
      %v695 = vpop.f32.mrb[0].mxu0
      %v696 = vadd.f32 0.0, %v695
      %v697 = vpop.f32.mrb[0].mxu0
      %v698 = vadd.f32 0.0, %v697
      %v699 = vpop.f32.mrb[0].mxu0
      %v700 = vadd.f32 0.0, %v699
      %v701 = vpop.f32.mrb[0].mxu0
      %v702 = vadd.f32 0.0, %v701
      %703 = vmatprep.mubr.bf16.mxu0 0
      %704 = vmatmul.mubr.bf16.gmra.mrb[0].mxu0 %v526
      %v705 = vpop.f32.mrb[0].mxu0
      %v706 = vadd.f32 0.0, %v705
      %v707 = vpop.f32.mrb[0].mxu0
      %v708 = vadd.f32 0.0, %v707
      %v709 = vpop.f32.mrb[0].mxu0
      %v710 = vadd.f32 0.0, %v709
      %v711 = vpop.f32.mrb[0].mxu0
      %v712 = vadd.f32 0.0, %v711
      %713 = vmatprep.mubr.bf16.mxu0 0
      %714 = vmatmul.mubr.bf16.gmra.mrb[0].mxu0 %v529
      %v715 = vpop.f32.mrb[0].mxu0
      %v716 = vadd.f32 0.0, %v715
      %v717 = vpop.f32.mrb[0].mxu0
      %v718 = vadd.f32 0.0, %v717
      %v719 = vpop.f32.mrb[0].mxu0
      %v720 = vadd.f32 0.0, %v719
      %v721 = vpop.f32.mrb[0].mxu0
      %v722 = vadd.f32 0.0, %v721
      %723 = vdwg.mxu0
      %v724 = vmax.f32 %v566, %v576
      %v725 = vmax.f32 %v570, %v580
      %v726 = vmax.f32 %v724, %v586
      %v727 = vmax.f32 %v725, %v590
      %v728 = vmax.f32 %v726, %v596
      %v729 = vmax.f32 %v727, %v600
      %v730 = vmax.f32 %v728, %v606
      %v731 = vmax.f32 %v729, %v610
      %v732 = vmax.f32 %v730, %v616
      %v733 = vmax.f32 %v731, %v620
      %v734 = vmax.f32 %v732, %v626
      %v735 = vmax.f32 %v733, %v630
      %v736 = vmax.f32 %v734, %v636
      %v737 = vmax.f32 %v735, %v640
      %v738 = vmax.f32 %v736, %v646
      %v739 = vmax.f32 %v737, %v650
      %v740 = vmax.f32 %v738, %v656
      %v741 = vmax.f32 %v739, %v660
      %v742 = vmax.f32 %v740, %v666
      %v743 = vmax.f32 %v741, %v670
      %v744 = vmax.f32 %v742, %v676
      %v745 = vmax.f32 %v743, %v680
      %v746 = vmax.f32 %v744, %v686
      %v747 = vmax.f32 %v745, %v690
      %v748 = vmax.f32 %v746, %v696
      %v749 = vmax.f32 %v747, %v700
      %v750 = vmax.f32 %v748, %v706
      %v751 = vmax.f32 %v749, %v710
      %v752 = vmax.f32 %v750, %v716
      %v753 = vmax.f32 %v751, %v720
      %v754 = vmax.f32 %v752, %v753
      %v755 = vrot.slane %v754, 4
      %v756 = vmax.f32 %v754, %v755
      %v757 = vrot.slane %v756, 2
      %v758 = vmax.f32 %v756, %v757
      %v759 = vrot.slane %v758, 1
      %v760 = vmax.f32 %v758, %v759
      %v761 = vmax.f32 %v568, %v578
      %v762 = vmax.f32 %v572, %v582
      %v763 = vmax.f32 %v761, %v588
      %v764 = vmax.f32 %v762, %v592
      %v765 = vmax.f32 %v763, %v598
      %v766 = vmax.f32 %v764, %v602
      %v767 = vmax.f32 %v765, %v608
      %v768 = vmax.f32 %v766, %v612
      %v769 = vmax.f32 %v767, %v618
      %v770 = vmax.f32 %v768, %v622
      %v771 = vmax.f32 %v769, %v628
      %v772 = vmax.f32 %v770, %v632
      %v773 = vmax.f32 %v771, %v638
      %v774 = vmax.f32 %v772, %v642
      %v775 = vmax.f32 %v773, %v648
      %v776 = vmax.f32 %v774, %v652
      %v777 = vmax.f32 %v775, %v658
      %v778 = vmax.f32 %v776, %v662
      %v779 = vmax.f32 %v777, %v668
      %v780 = vmax.f32 %v778, %v672
      %v781 = vmax.f32 %v779, %v678
      %v782 = vmax.f32 %v780, %v682
      %v783 = vmax.f32 %v781, %v688
      %v784 = vmax.f32 %v782, %v692
      %v785 = vmax.f32 %v783, %v698
      %v786 = vmax.f32 %v784, %v702
      %v787 = vmax.f32 %v785, %v708
      %v788 = vmax.f32 %v786, %v712
      %v789 = vmax.f32 %v787, %v718
      %v790 = vmax.f32 %v788, %v722
      %v791 = vmax.f32 %v789, %v790
      %v792 = vrot.slane %v791, 4
      %v793 = vmax.f32 %v791, %v792
      %v794 = vrot.slane %v793, 2
      %v795 = vmax.f32 %v793, %v794
      %v796 = vrot.slane %v795, 1
      %v797 = vmax.f32 %v795, %v796
      %v798 = vsub.f32 %v566, %v760
      %v799 = vsub.f32 %v568, %v797
      %v800 = vsub.f32 %v570, %v760
      %v801 = vsub.f32 %v572, %v797
      %v802 = vsub.f32 %v576, %v760
      %v803 = vsub.f32 %v578, %v797
      %v804 = vsub.f32 %v580, %v760
      %v805 = vsub.f32 %v582, %v797
      %v806 = vsub.f32 %v586, %v760
      %v807 = vsub.f32 %v588, %v797
      %v808 = vsub.f32 %v590, %v760
      %v809 = vsub.f32 %v592, %v797
      %v810 = vsub.f32 %v596, %v760
      %v811 = vsub.f32 %v598, %v797
      %v812 = vsub.f32 %v600, %v760
      %v813 = vsub.f32 %v602, %v797
      %v814 = vsub.f32 %v606, %v760
      %v815 = vsub.f32 %v608, %v797
      %v816 = vsub.f32 %v610, %v760
      %v817 = vsub.f32 %v612, %v797
      %v818 = vsub.f32 %v616, %v760
      %v819 = vsub.f32 %v618, %v797
      %v820 = vsub.f32 %v620, %v760
      %v821 = vsub.f32 %v622, %v797
      %v822 = vsub.f32 %v626, %v760
      %v823 = vsub.f32 %v628, %v797
      %v824 = vsub.f32 %v630, %v760
      %v825 = vsub.f32 %v632, %v797
      %v826 = vsub.f32 %v636, %v760
      %v827 = vsub.f32 %v638, %v797
      %v828 = vsub.f32 %v640, %v760
      %v829 = vsub.f32 %v642, %v797
      %v830 = vsub.f32 %v646, %v760
      %v831 = vsub.f32 %v648, %v797
      %v832 = vsub.f32 %v650, %v760
      %v833 = vsub.f32 %v652, %v797
      %v834 = vsub.f32 %v656, %v760
      %v835 = vsub.f32 %v658, %v797
      %v836 = vsub.f32 %v660, %v760
      %v837 = vsub.f32 %v662, %v797
      %v838 = vsub.f32 %v666, %v760
      %v839 = vsub.f32 %v668, %v797
      %v840 = vsub.f32 %v670, %v760
      %v841 = vsub.f32 %v672, %v797
      %v842 = vsub.f32 %v676, %v760
      %v843 = vsub.f32 %v678, %v797
      %v844 = vsub.f32 %v680, %v760
      %v845 = vsub.f32 %v682, %v797
      %v846 = vsub.f32 %v686, %v760
      %v847 = vsub.f32 %v688, %v797
      %v848 = vsub.f32 %v690, %v760
      %v849 = vsub.f32 %v692, %v797
      %v850 = vsub.f32 %v696, %v760
      %v851 = vsub.f32 %v698, %v797
      %v852 = vsub.f32 %v700, %v760
      %v853 = vsub.f32 %v702, %v797
      %v854 = vsub.f32 %v706, %v760
      %v855 = vsub.f32 %v708, %v797
      %v856 = vsub.f32 %v710, %v760
      %v857 = vsub.f32 %v712, %v797
      %v858 = vsub.f32 %v716, %v760
      %v859 = vsub.f32 %v718, %v797
      %v860 = vsub.f32 %v720, %v760
      %v861 = vsub.f32 %v722, %v797
      %v862 = vmul.f32 %v798, 1.442695
      %v863 = vpow.pop %v862
      %v864 = vmul.f32 %v799, 1.442695
      %v865 = vpow.pop %v864
      %v866 = vmul.f32 %v800, 1.442695
      %v867 = vpow.pop %v866
      %v868 = vmul.f32 %v801, 1.442695
      %v869 = vpow.pop %v868
      %v870 = vmul.f32 %v802, 1.442695
      %v871 = vpow.pop %v870
      %v872 = vmul.f32 %v803, 1.442695
      %v873 = vpow.pop %v872
      %v874 = vmul.f32 %v804, 1.442695
      %v875 = vpow.pop %v874
      %v876 = vmul.f32 %v805, 1.442695
      %v877 = vpow.pop %v876
      %v878 = vmul.f32 %v806, 1.442695
      %v879 = vpow.pop %v878
      %v880 = vmul.f32 %v807, 1.442695
      %v881 = vpow.pop %v880
      %v882 = vmul.f32 %v808, 1.442695
      %v883 = vpow.pop %v882
      %v884 = vmul.f32 %v809, 1.442695
      %v885 = vpow.pop %v884
      %v886 = vmul.f32 %v810, 1.442695
      %v887 = vpow.pop %v886
      %v888 = vmul.f32 %v811, 1.442695
      %v889 = vpow.pop %v888
      %v890 = vmul.f32 %v812, 1.442695
      %v891 = vpow.pop %v890
      %v892 = vmul.f32 %v813, 1.442695
      %v893 = vpow.pop %v892
      %v894 = vmul.f32 %v814, 1.442695
      %v895 = vpow.pop %v894
      %v896 = vmul.f32 %v815, 1.442695
      %v897 = vpow.pop %v896
      %v898 = vmul.f32 %v816, 1.442695
      %v899 = vpow.pop %v898
      %v900 = vmul.f32 %v817, 1.442695
      %v901 = vpow.pop %v900
      %v902 = vmul.f32 %v818, 1.442695
      %v903 = vpow.pop %v902
      %v904 = vmul.f32 %v819, 1.442695
      %v905 = vpow.pop %v904
      %v906 = vmul.f32 %v820, 1.442695
      %v907 = vpow.pop %v906
      %v908 = vmul.f32 %v821, 1.442695
      %v909 = vpow.pop %v908
      %v910 = vmul.f32 %v822, 1.442695
      %v911 = vpow.pop %v910
      %v912 = vmul.f32 %v823, 1.442695
      %v913 = vpow.pop %v912
      %v914 = vmul.f32 %v824, 1.442695
      %v915 = vpow.pop %v914
      %v916 = vmul.f32 %v825, 1.442695
      %v917 = vpow.pop %v916
      %v918 = vmul.f32 %v826, 1.442695
      %v919 = vpow.pop %v918
      %v920 = vmul.f32 %v827, 1.442695
      %v921 = vpow.pop %v920
      %v922 = vmul.f32 %v828, 1.442695
      %v923 = vpow.pop %v922
      %v924 = vmul.f32 %v829, 1.442695
      %v925 = vpow.pop %v924
      %v926 = vmul.f32 %v830, 1.442695
      %v927 = vpow.pop %v926
      %v928 = vmul.f32 %v831, 1.442695
      %v929 = vpow.pop %v928
      %v930 = vmul.f32 %v832, 1.442695
      %v931 = vpow.pop %v930
      %v932 = vmul.f32 %v833, 1.442695
      %v933 = vpow.pop %v932
      %v934 = vmul.f32 %v834, 1.442695
      %v935 = vpow.pop %v934
      %v936 = vmul.f32 %v835, 1.442695
      %v937 = vpow.pop %v936
      %v938 = vmul.f32 %v836, 1.442695
      %v939 = vpow.pop %v938
      %v940 = vmul.f32 %v837, 1.442695
      %v941 = vpow.pop %v940
      %v942 = vmul.f32 %v838, 1.442695
      %v943 = vpow.pop %v942
      %v944 = vmul.f32 %v839, 1.442695
      %v945 = vpow.pop %v944
      %v946 = vmul.f32 %v840, 1.442695
      %v947 = vpow.pop %v946
      %v948 = vmul.f32 %v841, 1.442695
      %v949 = vpow.pop %v948
      %v950 = vmul.f32 %v842, 1.442695
      %v951 = vpow.pop %v950
      %v952 = vmul.f32 %v843, 1.442695
      %v953 = vpow.pop %v952
      %v954 = vmul.f32 %v844, 1.442695
      %v955 = vpow.pop %v954
      %v956 = vmul.f32 %v845, 1.442695
      %v957 = vpow.pop %v956
      %v958 = vmul.f32 %v846, 1.442695
      %v959 = vpow.pop %v958
      %v960 = vmul.f32 %v847, 1.442695
      %v961 = vpow.pop %v960
      %v962 = vmul.f32 %v848, 1.442695
      %v963 = vpow.pop %v962
      %v964 = vmul.f32 %v849, 1.442695
      %v965 = vpow.pop %v964
      %v966 = vmul.f32 %v850, 1.442695
      %v967 = vpow.pop %v966
      %v968 = vmul.f32 %v851, 1.442695
      %v969 = vpow.pop %v968
      %v970 = vmul.f32 %v852, 1.442695
      %v971 = vpow.pop %v970
      %v972 = vmul.f32 %v853, 1.442695
      %v973 = vpow.pop %v972
      %v974 = vmul.f32 %v854, 1.442695
      %v975 = vpow.pop %v974
      %v976 = vmul.f32 %v855, 1.442695
      %v977 = vpow.pop %v976
      %v978 = vmul.f32 %v856, 1.442695
      %v979 = vpow.pop %v978
      %v980 = vmul.f32 %v857, 1.442695
      %v981 = vpow.pop %v980
      %v982 = vmul.f32 %v858, 1.442695
      %v983 = vpow.pop %v982
      %v984 = vmul.f32 %v859, 1.442695
      %v985 = vpow.pop %v984
      %v986 = vmul.f32 %v860, 1.442695
      %v987 = vpow.pop %v986
      %v988 = vmul.f32 %v861, 1.442695
      %v989 = vpow.pop %v988
      %v990 = vadd.f32 %v863, %v867
      %v991 = vadd.f32 %v990, %v871
      %v992 = vadd.f32 %v991, %v875
      %v993 = vadd.f32 %v992, %v879
      %v994 = vadd.f32 %v993, %v883
      %v995 = vadd.f32 %v994, %v887
      %v996 = vadd.f32 %v995, %v891
      %v997 = vadd.f32 %v996, %v895
      %v998 = vadd.f32 %v997, %v899
      %v999 = vadd.f32 %v998, %v903
      %v1000 = vadd.f32 %v999, %v907
      %v1001 = vadd.f32 %v1000, %v911
      %v1002 = vadd.f32 %v1001, %v915
      %v1003 = vadd.f32 %v1002, %v919
      %v1004 = vadd.f32 %v1003, %v923
      %v1005 = vadd.f32 %v1004, %v927
      %v1006 = vadd.f32 %v1005, %v931
      %v1007 = vadd.f32 %v1006, %v935
      %v1008 = vadd.f32 %v1007, %v939
      %v1009 = vadd.f32 %v1008, %v943
      %v1010 = vadd.f32 %v1009, %v947
      %v1011 = vadd.f32 %v1010, %v951
      %v1012 = vadd.f32 %v1011, %v955
      %v1013 = vadd.f32 %v1012, %v959
      %v1014 = vadd.f32 %v1013, %v963
      %v1015 = vadd.f32 %v1014, %v967
      %v1016 = vadd.f32 %v1015, %v971
      %v1017 = vadd.f32 %v1016, %v975
      %v1018 = vadd.f32 %v1017, %v979
      %v1019 = vadd.f32 %v1018, %v983
      %v1020 = vadd.f32 %v1019, %v987
      %v1021 = vrot.slane %v1020, 4
      %v1022 = vadd.f32 %v1020, %v1021
      %v1023 = vrot.slane %v1022, 2
      %v1024 = vadd.f32 %v1022, %v1023
      %v1025 = vrot.slane %v1024, 1
      %v1026 = vadd.f32 %v1024, %v1025
      %v1027 = vadd.f32 %v865, %v869
      %v1028 = vadd.f32 %v1027, %v873
      %v1029 = vadd.f32 %v1028, %v877
      %v1030 = vadd.f32 %v1029, %v881
      %v1031 = vadd.f32 %v1030, %v885
      %v1032 = vadd.f32 %v1031, %v889
      %v1033 = vadd.f32 %v1032, %v893
      %v1034 = vadd.f32 %v1033, %v897
      %v1035 = vadd.f32 %v1034, %v901
      %v1036 = vadd.f32 %v1035, %v905
      %v1037 = vadd.f32 %v1036, %v909
      %v1038 = vadd.f32 %v1037, %v913
      %v1039 = vadd.f32 %v1038, %v917
      %v1040 = vadd.f32 %v1039, %v921
      %v1041 = vadd.f32 %v1040, %v925
      %v1042 = vadd.f32 %v1041, %v929
      %v1043 = vadd.f32 %v1042, %v933
      %v1044 = vadd.f32 %v1043, %v937
      %v1045 = vadd.f32 %v1044, %v941
      %v1046 = vadd.f32 %v1045, %v945
      %v1047 = vadd.f32 %v1046, %v949
      %v1048 = vadd.f32 %v1047, %v953
      %v1049 = vadd.f32 %v1048, %v957
      %v1050 = vadd.f32 %v1049, %v961
      %v1051 = vadd.f32 %v1050, %v965
      %v1052 = vadd.f32 %v1051, %v969
      %v1053 = vadd.f32 %v1052, %v973
      %v1054 = vadd.f32 %v1053, %v977
      %v1055 = vadd.f32 %v1054, %v981
      %v1056 = vadd.f32 %v1055, %v985
      %v1057 = vadd.f32 %v1056, %v989
      %v1058 = vrot.slane %v1057, 4
      %v1059 = vadd.f32 %v1057, %v1058
      %v1060 = vrot.slane %v1059, 2
      %v1061 = vadd.f32 %v1059, %v1060
      %v1062 = vrot.slane %v1061, 1
      %v1063 = vadd.f32 %v1061, %v1062
      %v1064 = vpack.c.bf16 %v867, %v863
      %v1065 = vpack.c.bf16 %v869, %v865
      %v1066 = vpack.c.bf16 %v875, %v871
      %v1067 = vpack.c.bf16 %v877, %v873
      %v1068 = vpack.c.bf16 %v883, %v879
      %v1069 = vpack.c.bf16 %v885, %v881
      %v1070 = vpack.c.bf16 %v891, %v887
      %v1071 = vpack.c.bf16 %v893, %v889
      %v1072 = vpack.c.bf16 %v899, %v895
      %v1073 = vpack.c.bf16 %v901, %v897
      %v1074 = vpack.c.bf16 %v907, %v903
      %v1075 = vpack.c.bf16 %v909, %v905
      %v1076 = vpack.c.bf16 %v915, %v911
      %v1077 = vpack.c.bf16 %v917, %v913
      %v1078 = vpack.c.bf16 %v923, %v919
      %v1079 = vpack.c.bf16 %v925, %v921
      %v1080 = vpack.c.bf16 %v931, %v927
      %v1081 = vpack.c.bf16 %v933, %v929
      %v1082 = vpack.c.bf16 %v939, %v935
      %v1083 = vpack.c.bf16 %v941, %v937
      %v1084 = vpack.c.bf16 %v947, %v943
      %v1085 = vpack.c.bf16 %v949, %v945
      %v1086 = vpack.c.bf16 %v955, %v951
      %v1087 = vpack.c.bf16 %v957, %v953
      %v1088 = vpack.c.bf16 %v963, %v959
      %v1089 = vpack.c.bf16 %v965, %v961
      %v1090 = vpack.c.bf16 %v971, %v967
      %v1091 = vpack.c.bf16 %v973, %v969
      %v1092 = vpack.c.bf16 %v979, %v975
      %v1093 = vpack.c.bf16 %v981, %v977
      %v1094 = vpack.c.bf16 %v987, %v983
      %v1095 = vpack.c.bf16 %v989, %v985
      %v1104 = vunpack.c.l.b16 %v354
      %v1105 = vunpack.c.h.b16 %v354
      %v1106 = vunpack.c.l.b16 %v355
      %v1107 = vunpack.c.h.b16 %v355
      %v1108 = vunpack.c.l.b16 %v356
      %v1109 = vunpack.c.h.b16 %v356
      %v1110 = vunpack.c.l.b16 %v357
      %v1111 = vunpack.c.h.b16 %v357
      %v1112 = vunpack.c.l.b16 %v358
      %v1113 = vunpack.c.h.b16 %v358
      %v1114 = vunpack.c.l.b16 %v359
      %v1115 = vunpack.c.h.b16 %v359
      %v1116 = vunpack.c.l.b16 %v360
      %v1117 = vunpack.c.h.b16 %v360
      %v1118 = vunpack.c.l.b16 %v361
      %v1119 = vunpack.c.h.b16 %v361
      %v1120 = vpack.c.b16 %v1106, %v1104
      %v1121 = vpack.c.b16 %v1107, %v1105
      %v1122 = vpack.c.b16 %v1110, %v1108
      %v1123 = vpack.c.b16 %v1111, %v1109
      %v1124 = vpack.c.b16 %v1114, %v1112
      %v1125 = vpack.c.b16 %v1115, %v1113
      %v1126 = vpack.c.b16 %v1118, %v1116
      %v1127 = vpack.c.b16 %v1119, %v1117
      %1136 = vmatprep.subr.bf16.mxu0 %v1065
      %1137 = vmatpush1.bf16.msra.mxu0 %v1064
      %1138 = vmatprep.subr.bf16.mxu0 %v1067
      %1139 = vmatpush1.bf16.msra.mxu0 %v1066
      %1140 = vmatprep.subr.bf16.mxu0 %v1069
      %1141 = vmatpush1.bf16.msra.mxu0 %v1068
      %1142 = vmatprep.subr.bf16.mxu0 %v1071
      %1143 = vmatpush1.bf16.msra.mxu0 %v1070
      %1144 = vmatprep.subr.bf16.mxu0 %v1073
      %1145 = vmatpush1.bf16.msra.mxu0 %v1072
      %1146 = vmatprep.subr.bf16.mxu0 %v1075
      %1147 = vmatpush1.bf16.msra.mxu0 %v1074
      %1148 = vmatprep.subr.bf16.mxu0 %v1077
      %1149 = vmatpush1.bf16.msra.mxu0 %v1076
      %1150 = vmatprep.subr.bf16.mxu0 %v1079
      %1151 = vmatpush1.bf16.msra.mxu0 %v1078
      %1152 = vmatprep.subr.bf16.mxu0 %v1081
      %1153 = vmatpush1.bf16.msra.mxu0 %v1080
      %1154 = vmatprep.subr.bf16.mxu0 %v1083
      %1155 = vmatpush1.bf16.msra.mxu0 %v1082
      %1156 = vmatprep.subr.bf16.mxu0 %v1085
      %1157 = vmatpush1.bf16.msra.mxu0 %v1084
      %1158 = vmatprep.subr.bf16.mxu0 %v1087
      %1159 = vmatpush1.bf16.msra.mxu0 %v1086
      %1160 = vmatprep.subr.bf16.mxu0 %v1089
      %1161 = vmatpush1.bf16.msra.mxu0 %v1088
      %1162 = vmatprep.subr.bf16.mxu0 %v1091
      %1163 = vmatpush1.bf16.msra.mxu0 %v1090
      %1164 = vmatprep.subr.bf16.mxu0 %v1093
      %1165 = vmatpush1.bf16.msra.mxu0 %v1092
      %1166 = vmatprep.subr.bf16.mxu0 %v1095
      %1167 = vmatpush1.bf16.msra.mxu0 %v1094
      %1168 = vmatprep.mubr.bf16.mxu0 %v1121
      %1169 = vmatmul.mubr.bf16.gmra.mrb[0].mxu0 %v1120
      %v1170 = vpop.f32.mrb[0].mxu0
      %v1171 = vadd.f32 0.0, %v1170
      %v1172 = vpop.f32.mrb[0].mxu0
      %v1173 = vadd.f32 0.0, %v1172
      %v1174 = vpop.f32.mrb[0].mxu0
      %v1175 = vadd.f32 0.0, %v1174
      %v1176 = vpop.f32.mrb[0].mxu0
      %v1177 = vadd.f32 0.0, %v1176
      %1178 = vmatprep.mubr.bf16.mxu0 %v1123
      %1179 = vmatmul.mubr.bf16.gmra.mrb[0].mxu0 %v1122
      %v1180 = vpop.f32.mrb[0].mxu0
      %v1181 = vadd.f32 0.0, %v1180
      %v1182 = vpop.f32.mrb[0].mxu0
      %v1183 = vadd.f32 0.0, %v1182
      %v1184 = vpop.f32.mrb[0].mxu0
      %v1185 = vadd.f32 0.0, %v1184
      %v1186 = vpop.f32.mrb[0].mxu0
      %v1187 = vadd.f32 0.0, %v1186
      %1188 = vmatprep.mubr.bf16.mxu0 %v1125
      %1189 = vmatmul.mubr.bf16.gmra.mrb[0].mxu0 %v1124
      %v1190 = vpop.f32.mrb[0].mxu0
      %v1191 = vadd.f32 0.0, %v1190
      %v1192 = vpop.f32.mrb[0].mxu0
      %v1193 = vadd.f32 0.0, %v1192
      %v1194 = vpop.f32.mrb[0].mxu0
      %v1195 = vadd.f32 0.0, %v1194
      %v1196 = vpop.f32.mrb[0].mxu0
      %v1197 = vadd.f32 0.0, %v1196
      %1198 = vmatprep.mubr.bf16.mxu0 %v1127
      %1199 = vmatmul.mubr.bf16.gmra.mrb[0].mxu0 %v1126
      %v1200 = vpop.f32.mrb[0].mxu0
      %v1201 = vadd.f32 0.0, %v1200
      %v1202 = vpop.f32.mrb[0].mxu0
      %v1203 = vadd.f32 0.0, %v1202
      %v1204 = vpop.f32.mrb[0].mxu0
      %v1205 = vadd.f32 0.0, %v1204
      %v1206 = vpop.f32.mrb[0].mxu0
      %v1207 = vadd.f32 0.0, %v1206
      %1208 = vdwg.mxu0
      %v1209 = vld [vmem:[%s301] sm:$0xff]
      %v1210 = vld [vmem:[%s301 + $0x8] sm:$0xff]
      %v1211 = vld [vmem:[%s301 + $0x10] sm:$0xff]
      %v1212 = vld [vmem:[%s301 + $0x18] sm:$0xff]
      %v1213 = vld [vmem:[%s301 + $0x20] sm:$0xff]
      %v1214 = vld [vmem:[%s301 + $0x28] sm:$0xff]
      %v1215 = vld [vmem:[%s301 + $0x30] sm:$0xff]
      %v1216 = vld [vmem:[%s301 + $0x38] sm:$0xff]
      %v1217 = vld [vmem:[%s301 + $0x40] sm:$0xff]
      %v1218 = vld [vmem:[%s301 + $0x48] sm:$0xff]
      %v1219 = vld [vmem:[%s301 + $0x50] sm:$0xff]
      %v1220 = vld [vmem:[%s301 + $0x58] sm:$0xff]
      %v1221 = vld [vmem:[%s301 + $0x60] sm:$0xff]
      %v1222 = vld [vmem:[%s301 + $0x68] sm:$0xff]
      %v1223 = vld [vmem:[%s301 + $0x70] sm:$0xff]
      %v1224 = vld [vmem:[%s301 + $0x78] sm:$0xff]
      %v1225 = vrcp.pop %v1026
      %v1226 = vrcp.pop %v1063
      %v1227 = vmul.f32 %v1171, %v1225
      %v1228 = vmul.f32 %v1173, %v1226
      %v1229 = vmul.f32 %v1175, %v1225
      %v1230 = vmul.f32 %v1177, %v1226
      %v1231 = vmul.f32 %v1181, %v1225
      %v1232 = vmul.f32 %v1183, %v1226
      %v1233 = vmul.f32 %v1185, %v1225
      %v1234 = vmul.f32 %v1187, %v1226
      %v1235 = vmul.f32 %v1191, %v1225
      %v1236 = vmul.f32 %v1193, %v1226
      %v1237 = vmul.f32 %v1195, %v1225
      %v1238 = vmul.f32 %v1197, %v1226
      %v1239 = vmul.f32 %v1201, %v1225
      %v1240 = vmul.f32 %v1203, %v1226
      %v1241 = vmul.f32 %v1205, %v1225
      %v1242 = vmul.f32 %v1207, %v1226
      %v1243 = vadd.f32 %v1209, %v1227
      %v1244 = vadd.f32 %v1210, %v1228
      %v1245 = vadd.f32 %v1211, %v1229
      %v1246 = vadd.f32 %v1212, %v1230
      %v1247 = vadd.f32 %v1213, %v1231
      %v1248 = vadd.f32 %v1214, %v1232
      %v1249 = vadd.f32 %v1215, %v1233
      %v1250 = vadd.f32 %v1216, %v1234
      %v1251 = vadd.f32 %v1217, %v1235
      %v1252 = vadd.f32 %v1218, %v1236
      %v1253 = vadd.f32 %v1219, %v1237
      %v1254 = vadd.f32 %v1220, %v1238
      %v1255 = vadd.f32 %v1221, %v1239
      %v1256 = vadd.f32 %v1222, %v1240
      %v1257 = vadd.f32 %v1223, %v1241
      %v1258 = vadd.f32 %v1224, %v1242
      %1259 = vst [vmem:[%s311] sm:$0xff] %v1243
      %1260 = vst [vmem:[%s311 + $0x8] sm:$0xff] %v1244
      %1261 = vst [vmem:[%s311 + $0x10] sm:$0xff] %v1245
      %1262 = vst [vmem:[%s311 + $0x18] sm:$0xff] %v1246
      %1263 = vst [vmem:[%s311 + $0x20] sm:$0xff] %v1247
      %1264 = vst [vmem:[%s311 + $0x28] sm:$0xff] %v1248
      %1265 = vst [vmem:[%s311 + $0x30] sm:$0xff] %v1249
      %1266 = vst [vmem:[%s311 + $0x38] sm:$0xff] %v1250
      %1267 = vst [vmem:[%s311 + $0x40] sm:$0xff] %v1251
      %1268 = vst [vmem:[%s311 + $0x48] sm:$0xff] %v1252
      %1269 = vst [vmem:[%s311 + $0x50] sm:$0xff] %v1253
      %1270 = vst [vmem:[%s311 + $0x58] sm:$0xff] %v1254
      %1271 = vst [vmem:[%s311 + $0x60] sm:$0xff] %v1255
      %1272 = vst [vmem:[%s311 + $0x68] sm:$0xff] %v1256
      %1273 = vst [vmem:[%s311 + $0x70] sm:$0xff] %v1257
      %1274 = vst [vmem:[%s311 + $0x78] sm:$0xff] %v1258
      %s1275 = smul.u32 2, %s20
      %p1276 = scmp.lt.s32.totalorder %s19, 1
      %s1277 = scalar_select %p1276, %s19, 1
      %p1278 = scmp.lt.s32.totalorder %s1275, 1
      %s1279 = scalar_select %p1278, %s1275, 1
      %s1280 = smul.addr %s1277, 16
      %s1281 = sadd.s32 %s1279, %s1280
      %s1282 = smul.addr %s1281, 8
      %s1283 = scalar_lea.vmem %s4, %s1282
      // Predicated region
      $region37: #{non_local_attn.5} parent=35 // pred_check
        %p1284 = pneg %p155
      $region38: #{non_local_attn.5} parent=35 // pred_check_branch
        %1286 = sbr.rel (%p1284) target = $region40
      $region39: #{non_local_attn.5} parent=35 // pred_region
        %s1287 = smul.u32 2, %s20
      $region40: #{non_local_attn.5} parent=35 // pred_fallthru
        _
    $region36: #{non_local_attn.5} parent=5 // pred_fallthru
      _
    %p1288 = scmp.le.s32.totalorder 2, %s10
    // Predicated region
    $region41: #{non_local_attn.5} parent=5 // pred_check
      %p1289 = pneg %p1288
    $region42: #{non_local_attn.5} parent=5 // pred_check_branch
      %1291 = sbr.rel (%p1289) target = $region44
    $region43: #{non_local_attn.5} parent=5 // pred_region
      %s1292 = ssub.s32 %s10, 2
      // Predicated region
      $region45: #{non_local_attn.5} parent=43 // pred_check
        %p1293 = pneg %p161
      $region46: #{non_local_attn.5} parent=43 // pred_check_branch
        %1295 = sbr.rel (%p1293) target = $region48
      $region47: #{non_local_attn.5} parent=43 // pred_region
        %s1296 = smul.u32 2, %s22
        %p1297 = scmp.lt.s32.totalorder %s21, 1
        %s1298 = scalar_select %p1297, %s21, 1
        %p1299 = scmp.lt.s32.totalorder %s1296, 1
        %s1300 = scalar_select %p1299, %s1296, 1
        %s1301 = smul.addr %s1298, 16
        %s1302 = sadd.s32 %s1300, %s1301
        %s1303 = smul.addr %s1302, 8
        %s1304 = scalar_lea.vmem %s4, %s1303
      $region48: #{non_local_attn.5} parent=43 // pred_fallthru
        _
    $region44: #{non_local_attn.5} parent=5 // pred_fallthru
      _
  $region6: #{non_local_attn.5} parent=0 // loop_footer
    %s14 = sadd.s32 1, %s10
  $region7: #{non_local_attn.5} parent=0 // loop_footer_branch
    %9 = sbr.rel target = $region3
  $region8: #{non_local_attn.5} parent=0 // loop_exit
    _

// kernel: non_local_attn.4
$region0: #{non_local_attn.4}
  #allocation0 [shape = 'u32[]', space=smem, size = 0x4, offset = 0x4, fixed_abs, tag = 'smem constant byte address 0x4 - core index']
  #allocation1 [shape = 'u32[144,128]{1,0:T(1,128)}', space=vmem, size = 0x12000, scoped, tag = 'internal scratch']
  %s0 = inlined_call_operand.vmem [shape: f32[2,64,256], index: 0, kind: input, shape index: {}]
  %s1 = inlined_call_operand.vmem [shape: f32[2,64,1], index: 1, kind: input, shape index: {}]
  %s2 = inlined_call_operand.vmem [shape: f32[2,64,1], index: 2, kind: input, shape index: {}]
  %s3 = inlined_call_operand.vmem [shape: bf16[192,64], index: 3, kind: input, shape index: {}]
  %s4 = inlined_call_operand.vmem [shape: f32[192,1], index: 4, kind: input, shape index: {}]
  %s5 = inlined_call_operand.vmem [shape: bf16[2,64,256], index: 5, kind: output, shape index: {0}]
  %s6 = inlined_call_operand.vmem [shape: bf16[2,256,64], index: 6, kind: output, shape index: {1}]
  %s7 = inlined_call_operand.vmem [shape: bf16[2,64,256], index: 7, kind: output, shape index: {2}]
  %8 = xla_tuple %s5, %s6, %s7
  %s9 = sld [smem:[#allocation0]]
  $region69: #{non_local_attn.4} parent=0
    _
  %s11 = ssub.s32 1, %s9
  %s12 = scalar_select 0, %s11, %s9
  loop: start=0, step=1, limit=4
  $region2: #{non_local_attn.4} parent=0 // loop_pre_header
    _
  $region3: #{non_local_attn.4} parent=0 // loop_header
    %s14 = sphi 0, %s18
    %p15 = scmp.ge.s32.totalorder %s14, 4
    %s21 = sphi 0, %s33
    %s22 = sphi 0, %s29
    %s23 = sphi 0, %s21
    %s24 = sphi 0, %s22
    %s25 = sphi 0, %s23
    %s26 = sphi 0, %s24
    %s38 = sphi 0, %s40
    %s41 = sphi 0, %s38
    %s42 = sphi 0, %s41
    %s58 = sphi 0, %s42
    %s64 = sphi 0, %s66
    %s67 = sphi 0, %s64
    %s68 = sphi 0, %s67
    %s84 = sphi 0, %s68
    %s90 = sphi 0, %s92
    %s93 = sphi 0, %s90
    %s94 = sphi 0, %s93
    %s110 = sphi 0, %s94
    %s114 = sphi 0, %s114
    %s116 = sphi 0, %s114
    %s117 = sphi 0, %s116
    %s131 = sphi 0, %s117
    %s135 = sphi 0, %s135
    %s137 = sphi 0, %s135
    %s138 = sphi 0, %s137
    %s152 = sphi 0, %s138
    %s160 = sphi 0, %s162
    %s163 = sphi 0, %s160
    %s164 = sphi 0, %s163
    %s180 = sphi 0, %s164
    %s188 = sphi 0, %s190
    %s191 = sphi 0, %s188
    %s192 = sphi 0, %s191
    %s208 = sphi 0, %s192
    %s216 = sphi 0, %s218
    %s219 = sphi 0, %s216
    %s220 = sphi 0, %s219
    %s236 = sphi 0, %s220
  $region4: #{non_local_attn.4} parent=0 // loop_header_branch
    %17 = sbr.rel (%p15) target = $region8
  $region5: #{non_local_attn.4} parent=0 // loop_body
    %s19 = ssub.s32 %s14, 1
    %s20 = ssub.s32 %s14, 2
    %s27 = sadd.s32 1, %s22
    %p28 = scmp.ge.s32.totalorder %s27, 1
    %s29 = scalar_select %p28, 0, %s27
    %s30 = sadd.s32 1, %s21
    %s31 = scalar_select %p28, %s30, %s21
    %p32 = scmp.ge.s32.totalorder %s31, 2
    %s33 = scalar_select %p32, 0, %s31
    %s34 = ssub.s32 %s21, %s33
    %s35 = ssub.s32 %s22, %s29
    %s36 = sor.u32 %s34, %s35
    %p37 = scmp.eq.s32.totalorder %s36, 0
    %s39 = sadd.s32 %s38, 1
    %s40 = scalar_select %p37, %s38, %s39
    %p43 = pneg %p37
    %p44 = scmp.eq.s32.totalorder %s14, 1
    %p45 = por %p43, %p44
    %p46 = scmp.ne.s32.totalorder %s38, %s41
    %p47 = scmp.eq.s32.totalorder %s14, 0
    %p48 = por %p46, %p47
    %p49 = scmp.ne.s32.totalorder %s38, %s41
    %p50 = scmp.eq.s32.totalorder %s19, 1
    %p51 = por %p49, %p50
    %p52 = scmp.ne.s32.totalorder %s41, %s42
    %p53 = scmp.eq.s32.totalorder %s19, 0
    %p54 = por %p52, %p53
    %p55 = scmp.ne.s32.totalorder %s41, %s42
    %p56 = scmp.eq.s32.totalorder %s20, 1
    %p57 = por %p55, %p56
    %p59 = scmp.ne.s32.totalorder %s42, %s58
    %p60 = scmp.eq.s32.totalorder %s20, 0
    %p61 = por %p59, %p60
    %s62 = ssub.s32 %s21, %s33
    %p63 = scmp.eq.s32.totalorder %s62, 0
    %s65 = sadd.s32 %s64, 1
    %s66 = scalar_select %p63, %s64, %s65
    %p69 = pneg %p63
    %p70 = scmp.eq.s32.totalorder %s14, 1
    %p71 = por %p69, %p70
    %p72 = scmp.ne.s32.totalorder %s64, %s67
    %p73 = scmp.eq.s32.totalorder %s14, 0
    %p74 = por %p72, %p73
    %p75 = scmp.ne.s32.totalorder %s64, %s67
    %p76 = scmp.eq.s32.totalorder %s19, 1
    %p77 = por %p75, %p76
    %p78 = scmp.ne.s32.totalorder %s67, %s68
    %p79 = scmp.eq.s32.totalorder %s19, 0
    %p80 = por %p78, %p79
    %p81 = scmp.ne.s32.totalorder %s67, %s68
    %p82 = scmp.eq.s32.totalorder %s20, 1
    %p83 = por %p81, %p82
    %p85 = scmp.ne.s32.totalorder %s68, %s84
    %p86 = scmp.eq.s32.totalorder %s20, 0
    %p87 = por %p85, %p86
    %s88 = ssub.s32 %s21, %s33
    %p89 = scmp.eq.s32.totalorder %s88, 0
    %s91 = sadd.s32 %s90, 1
    %s92 = scalar_select %p89, %s90, %s91
    %p95 = pneg %p89
    %p96 = scmp.eq.s32.totalorder %s14, 1
    %p97 = por %p95, %p96
    %p98 = scmp.ne.s32.totalorder %s90, %s93
    %p99 = scmp.eq.s32.totalorder %s14, 0
    %p100 = por %p98, %p99
    %p101 = scmp.ne.s32.totalorder %s90, %s93
    %p102 = scmp.eq.s32.totalorder %s19, 1
    %p103 = por %p101, %p102
    %p104 = scmp.ne.s32.totalorder %s93, %s94
    %p105 = scmp.eq.s32.totalorder %s19, 0
    %p106 = por %p104, %p105
    %p107 = scmp.ne.s32.totalorder %s93, %s94
    %p108 = scmp.eq.s32.totalorder %s20, 1
    %p109 = por %p107, %p108
    %p111 = scmp.ne.s32.totalorder %s94, %s110
    %p112 = scmp.eq.s32.totalorder %s20, 0
    %p113 = por %p111, %p112
    %s115 = sadd.s32 %s114, 1
    %p118 = scmp.eq.s32.totalorder %s14, 1
    %p119 = scmp.ne.s32.totalorder %s114, %s116
    %p120 = scmp.eq.s32.totalorder %s14, 0
    %p121 = por %p119, %p120
    %p122 = scmp.ne.s32.totalorder %s114, %s116
    %p123 = scmp.eq.s32.totalorder %s19, 1
    %p124 = por %p122, %p123
    %p125 = scmp.ne.s32.totalorder %s116, %s117
    %p126 = scmp.eq.s32.totalorder %s19, 0
    %p127 = por %p125, %p126
    %p128 = scmp.ne.s32.totalorder %s116, %s117
    %p129 = scmp.eq.s32.totalorder %s20, 1
    %p130 = por %p128, %p129
    %p132 = scmp.ne.s32.totalorder %s117, %s131
    %p133 = scmp.eq.s32.totalorder %s20, 0
    %p134 = por %p132, %p133
    %s136 = sadd.s32 %s135, 1
    %p139 = scmp.eq.s32.totalorder %s14, 1
    %p140 = scmp.ne.s32.totalorder %s135, %s137
    %p141 = scmp.eq.s32.totalorder %s14, 0
    %p142 = por %p140, %p141
    %p143 = scmp.ne.s32.totalorder %s135, %s137
    %p144 = scmp.eq.s32.totalorder %s19, 1
    %p145 = por %p143, %p144
    %p146 = scmp.ne.s32.totalorder %s137, %s138
    %p147 = scmp.eq.s32.totalorder %s19, 0
    %p148 = por %p146, %p147
    %p149 = scmp.ne.s32.totalorder %s137, %s138
    %p150 = scmp.eq.s32.totalorder %s20, 1
    %p151 = por %p149, %p150
    %p153 = scmp.ne.s32.totalorder %s138, %s152
    %p154 = scmp.eq.s32.totalorder %s20, 0
    %p155 = por %p153, %p154
    %s156 = ssub.s32 %s21, %s33
    %s157 = ssub.s32 %s22, %s29
    %s158 = sor.u32 %s156, %s157
    %p159 = scmp.eq.s32.totalorder %s158, 0
    %s161 = sadd.s32 %s160, 1
    %s162 = scalar_select %p159, %s160, %s161
    %p165 = pneg %p159
    %p166 = scmp.eq.s32.totalorder %s14, 1
    %p167 = por %p165, %p166
    %p168 = scmp.ne.s32.totalorder %s160, %s163
    %p169 = scmp.eq.s32.totalorder %s14, 0
    %p170 = por %p168, %p169
    %p171 = scmp.ne.s32.totalorder %s160, %s163
    %p172 = scmp.eq.s32.totalorder %s19, 1
    %p173 = por %p171, %p172
    %p174 = scmp.ne.s32.totalorder %s163, %s164
    %p175 = scmp.eq.s32.totalorder %s19, 0
    %p176 = por %p174, %p175
    %p177 = scmp.ne.s32.totalorder %s163, %s164
    %p178 = scmp.eq.s32.totalorder %s20, 1
    %p179 = por %p177, %p178
    %p181 = scmp.ne.s32.totalorder %s164, %s180
    %p182 = scmp.eq.s32.totalorder %s20, 0
    %p183 = por %p181, %p182
    %s184 = ssub.s32 %s21, %s33
    %s185 = ssub.s32 %s22, %s29
    %s186 = sor.u32 %s184, %s185
    %p187 = scmp.eq.s32.totalorder %s186, 0
    %s189 = sadd.s32 %s188, 1
    %s190 = scalar_select %p187, %s188, %s189
    %p193 = pneg %p187
    %p194 = scmp.eq.s32.totalorder %s14, 1
    %p195 = por %p193, %p194
    %p196 = scmp.ne.s32.totalorder %s188, %s191
    %p197 = scmp.eq.s32.totalorder %s14, 0
    %p198 = por %p196, %p197
    %p199 = scmp.ne.s32.totalorder %s188, %s191
    %p200 = scmp.eq.s32.totalorder %s19, 1
    %p201 = por %p199, %p200
    %p202 = scmp.ne.s32.totalorder %s191, %s192
    %p203 = scmp.eq.s32.totalorder %s19, 0
    %p204 = por %p202, %p203
    %p205 = scmp.ne.s32.totalorder %s191, %s192
    %p206 = scmp.eq.s32.totalorder %s20, 1
    %p207 = por %p205, %p206
    %p209 = scmp.ne.s32.totalorder %s192, %s208
    %p210 = scmp.eq.s32.totalorder %s20, 0
    %p211 = por %p209, %p210
    %s212 = ssub.s32 %s21, %s33
    %s213 = ssub.s32 %s22, %s29
    %s214 = sor.u32 %s212, %s213
    %p215 = scmp.eq.s32.totalorder %s214, 0
    %s217 = sadd.s32 %s216, 1
    %s218 = scalar_select %p215, %s216, %s217
    %p221 = pneg %p215
    %p222 = scmp.eq.s32.totalorder %s14, 1
    %p223 = por %p221, %p222
    %p224 = scmp.ne.s32.totalorder %s216, %s219
    %p225 = scmp.eq.s32.totalorder %s14, 0
    %p226 = por %p224, %p225
    %p227 = scmp.ne.s32.totalorder %s216, %s219
    %p228 = scmp.eq.s32.totalorder %s19, 1
    %p229 = por %p227, %p228
    %p230 = scmp.ne.s32.totalorder %s219, %s220
    %p231 = scmp.eq.s32.totalorder %s19, 0
    %p232 = por %p230, %p231
    %p233 = scmp.ne.s32.totalorder %s219, %s220
    %p234 = scmp.eq.s32.totalorder %s20, 1
    %p235 = por %p233, %p234
    %p237 = scmp.ne.s32.totalorder %s220, %s236
    %p238 = scmp.eq.s32.totalorder %s20, 0
    %p239 = por %p237, %p238
    %p240 = scmp.le.s32.totalorder 1, %s14
    %p241 = scmp.lt.s32.totalorder %s14, 3
    %p242 = pnand %p240, %p241
    %p243 = pneg %p242
    // Predicated region
    $region9: #{non_local_attn.4} parent=5 // pred_check
      _
    $region10: #{non_local_attn.4} parent=5 // pred_check_branch
      %245 = sbr.rel (%p242) target = $region12
    $region11: #{non_local_attn.4} parent=5 // pred_region
      %s246 = ssub.s32 %s14, 1
      // Predicated region
      $region13: #{non_local_attn.4} parent=11 // pred_check
        %p247 = pneg %p127
      $region14: #{non_local_attn.4} parent=11 // pred_check_branch
        %249 = sbr.rel (%p247) target = $region16
      $region15: #{non_local_attn.4} parent=11 // pred_region
        _
      $region16: #{non_local_attn.4} parent=11 // pred_fallthru
        _
      // Predicated region
      $region17: #{non_local_attn.4} parent=11 // pred_check
        %p250 = pneg %p148
      $region18: #{non_local_attn.4} parent=11 // pred_check_branch
        %252 = sbr.rel (%p250) target = $region20
      $region19: #{non_local_attn.4} parent=11 // pred_region
        _
      $region20: #{non_local_attn.4} parent=11 // pred_fallthru
        _
    $region12: #{non_local_attn.4} parent=5 // pred_fallthru
      _
    %p253 = scmp.lt.s32.totalorder %s14, 2
    // Predicated region
    $region21: #{non_local_attn.4} parent=5 // pred_check
      %p254 = pneg %p253
    $region22: #{non_local_attn.4} parent=5 // pred_check_branch
      %256 = sbr.rel (%p254) target = $region24
    $region23: #{non_local_attn.4} parent=5 // pred_region
      // Predicated region
      $region25: #{non_local_attn.4} parent=23 // pred_check
        %p257 = pneg %p48
      $region26: #{non_local_attn.4} parent=23 // pred_check_branch
        %259 = sbr.rel (%p257) target = $region28
      $region27: #{non_local_attn.4} parent=23 // pred_region
        %s260 = smul.u32 2, %s22
        %p261 = scmp.lt.s32.totalorder %s21, 1
        %s262 = scalar_select %p261, %s21, 1
        %p263 = scmp.lt.s32.totalorder %s260, 1
        %s264 = scalar_select %p263, %s260, 1
        %s265 = smul.addr %s262, 16
        %s266 = sadd.s32 %s264, %s265
        %s267 = smul.addr %s266, 8
        %s268 = scalar_lea.vmem %s0, %s267
        %s269 = smul.u32 2, %s22
      $region28: #{non_local_attn.4} parent=23 // pred_fallthru
        _
      // Predicated region
      $region29: #{non_local_attn.4} parent=23 // pred_check
        %p270 = pneg %p74
      $region30: #{non_local_attn.4} parent=23 // pred_check_branch
        %272 = sbr.rel (%p270) target = $region32
      $region31: #{non_local_attn.4} parent=23 // pred_region
        %p273 = scmp.lt.s32.totalorder %s21, 1
        %s274 = scalar_select %p273, %s21, 1
        %s275 = smul.addr %s274, 8
        %s276 = smul.addr %s275, 8
        %s277 = scalar_lea.vmem %s1, %s276
      $region32: #{non_local_attn.4} parent=23 // pred_fallthru
        _
      // Predicated region
      $region33: #{non_local_attn.4} parent=23 // pred_check
        %p278 = pneg %p100
      $region34: #{non_local_attn.4} parent=23 // pred_check_branch
        %280 = sbr.rel (%p278) target = $region36
      $region35: #{non_local_attn.4} parent=23 // pred_region
        %p281 = scmp.lt.s32.totalorder %s21, 1
        %s282 = scalar_select %p281, %s21, 1
        %s283 = smul.addr %s282, 8
        %s284 = smul.addr %s283, 8
        %s285 = scalar_lea.vmem %s2, %s284
      $region36: #{non_local_attn.4} parent=23 // pred_fallthru
        _
    $region24: #{non_local_attn.4} parent=5 // pred_fallthru
      _
    %p286 = scmp.le.s32.totalorder 1, %s14
    %p287 = scmp.lt.s32.totalorder %s14, 3
    %p288 = pnand %p286, %p287
    %p289 = pneg %p288
    // Predicated region
    $region37: #{non_local_attn.4} parent=5 // pred_check
      _
    $region38: #{non_local_attn.4} parent=5 // pred_check_branch
      %291 = sbr.rel (%p288) target = $region40
    $region39: #{non_local_attn.4} parent=5 // pred_region
      %s292 = ssub.s32 %s14, 1
      %s293 = smul.u32 2, %s24
      %p294 = scmp.lt.s32.totalorder %s23, 1
      %s295 = scalar_select %p294, %s23, 1
      %p296 = scmp.lt.s32.totalorder %s293, 1
      %s297 = scalar_select %p296, %s293, 1
      %s298 = smul.addr %s295, 16
      %s299 = sadd.s32 %s297, %s298
      %s300 = smul.addr %s299, 8
      %s301 = scalar_lea.vmem %s0, %s300
      %p302 = pneg %p54
      %p303 = pneg %p51
      %p304 = scmp.lt.s32.totalorder %s23, 1
      %s305 = scalar_select %p304, %s23, 1
      %s306 = smul.addr %s305, 8
      %s307 = smul.addr %s306, 8
      %s308 = scalar_lea.vmem %s1, %s307
      %p309 = pneg %p80
      %p310 = pneg %p77
      %p311 = scmp.lt.s32.totalorder %s23, 1
      %s312 = scalar_select %p311, %s23, 1
      %s313 = smul.addr %s312, 8
      %s314 = smul.addr %s313, 8
      %s315 = scalar_lea.vmem %s2, %s314
      %p316 = pneg %p106
      %p317 = pneg %p103
      %p318 = pneg %p127
      %p319 = pneg %p124
      %p320 = pneg %p148
      %p321 = pneg %p145
      %p322 = pneg %p176
      %p323 = pneg %p173
      %s324 = smul.u32 2, %s24
      %p325 = scmp.lt.s32.totalorder %s23, 1
      %s326 = scalar_select %p325, %s23, 1
      %p327 = scmp.lt.s32.totalorder %s324, 1
      %s328 = scalar_select %p327, %s324, 1
      %s329 = smul.addr %s326, 16
      %s330 = sadd.s32 %s328, %s329
      %s331 = smul.addr %s330, 4
      %s332 = scalar_lea.vmem %s5, %s331
      %p333 = pneg %p204
      %p334 = pneg %p201
      %s335 = smul.u32 32, %s24
      %p336 = scmp.lt.s32.totalorder %s23, 1
      %s337 = scalar_select %p336, %s23, 1
      %p338 = scmp.lt.s32.totalorder %s335, 31
      %s339 = scalar_select %p338, %s335, 31
      %s340 = smul.addr %s337, 32
      %s341 = sadd.s32 %s339, %s340
      %s342 = smul.addr %s341, 4
      %s343 = scalar_lea.vmem %s6, %s342
      %p344 = pneg %p232
      %p345 = pneg %p229
      %s346 = smul.u32 2, %s24
      %p347 = scmp.lt.s32.totalorder %s23, 1
      %s348 = scalar_select %p347, %s23, 1
      %p349 = scmp.lt.s32.totalorder %s346, 1
      %s350 = scalar_select %p349, %s346, 1
      %s351 = smul.addr %s348, 16
      %s352 = sadd.s32 %s350, %s351
      %s353 = smul.addr %s352, 4
      %s354 = scalar_lea.vmem %s7, %s353
      %s355 = smul.u32 2, %s24
      %p356 = scmp.lt.s32.totalorder %s23, 1
      %s357 = scalar_select %p356, %s23, 1
      %p358 = scmp.lt.s32.totalorder %s355, 1
      %s359 = scalar_select %p358, %s355, 1
      %s360 = smul.addr %s357, 16
      %s361 = sadd.s32 %s359, %s360
      %s362 = smul.addr %s361, 8
      %s363 = scalar_lea.vmem %s0, %s362
      %s364 = smul.u32 2, %s24
      %p365 = scmp.lt.s32.totalorder %s23, 1
      %s366 = scalar_select %p365, %s23, 1
      %s367 = smul.addr %s366, 8
      %s368 = smul.addr %s367, 8
      %s369 = scalar_lea.vmem %s1, %s368
      %p370 = scmp.lt.s32.totalorder %s23, 1
      %s371 = scalar_select %p370, %s23, 1
      %s372 = smul.addr %s371, 8
      %s373 = smul.addr %s372, 8
      %s374 = scalar_lea.vmem %s2, %s373
      %s375 = smul.u32 2, %s24
      %p376 = scmp.lt.s32.totalorder %s23, 1
      %s377 = scalar_select %p376, %s23, 1
      %p378 = scmp.lt.s32.totalorder %s375, 1
      %s379 = scalar_select %p378, %s375, 1
      %s380 = smul.addr %s377, 16
      %s381 = sadd.s32 %s379, %s380
      %s382 = smul.addr %s381, 4
      %s383 = scalar_lea.vmem %s5, %s382
      %s384 = smul.u32 2, %s24
      %s385 = smul.u32 32, %s24
      %p386 = scmp.lt.s32.totalorder %s23, 1
      %s387 = scalar_select %p386, %s23, 1
      %p388 = scmp.lt.s32.totalorder %s385, 31
      %s389 = scalar_select %p388, %s385, 31
      %s390 = smul.addr %s387, 32
      %s391 = sadd.s32 %s389, %s390
      %s392 = smul.addr %s391, 4
      %s393 = scalar_lea.vmem %s6, %s392
      %s394 = smul.u32 32, %s24
      %s395 = smul.u32 2, %s24
      %p396 = scmp.lt.s32.totalorder %s23, 1
      %s397 = scalar_select %p396, %s23, 1
      %p398 = scmp.lt.s32.totalorder %s395, 1
      %s399 = scalar_select %p398, %s395, 1
      %s400 = smul.addr %s397, 16
      %s401 = sadd.s32 %s399, %s400
      %s402 = smul.addr %s401, 4
      %s403 = scalar_lea.vmem %s7, %s402
      %s404 = smul.u32 2, %s24
      %v406 = vld [vmem:[%s363] sm:$0xff]
      %v407 = vld [vmem:[%s363 + $0x8] sm:$0xff]
      %v408 = vld [vmem:[%s363 + $0x10] sm:$0xff]
      %v409 = vld [vmem:[%s363 + $0x18] sm:$0xff]
      %v410 = vld [vmem:[%s363 + $0x20] sm:$0xff]
      %v411 = vld [vmem:[%s363 + $0x28] sm:$0xff]
      %v412 = vld [vmem:[%s363 + $0x30] sm:$0xff]
      %v413 = vld [vmem:[%s363 + $0x38] sm:$0xff]
      %v414 = vld [vmem:[%s363 + $0x40] sm:$0xff]
      %v415 = vld [vmem:[%s363 + $0x48] sm:$0xff]
      %v416 = vld [vmem:[%s363 + $0x50] sm:$0xff]
      %v417 = vld [vmem:[%s363 + $0x58] sm:$0xff]
      %v418 = vld [vmem:[%s363 + $0x60] sm:$0xff]
      %v419 = vld [vmem:[%s363 + $0x68] sm:$0xff]
      %v420 = vld [vmem:[%s363 + $0x70] sm:$0xff]
      %v421 = vld [vmem:[%s363 + $0x78] sm:$0xff]
      %v422 = vld [vmem:[%s369] sm:$0xff]
      %v423 = vld [vmem:[%s369 + $0x8] sm:$0xff]
      %v424 = vld [vmem:[%s369 + $0x10] sm:$0xff]
      %v425 = vld [vmem:[%s369 + $0x18] sm:$0xff]
      %v426 = vld [vmem:[%s369 + $0x20] sm:$0xff]
      %v427 = vld [vmem:[%s369 + $0x28] sm:$0xff]
      %v428 = vld [vmem:[%s369 + $0x30] sm:$0xff]
      %v429 = vld [vmem:[%s369 + $0x38] sm:$0xff]
      %431 = vset.pattern.permute.xlu0 0
      %432 = vperm.xlu0 %431, %v422
      %v433 = vpop.permute.xlu0 %432
      %436 = vset.pattern.permute.xlu0 0
      %437 = vperm.xlu0 %436, %v423
      %v438 = vpop.permute.xlu0 %437
      %441 = vset.pattern.permute.xlu0 0
      %442 = vperm.xlu0 %441, %v424
      %v443 = vpop.permute.xlu0 %442
      %446 = vset.pattern.permute.xlu0 0
      %447 = vperm.xlu0 %446, %v425
      %v448 = vpop.permute.xlu0 %447
      %451 = vset.pattern.permute.xlu0 0
      %452 = vperm.xlu0 %451, %v426
      %v453 = vpop.permute.xlu0 %452
      %456 = vset.pattern.permute.xlu0 0
      %457 = vperm.xlu0 %456, %v427
      %v458 = vpop.permute.xlu0 %457
      %461 = vset.pattern.permute.xlu0 0
      %462 = vperm.xlu0 %461, %v428
      %v463 = vpop.permute.xlu0 %462
      %466 = vset.pattern.permute.xlu0 0
      %467 = vperm.xlu0 %466, %v429
      %v468 = vpop.permute.xlu0 %467
      %v470 = vmul.f32 %v406, %v433
      %v471 = vmul.f32 %v407, %v433
      %v472 = vmul.f32 %v408, %v438
      %v473 = vmul.f32 %v409, %v438
      %v474 = vmul.f32 %v410, %v443
      %v475 = vmul.f32 %v411, %v443
      %v476 = vmul.f32 %v412, %v448
      %v477 = vmul.f32 %v413, %v448
      %v478 = vmul.f32 %v414, %v453
      %v479 = vmul.f32 %v415, %v453
      %v480 = vmul.f32 %v416, %v458
      %v481 = vmul.f32 %v417, %v458
      %v482 = vmul.f32 %v418, %v463
      %v483 = vmul.f32 %v419, %v463
      %v484 = vmul.f32 %v420, %v468
      %v485 = vmul.f32 %v421, %v468
      %v486 = vld [vmem:[%s374] sm:$0xff]
      %v487 = vld [vmem:[%s374 + $0x8] sm:$0xff]
      %v488 = vld [vmem:[%s374 + $0x10] sm:$0xff]
      %v489 = vld [vmem:[%s374 + $0x18] sm:$0xff]
      %v490 = vld [vmem:[%s374 + $0x20] sm:$0xff]
      %v491 = vld [vmem:[%s374 + $0x28] sm:$0xff]
      %v492 = vld [vmem:[%s374 + $0x30] sm:$0xff]
      %v493 = vld [vmem:[%s374 + $0x38] sm:$0xff]
      %495 = vset.pattern.permute.xlu0 0
      %496 = vperm.xlu0 %495, %v486
      %v497 = vpop.permute.xlu0 %496
      %500 = vset.pattern.permute.xlu0 0
      %501 = vperm.xlu0 %500, %v487
      %v502 = vpop.permute.xlu0 %501
      %505 = vset.pattern.permute.xlu0 0
      %506 = vperm.xlu0 %505, %v488
      %v507 = vpop.permute.xlu0 %506
      %510 = vset.pattern.permute.xlu0 0
      %511 = vperm.xlu0 %510, %v489
      %v512 = vpop.permute.xlu0 %511
      %515 = vset.pattern.permute.xlu0 0
      %516 = vperm.xlu0 %515, %v490
      %v517 = vpop.permute.xlu0 %516
      %520 = vset.pattern.permute.xlu0 0
      %521 = vperm.xlu0 %520, %v491
      %v522 = vpop.permute.xlu0 %521
      %525 = vset.pattern.permute.xlu0 0
      %526 = vperm.xlu0 %525, %v492
      %v527 = vpop.permute.xlu0 %526
      %530 = vset.pattern.permute.xlu0 0
      %531 = vperm.xlu0 %530, %v493
      %v532 = vpop.permute.xlu0 %531
      %v534 = vadd.f32 %v470, %v497
      %v535 = vadd.f32 %v471, %v497
      %v536 = vadd.f32 %v472, %v502
      %v537 = vadd.f32 %v473, %v502
      %v538 = vadd.f32 %v474, %v507
      %v539 = vadd.f32 %v475, %v507
      %v540 = vadd.f32 %v476, %v512
      %v541 = vadd.f32 %v477, %v512
      %v542 = vadd.f32 %v478, %v517
      %v543 = vadd.f32 %v479, %v517
      %v544 = vadd.f32 %v480, %v522
      %v545 = vadd.f32 %v481, %v522
      %v546 = vadd.f32 %v482, %v527
      %v547 = vadd.f32 %v483, %v527
      %v548 = vadd.f32 %v484, %v532
      %v549 = vadd.f32 %v485, %v532
      %v550 = vpack.c.bf16 %v536, %v534
      %v551 = vpack.c.bf16 %v537, %v535
      %v552 = vpack.c.bf16 %v540, %v538
      %v553 = vpack.c.bf16 %v541, %v539
      %v554 = vpack.c.bf16 %v544, %v542
      %v555 = vpack.c.bf16 %v545, %v543
      %v556 = vpack.c.bf16 %v548, %v546
      %v557 = vpack.c.bf16 %v549, %v547
      %v558 = vld [vmem:[%s3] sm:$0xf]
      %v559 = vld [vmem:[%s3 + $0x4] sm:$0xf]
      %v560 = vld [vmem:[%s3 + $0x8] sm:$0xf]
      %v561 = vld [vmem:[%s3 + $0xc] sm:$0xf]
      %v562 = vld [vmem:[%s3 + $0x10] sm:$0xf]
      %v563 = vld [vmem:[%s3 + $0x14] sm:$0xf]
      %v564 = vld [vmem:[%s3 + $0x18] sm:$0xf]
      %v565 = vld [vmem:[%s3 + $0x1c] sm:$0xf]
      %v566 = vld [vmem:[%s3 + $0x20] sm:$0xf]
      %v567 = vld [vmem:[%s3 + $0x24] sm:$0xf]
      %v568 = vld [vmem:[%s3 + $0x28] sm:$0xf]
      %v569 = vld [vmem:[%s3 + $0x2c] sm:$0xf]
      %v570 = vld [vmem:[%s3 + $0x30] sm:$0xf]
      %v571 = vld [vmem:[%s3 + $0x34] sm:$0xf]
      %v572 = vld [vmem:[%s3 + $0x38] sm:$0xf]
      %v573 = vld [vmem:[%s3 + $0x3c] sm:$0xf]
      %v574 = vld [vmem:[%s3 + $0x40] sm:$0xf]
      %v575 = vld [vmem:[%s3 + $0x44] sm:$0xf]
      %v576 = vld [vmem:[%s3 + $0x48] sm:$0xf]
      %v577 = vld [vmem:[%s3 + $0x4c] sm:$0xf]
      %v578 = vld [vmem:[%s3 + $0x50] sm:$0xf]
      %v579 = vld [vmem:[%s3 + $0x54] sm:$0xf]
      %v580 = vld [vmem:[%s3 + $0x58] sm:$0xf]
      %v581 = vld [vmem:[%s3 + $0x5c] sm:$0xf]
      %v582 = vld [vmem:[%s4] sm:$0xff]
      %v583 = vld [vmem:[%s4 + $0x8] sm:$0xff]
      %v584 = vld [vmem:[%s4 + $0x10] sm:$0xff]
      %v585 = vld [vmem:[%s4 + $0x18] sm:$0xff]
      %v586 = vld [vmem:[%s4 + $0x20] sm:$0xff]
      %v587 = vld [vmem:[%s4 + $0x28] sm:$0xff]
      %v588 = vld [vmem:[%s4 + $0x30] sm:$0xff]
      %v589 = vld [vmem:[%s4 + $0x38] sm:$0xff]
      %v590 = vld [vmem:[%s4 + $0x40] sm:$0xff]
      %v591 = vld [vmem:[%s4 + $0x48] sm:$0xff]
      %v592 = vld [vmem:[%s4 + $0x50] sm:$0xff]
      %v593 = vld [vmem:[%s4 + $0x58] sm:$0xff]
      %v594 = vld [vmem:[%s4 + $0x60] sm:$0xff]
      %v595 = vld [vmem:[%s4 + $0x68] sm:$0xff]
      %v596 = vld [vmem:[%s4 + $0x70] sm:$0xff]
      %v597 = vld [vmem:[%s4 + $0x78] sm:$0xff]
      %v598 = vld [vmem:[%s4 + $0x80] sm:$0xff]
      %v599 = vld [vmem:[%s4 + $0x88] sm:$0xff]
      %v600 = vld [vmem:[%s4 + $0x90] sm:$0xff]
      %v601 = vld [vmem:[%s4 + $0x98] sm:$0xff]
      %v602 = vld [vmem:[%s4 + $0xa0] sm:$0xff]
      %v603 = vld [vmem:[%s4 + $0xa8] sm:$0xff]
      %v604 = vld [vmem:[%s4 + $0xb0] sm:$0xff]
      %v605 = vld [vmem:[%s4 + $0xb8] sm:$0xff]
      %607 = vset.pattern.permute.xlu0 0
      %608 = vperm.xlu0 %607, %v582
      %v609 = vpop.permute.xlu0 %608
      %612 = vset.pattern.permute.xlu0 0
      %613 = vperm.xlu0 %612, %v583
      %v614 = vpop.permute.xlu0 %613
      %617 = vset.pattern.permute.xlu0 0
      %618 = vperm.xlu0 %617, %v584
      %v619 = vpop.permute.xlu0 %618
      %622 = vset.pattern.permute.xlu0 0
      %623 = vperm.xlu0 %622, %v585
      %v624 = vpop.permute.xlu0 %623
      %627 = vset.pattern.permute.xlu0 0
      %628 = vperm.xlu0 %627, %v586
      %v629 = vpop.permute.xlu0 %628
      %632 = vset.pattern.permute.xlu0 0
      %633 = vperm.xlu0 %632, %v587
      %v634 = vpop.permute.xlu0 %633
      %637 = vset.pattern.permute.xlu0 0
      %638 = vperm.xlu0 %637, %v588
      %v639 = vpop.permute.xlu0 %638
      %642 = vset.pattern.permute.xlu0 0
      %643 = vperm.xlu0 %642, %v589
      %v644 = vpop.permute.xlu0 %643
      %647 = vset.pattern.permute.xlu0 0
      %648 = vperm.xlu0 %647, %v590
      %v649 = vpop.permute.xlu0 %648
      %652 = vset.pattern.permute.xlu0 0
      %653 = vperm.xlu0 %652, %v591
      %v654 = vpop.permute.xlu0 %653
      %657 = vset.pattern.permute.xlu0 0
      %658 = vperm.xlu0 %657, %v592
      %v659 = vpop.permute.xlu0 %658
      %662 = vset.pattern.permute.xlu0 0
      %663 = vperm.xlu0 %662, %v593
      %v664 = vpop.permute.xlu0 %663
      %667 = vset.pattern.permute.xlu0 0
      %668 = vperm.xlu0 %667, %v594
      %v669 = vpop.permute.xlu0 %668
      %672 = vset.pattern.permute.xlu0 0
      %673 = vperm.xlu0 %672, %v595
      %v674 = vpop.permute.xlu0 %673
      %677 = vset.pattern.permute.xlu0 0
      %678 = vperm.xlu0 %677, %v596
      %v679 = vpop.permute.xlu0 %678
      %682 = vset.pattern.permute.xlu0 0
      %683 = vperm.xlu0 %682, %v597
      %v684 = vpop.permute.xlu0 %683
      %687 = vset.pattern.permute.xlu0 0
      %688 = vperm.xlu0 %687, %v598
      %v689 = vpop.permute.xlu0 %688
      %692 = vset.pattern.permute.xlu0 0
      %693 = vperm.xlu0 %692, %v599
      %v694 = vpop.permute.xlu0 %693
      %697 = vset.pattern.permute.xlu0 0
      %698 = vperm.xlu0 %697, %v600
      %v699 = vpop.permute.xlu0 %698
      %702 = vset.pattern.permute.xlu0 0
      %703 = vperm.xlu0 %702, %v601
      %v704 = vpop.permute.xlu0 %703
      %707 = vset.pattern.permute.xlu0 0
      %708 = vperm.xlu0 %707, %v602
      %v709 = vpop.permute.xlu0 %708
      %712 = vset.pattern.permute.xlu0 0
      %713 = vperm.xlu0 %712, %v603
      %v714 = vpop.permute.xlu0 %713
      %717 = vset.pattern.permute.xlu0 0
      %718 = vperm.xlu0 %717, %v604
      %v719 = vpop.permute.xlu0 %718
      %722 = vset.pattern.permute.xlu0 0
      %723 = vperm.xlu0 %722, %v605
      %v724 = vpop.permute.xlu0 %723
      %v750 = vunpack.c.l.b16 %v558
      %v751 = vunpack.c.l.b16 %v559
      %v752 = vunpack.c.l.b16 %v560
      %v753 = vunpack.c.l.b16 %v561
      %v754 = vunpack.c.l.b16 %v562
      %v755 = vunpack.c.l.b16 %v563
      %v756 = vunpack.c.l.b16 %v564
      %v757 = vunpack.c.l.b16 %v565
      %v758 = vunpack.c.l.b16 %v566
      %v759 = vunpack.c.l.b16 %v567
      %v760 = vunpack.c.l.b16 %v568
      %v761 = vunpack.c.l.b16 %v569
      %v762 = vunpack.c.l.b16 %v570
      %v763 = vunpack.c.l.b16 %v571
      %v764 = vunpack.c.l.b16 %v572
      %v765 = vunpack.c.l.b16 %v573
      %v766 = vunpack.c.l.b16 %v574
      %v767 = vunpack.c.l.b16 %v575
      %v768 = vunpack.c.l.b16 %v576
      %v769 = vunpack.c.l.b16 %v577
      %v770 = vunpack.c.l.b16 %v578
      %v771 = vunpack.c.l.b16 %v579
      %v772 = vunpack.c.l.b16 %v580
      %v773 = vunpack.c.l.b16 %v581
      %v774 = vpack.c.b16 %v751, %v750
      %v775 = vpack.c.b16 %v753, %v752
      %v776 = vpack.c.b16 %v755, %v754
      %v777 = vpack.c.b16 %v757, %v756
      %v778 = vpack.c.b16 %v759, %v758
      %v779 = vpack.c.b16 %v761, %v760
      %v780 = vpack.c.b16 %v763, %v762
      %v781 = vpack.c.b16 %v765, %v764
      %v782 = vpack.c.b16 %v767, %v766
      %v783 = vpack.c.b16 %v769, %v768
      %v784 = vpack.c.b16 %v771, %v770
      %v785 = vpack.c.b16 %v773, %v772
      %vm786 = vcmask 523264
      %v788 = vsel %vm786, %v774, 0
      %v791 = vsel %vm786, %v775, 0
      %v794 = vsel %vm786, %v776, 0
      %v797 = vsel %vm786, %v777, 0
      %v800 = vsel %vm786, %v778, 0
      %v803 = vsel %vm786, %v779, 0
      %v806 = vsel %vm786, %v780, 0
      %v809 = vsel %vm786, %v781, 0
      %v812 = vsel %vm786, %v782, 0
      %v815 = vsel %vm786, %v783, 0
      %v818 = vsel %vm786, %v784, 0
      %v821 = vsel %vm786, %v785, 0
      %823 = vmatprep.subr.bf16.mxu0 %v551
      %824 = vmatpush1.bf16.msra.mxu0 %v550
      %825 = vmatprep.subr.bf16.mxu0 %v553
      %826 = vmatpush1.bf16.msra.mxu0 %v552
      %827 = vmatprep.subr.bf16.mxu0 %v555
      %828 = vmatpush1.bf16.msra.mxu0 %v554
      %829 = vmatprep.subr.bf16.mxu0 %v557
      %830 = vmatpush1.bf16.msra.mxu0 %v556
      %831 = vmatprep.subr.bf16.mxu0 0
      %832 = vmatpush1.bf16.msra.mxu0 0
      %833 = vmatprep.subr.bf16.mxu0 0
      %834 = vmatpush1.bf16.msra.mxu0 0
      %835 = vmatprep.subr.bf16.mxu0 0
      %836 = vmatpush1.bf16.msra.mxu0 0
      %837 = vmatprep.subr.bf16.mxu0 0
      %838 = vmatpush1.bf16.msra.mxu0 0
      %839 = vmatprep.subr.bf16.mxu0 0
      %840 = vmatpush1.bf16.msra.mxu0 0
      %841 = vmatprep.subr.bf16.mxu0 0
      %842 = vmatpush1.bf16.msra.mxu0 0
      %843 = vmatprep.subr.bf16.mxu0 0
      %844 = vmatpush1.bf16.msra.mxu0 0
      %845 = vmatprep.subr.bf16.mxu0 0
      %846 = vmatpush1.bf16.msra.mxu0 0
      %847 = vmatprep.subr.bf16.mxu0 0
      %848 = vmatpush1.bf16.msra.mxu0 0
      %849 = vmatprep.subr.bf16.mxu0 0
      %850 = vmatpush1.bf16.msra.mxu0 0
      %851 = vmatprep.subr.bf16.mxu0 0
      %852 = vmatpush1.bf16.msra.mxu0 0
      %853 = vmatprep.subr.bf16.mxu0 0
      %854 = vmatpush1.bf16.msra.mxu0 0
      %855 = vmatprep.mubr.bf16.mxu0 0
      %856 = vmatmul.mubr.bf16.gmra.mrb[0].mxu0 %v788
      %v857 = vpop.f32.mrb[0].mxu0
      %v858 = vadd.f32 %v609, %v857
      %v859 = vpop.f32.mrb[0].mxu0
      %v860 = vadd.f32 %v609, %v859
      %v861 = vpop.f32.mrb[0].mxu0
      %v862 = vadd.f32 %v614, %v861
      %v863 = vpop.f32.mrb[0].mxu0
      %v864 = vadd.f32 %v614, %v863
      %865 = vmatprep.mubr.bf16.mxu0 0
      %866 = vmatmul.mubr.bf16.gmra.mrb[0].mxu0 %v791
      %v867 = vpop.f32.mrb[0].mxu0
      %v868 = vadd.f32 %v619, %v867
      %v869 = vpop.f32.mrb[0].mxu0
      %v870 = vadd.f32 %v619, %v869
      %v871 = vpop.f32.mrb[0].mxu0
      %v872 = vadd.f32 %v624, %v871
      %v873 = vpop.f32.mrb[0].mxu0
      %v874 = vadd.f32 %v624, %v873
      %875 = vmatprep.mubr.bf16.mxu0 0
      %876 = vmatmul.mubr.bf16.gmra.mrb[0].mxu0 %v794
      %v877 = vpop.f32.mrb[0].mxu0
      %v878 = vadd.f32 %v629, %v877
      %v879 = vpop.f32.mrb[0].mxu0
      %v880 = vadd.f32 %v629, %v879
      %v881 = vpop.f32.mrb[0].mxu0
      %v882 = vadd.f32 %v634, %v881
      %v883 = vpop.f32.mrb[0].mxu0
      %v884 = vadd.f32 %v634, %v883
      %885 = vmatprep.mubr.bf16.mxu0 0
      %886 = vmatmul.mubr.bf16.gmra.mrb[0].mxu0 %v797
      %v887 = vpop.f32.mrb[0].mxu0
      %v888 = vadd.f32 %v639, %v887
      %v889 = vpop.f32.mrb[0].mxu0
      %v890 = vadd.f32 %v639, %v889
      %v891 = vpop.f32.mrb[0].mxu0
      %v892 = vadd.f32 %v644, %v891
      %v893 = vpop.f32.mrb[0].mxu0
      %v894 = vadd.f32 %v644, %v893
      %895 = vmatprep.mubr.bf16.mxu0 0
      %896 = vmatmul.mubr.bf16.gmra.mrb[0].mxu0 %v800
      %v897 = vpop.f32.mrb[0].mxu0
      %v898 = vadd.f32 %v649, %v897
      %v899 = vpop.f32.mrb[0].mxu0
      %v900 = vadd.f32 %v649, %v899
      %v901 = vpop.f32.mrb[0].mxu0
      %v902 = vadd.f32 %v654, %v901
      %v903 = vpop.f32.mrb[0].mxu0
      %v904 = vadd.f32 %v654, %v903
      %905 = vmatprep.mubr.bf16.mxu0 0
      %906 = vmatmul.mubr.bf16.gmra.mrb[0].mxu0 %v803
      %v907 = vpop.f32.mrb[0].mxu0
      %v908 = vadd.f32 %v659, %v907
      %v909 = vpop.f32.mrb[0].mxu0
      %v910 = vadd.f32 %v659, %v909
      %v911 = vpop.f32.mrb[0].mxu0
      %v912 = vadd.f32 %v664, %v911
      %v913 = vpop.f32.mrb[0].mxu0
      %v914 = vadd.f32 %v664, %v913
      %915 = vmatprep.mubr.bf16.mxu0 0
      %916 = vmatmul.mubr.bf16.gmra.mrb[0].mxu0 %v806
      %v917 = vpop.f32.mrb[0].mxu0
      %v918 = vadd.f32 %v669, %v917
      %v919 = vpop.f32.mrb[0].mxu0
      %v920 = vadd.f32 %v669, %v919
      %v921 = vpop.f32.mrb[0].mxu0
      %v922 = vadd.f32 %v674, %v921
      %v923 = vpop.f32.mrb[0].mxu0
      %v924 = vadd.f32 %v674, %v923
      %925 = vmatprep.mubr.bf16.mxu0 0
      %926 = vmatmul.mubr.bf16.gmra.mrb[0].mxu0 %v809
      %v927 = vpop.f32.mrb[0].mxu0
      %v928 = vadd.f32 %v679, %v927
      %v929 = vpop.f32.mrb[0].mxu0
      %v930 = vadd.f32 %v679, %v929
      %v931 = vpop.f32.mrb[0].mxu0
      %v932 = vadd.f32 %v684, %v931
      %v933 = vpop.f32.mrb[0].mxu0
      %v934 = vadd.f32 %v684, %v933
      %935 = vmatprep.mubr.bf16.mxu0 0
      %936 = vmatmul.mubr.bf16.gmra.mrb[0].mxu0 %v812
      %v937 = vpop.f32.mrb[0].mxu0
      %v938 = vadd.f32 %v689, %v937
      %v939 = vpop.f32.mrb[0].mxu0
      %v940 = vadd.f32 %v689, %v939
      %v941 = vpop.f32.mrb[0].mxu0
      %v942 = vadd.f32 %v694, %v941
      %v943 = vpop.f32.mrb[0].mxu0
      %v944 = vadd.f32 %v694, %v943
      %945 = vmatprep.mubr.bf16.mxu0 0
      %946 = vmatmul.mubr.bf16.gmra.mrb[0].mxu0 %v815
      %v947 = vpop.f32.mrb[0].mxu0
      %v948 = vadd.f32 %v699, %v947
      %v949 = vpop.f32.mrb[0].mxu0
      %v950 = vadd.f32 %v699, %v949
      %v951 = vpop.f32.mrb[0].mxu0
      %v952 = vadd.f32 %v704, %v951
      %v953 = vpop.f32.mrb[0].mxu0
      %v954 = vadd.f32 %v704, %v953
      %955 = vmatprep.mubr.bf16.mxu0 0
      %956 = vmatmul.mubr.bf16.gmra.mrb[0].mxu0 %v818
      %v957 = vpop.f32.mrb[0].mxu0
      %v958 = vadd.f32 %v709, %v957
      %v959 = vpop.f32.mrb[0].mxu0
      %v960 = vadd.f32 %v709, %v959
      %v961 = vpop.f32.mrb[0].mxu0
      %v962 = vadd.f32 %v714, %v961
      %v963 = vpop.f32.mrb[0].mxu0
      %v964 = vadd.f32 %v714, %v963
      %965 = vmatprep.mubr.bf16.mxu0 0
      %966 = vmatmul.mubr.bf16.gmra.mrb[0].mxu0 %v821
      %v967 = vpop.f32.mrb[0].mxu0
      %v968 = vadd.f32 %v719, %v967
      %v969 = vpop.f32.mrb[0].mxu0
      %v970 = vadd.f32 %v719, %v969
      %v971 = vpop.f32.mrb[0].mxu0
      %v972 = vadd.f32 %v724, %v971
      %v973 = vpop.f32.mrb[0].mxu0
      %v974 = vadd.f32 %v724, %v973
      %975 = vdwg.mxu0
      %v976 = vpack.c.bf16 %v862, %v858
      %v977 = vpack.c.bf16 %v864, %v860
      %v978 = vpack.c.bf16 %v872, %v868
      %v979 = vpack.c.bf16 %v874, %v870
      %v980 = vpack.c.bf16 %v882, %v878
      %v981 = vpack.c.bf16 %v884, %v880
      %v982 = vpack.c.bf16 %v892, %v888
      %v983 = vpack.c.bf16 %v894, %v890
      %v992 = vunpack.c.l.b16 %v976
      %v993 = vunpack.c.l.b16 %v977
      %v994 = vunpack.c.h.b16 %v976
      %v995 = vunpack.c.h.b16 %v977
      %v996 = vunpack.c.l.b16 %v978
      %v997 = vunpack.c.l.b16 %v979
      %v998 = vunpack.c.h.b16 %v978
      %v999 = vunpack.c.h.b16 %v979
      %v1000 = vunpack.c.l.b16 %v980
      %v1001 = vunpack.c.l.b16 %v981
      %v1002 = vunpack.c.h.b16 %v980
      %v1003 = vunpack.c.h.b16 %v981
      %v1004 = vunpack.c.l.b16 %v982
      %v1005 = vunpack.c.l.b16 %v983
      %v1006 = vunpack.c.h.b16 %v982
      %v1007 = vunpack.c.h.b16 %v983
      %v1008 = vpack.c.b16 %v993, %v992
      %v1009 = vpack.c.b16 %v995, %v994
      %v1010 = vpack.c.b16 %v997, %v996
      %v1011 = vpack.c.b16 %v999, %v998
      %v1012 = vpack.c.b16 %v1001, %v1000
      %v1013 = vpack.c.b16 %v1003, %v1002
      %v1014 = vpack.c.b16 %v1005, %v1004
      %v1015 = vpack.c.b16 %v1007, %v1006
      %1024 = vst [vmem:[%s383] sm:$0xff] %v1008
      %1025 = vst [vmem:[%s383 + $0x8] sm:$0xff] %v1009
      %1026 = vst [vmem:[%s383 + $0x10] sm:$0xff] %v1010
      %1027 = vst [vmem:[%s383 + $0x18] sm:$0xff] %v1011
      %1028 = vst [vmem:[%s383 + $0x20] sm:$0xff] %v1012
      %1029 = vst [vmem:[%s383 + $0x28] sm:$0xff] %v1013
      %1030 = vst [vmem:[%s383 + $0x30] sm:$0xff] %v1014
      %1031 = vst [vmem:[%s383 + $0x38] sm:$0xff] %v1015
      %1032 = vxpose.xlu0.b32.start [1/16] %v898, 128
      %1033 = vxpose.xlu0.b32.cont [2/16] %v902, 128
      %1034 = vxpose.xlu0.b32.cont [3/16] %v908, 128
      %1035 = vxpose.xlu0.b32.cont [4/16] %v912, 128
      %1036 = vxpose.xlu0.b32.cont [5/16] %v918, 128
      %1037 = vxpose.xlu0.b32.cont [6/16] %v922, 128
      %1038 = vxpose.xlu0.b32.cont [7/16] %v928, 128
      %1039 = vxpose.xlu0.b32.cont [8/16] %v932, 128
      %1040 = vxpose.xlu0.b32.cont [9/16] 0.0, 128
      %1041 = vxpose.xlu0.b32.cont [10/16] 0.0, 128
      %1042 = vxpose.xlu0.b32.cont [11/16] 0.0, 128
      %1043 = vxpose.xlu0.b32.cont [12/16] 0.0, 128
      %1044 = vxpose.xlu0.b32.cont [13/16] 0.0, 128
      %1045 = vxpose.xlu0.b32.cont [14/16] 0.0, 128
      %1046 = vxpose.xlu0.b32.cont [15/16] 0.0, 128
      %1047 = vxpose.xlu0.b32.end [16/16] 0.0, 128
      %v1048 = vpop.trf.xlu0
      %v1049 = vpop.trf.xlu0
      %v1050 = vpop.trf.xlu0
      %v1051 = vpop.trf.xlu0
      %v1052 = vpop.trf.xlu0
      %v1053 = vpop.trf.xlu0
      %v1054 = vpop.trf.xlu0
      %v1055 = vpop.trf.xlu0
      %v1056 = vpop.trf.xlu0
      %v1057 = vpop.trf.xlu0
      %v1058 = vpop.trf.xlu0
      %v1059 = vpop.trf.xlu0
      %v1060 = vpop.trf.xlu0
      %v1061 = vpop.trf.xlu0
      %v1062 = vpop.trf.xlu0
      %v1063 = vpop.trf.xlu0
      %1064 = vxpose.xlu0.b32.start [1/16] %v900, 128
      %1065 = vxpose.xlu0.b32.cont [2/16] %v904, 128
      %1066 = vxpose.xlu0.b32.cont [3/16] %v910, 128
      %1067 = vxpose.xlu0.b32.cont [4/16] %v914, 128
      %1068 = vxpose.xlu0.b32.cont [5/16] %v920, 128
      %1069 = vxpose.xlu0.b32.cont [6/16] %v924, 128
      %1070 = vxpose.xlu0.b32.cont [7/16] %v930, 128
      %1071 = vxpose.xlu0.b32.cont [8/16] %v934, 128
      %1072 = vxpose.xlu0.b32.cont [9/16] 0.0, 128
      %1073 = vxpose.xlu0.b32.cont [10/16] 0.0, 128
      %1074 = vxpose.xlu0.b32.cont [11/16] 0.0, 128
      %1075 = vxpose.xlu0.b32.cont [12/16] 0.0, 128
      %1076 = vxpose.xlu0.b32.cont [13/16] 0.0, 128
      %1077 = vxpose.xlu0.b32.cont [14/16] 0.0, 128
      %1078 = vxpose.xlu0.b32.cont [15/16] 0.0, 128
      %1079 = vxpose.xlu0.b32.end [16/16] 0.0, 128
      %v1080 = vpop.trf.xlu0
      %v1081 = vpop.trf.xlu0
      %v1082 = vpop.trf.xlu0
      %v1083 = vpop.trf.xlu0
      %v1084 = vpop.trf.xlu0
      %v1085 = vpop.trf.xlu0
      %v1086 = vpop.trf.xlu0
      %v1087 = vpop.trf.xlu0
      %v1088 = vpop.trf.xlu0
      %v1089 = vpop.trf.xlu0
      %v1090 = vpop.trf.xlu0
      %v1091 = vpop.trf.xlu0
      %v1092 = vpop.trf.xlu0
      %v1093 = vpop.trf.xlu0
      %v1094 = vpop.trf.xlu0
      %v1095 = vpop.trf.xlu0
      %v1096 = vpack.c.bf16 %v1049, %v1048
      %v1097 = vpack.c.bf16 %v1051, %v1050
      %v1098 = vpack.c.bf16 %v1053, %v1052
      %v1099 = vpack.c.bf16 %v1055, %v1054
      %v1100 = vpack.c.bf16 %v1057, %v1056
      %v1101 = vpack.c.bf16 %v1059, %v1058
      %v1102 = vpack.c.bf16 %v1061, %v1060
      %v1103 = vpack.c.bf16 %v1063, %v1062
      %v1104 = vpack.c.bf16 %v1081, %v1080
      %v1105 = vpack.c.bf16 %v1083, %v1082
      %v1106 = vpack.c.bf16 %v1085, %v1084
      %v1107 = vpack.c.bf16 %v1087, %v1086
      %v1108 = vpack.c.bf16 %v1089, %v1088
      %v1109 = vpack.c.bf16 %v1091, %v1090
      %v1110 = vpack.c.bf16 %v1093, %v1092
      %v1111 = vpack.c.bf16 %v1095, %v1094
      %v1128 = vunpack.c.l.b16 %v1096
      %v1129 = vunpack.c.h.b16 %v1096
      %v1130 = vunpack.c.l.b16 %v1097
      %v1131 = vunpack.c.h.b16 %v1097
      %v1132 = vunpack.c.l.b16 %v1098
      %v1133 = vunpack.c.h.b16 %v1098
      %v1134 = vunpack.c.l.b16 %v1099
      %v1135 = vunpack.c.h.b16 %v1099
      %v1136 = vunpack.c.l.b16 %v1100
      %v1137 = vunpack.c.h.b16 %v1100
      %v1138 = vunpack.c.l.b16 %v1101
      %v1139 = vunpack.c.h.b16 %v1101
      %v1140 = vunpack.c.l.b16 %v1102
      %v1141 = vunpack.c.h.b16 %v1102
      %v1142 = vunpack.c.l.b16 %v1103
      %v1143 = vunpack.c.h.b16 %v1103
      %v1144 = vunpack.c.l.b16 %v1104
      %v1145 = vunpack.c.h.b16 %v1104
      %v1146 = vunpack.c.l.b16 %v1105
      %v1147 = vunpack.c.h.b16 %v1105
      %v1148 = vunpack.c.l.b16 %v1106
      %v1149 = vunpack.c.h.b16 %v1106
      %v1150 = vunpack.c.l.b16 %v1107
      %v1151 = vunpack.c.h.b16 %v1107
      %v1152 = vunpack.c.l.b16 %v1108
      %v1153 = vunpack.c.h.b16 %v1108
      %v1154 = vunpack.c.l.b16 %v1109
      %v1155 = vunpack.c.h.b16 %v1109
      %v1156 = vunpack.c.l.b16 %v1110
      %v1157 = vunpack.c.h.b16 %v1110
      %v1158 = vunpack.c.l.b16 %v1111
      %v1159 = vunpack.c.h.b16 %v1111
      %v1160 = vpack.c.b16 %v1128, %v1128
      %v1161 = vpack.c.b16 %v1129, %v1129
      %v1162 = vpack.c.b16 %v1130, %v1130
      %v1163 = vpack.c.b16 %v1131, %v1131
      %v1164 = vpack.c.b16 %v1132, %v1132
      %v1165 = vpack.c.b16 %v1133, %v1133
      %v1166 = vpack.c.b16 %v1134, %v1134
      %v1167 = vpack.c.b16 %v1135, %v1135
      %v1168 = vpack.c.b16 %v1136, %v1136
      %v1169 = vpack.c.b16 %v1137, %v1137
      %v1170 = vpack.c.b16 %v1138, %v1138
      %v1171 = vpack.c.b16 %v1139, %v1139
      %v1172 = vpack.c.b16 %v1140, %v1140
      %v1173 = vpack.c.b16 %v1141, %v1141
      %v1174 = vpack.c.b16 %v1142, %v1142
      %v1175 = vpack.c.b16 %v1143, %v1143
      %v1176 = vpack.c.b16 %v1144, %v1144
      %v1177 = vpack.c.b16 %v1145, %v1145
      %v1178 = vpack.c.b16 %v1146, %v1146
      %v1179 = vpack.c.b16 %v1147, %v1147
      %v1180 = vpack.c.b16 %v1148, %v1148
      %v1181 = vpack.c.b16 %v1149, %v1149
      %v1182 = vpack.c.b16 %v1150, %v1150
      %v1183 = vpack.c.b16 %v1151, %v1151
      %v1184 = vpack.c.b16 %v1152, %v1152
      %v1185 = vpack.c.b16 %v1153, %v1153
      %v1186 = vpack.c.b16 %v1154, %v1154
      %v1187 = vpack.c.b16 %v1155, %v1155
      %v1188 = vpack.c.b16 %v1156, %v1156
      %v1189 = vpack.c.b16 %v1157, %v1157
      %v1190 = vpack.c.b16 %v1158, %v1158
      %v1191 = vpack.c.b16 %v1159, %v1159
      %vm1224 = vcmask 519168
      %1225 = vst.msk [vmem:[%s393] sm:$0xf] %vm1224, %v1160
      %1226 = vst.msk [vmem:[%s393 + $0x4] sm:$0xf] %vm1224, %v1161
      %1227 = vst.msk [vmem:[%s393 + $0x8] sm:$0xf] %vm1224, %v1162
      %1228 = vst.msk [vmem:[%s393 + $0xc] sm:$0xf] %vm1224, %v1163
      %1229 = vst.msk [vmem:[%s393 + $0x10] sm:$0xf] %vm1224, %v1164
      %1230 = vst.msk [vmem:[%s393 + $0x14] sm:$0xf] %vm1224, %v1165
      %1231 = vst.msk [vmem:[%s393 + $0x18] sm:$0xf] %vm1224, %v1166
      %1232 = vst.msk [vmem:[%s393 + $0x1c] sm:$0xf] %vm1224, %v1167
      %1233 = vst.msk [vmem:[%s393 + $0x20] sm:$0xf] %vm1224, %v1168
      %1234 = vst.msk [vmem:[%s393 + $0x24] sm:$0xf] %vm1224, %v1169
      %1235 = vst.msk [vmem:[%s393 + $0x28] sm:$0xf] %vm1224, %v1170
      %1236 = vst.msk [vmem:[%s393 + $0x2c] sm:$0xf] %vm1224, %v1171
      %1237 = vst.msk [vmem:[%s393 + $0x30] sm:$0xf] %vm1224, %v1172
      %1238 = vst.msk [vmem:[%s393 + $0x34] sm:$0xf] %vm1224, %v1173
      %1239 = vst.msk [vmem:[%s393 + $0x38] sm:$0xf] %vm1224, %v1174
      %1240 = vst.msk [vmem:[%s393 + $0x3c] sm:$0xf] %vm1224, %v1175
      %1241 = vst.msk [vmem:[%s393 + $0x40] sm:$0xf] %vm1224, %v1176
      %1242 = vst.msk [vmem:[%s393 + $0x44] sm:$0xf] %vm1224, %v1177
      %1243 = vst.msk [vmem:[%s393 + $0x48] sm:$0xf] %vm1224, %v1178
      %1244 = vst.msk [vmem:[%s393 + $0x4c] sm:$0xf] %vm1224, %v1179
      %1245 = vst.msk [vmem:[%s393 + $0x50] sm:$0xf] %vm1224, %v1180
      %1246 = vst.msk [vmem:[%s393 + $0x54] sm:$0xf] %vm1224, %v1181
      %1247 = vst.msk [vmem:[%s393 + $0x58] sm:$0xf] %vm1224, %v1182
      %1248 = vst.msk [vmem:[%s393 + $0x5c] sm:$0xf] %vm1224, %v1183
      %1249 = vst.msk [vmem:[%s393 + $0x60] sm:$0xf] %vm1224, %v1184
      %1250 = vst.msk [vmem:[%s393 + $0x64] sm:$0xf] %vm1224, %v1185
      %1251 = vst.msk [vmem:[%s393 + $0x68] sm:$0xf] %vm1224, %v1186
      %1252 = vst.msk [vmem:[%s393 + $0x6c] sm:$0xf] %vm1224, %v1187
      %1253 = vst.msk [vmem:[%s393 + $0x70] sm:$0xf] %vm1224, %v1188
      %1254 = vst.msk [vmem:[%s393 + $0x74] sm:$0xf] %vm1224, %v1189
      %1255 = vst.msk [vmem:[%s393 + $0x78] sm:$0xf] %vm1224, %v1190
      %1256 = vst.msk [vmem:[%s393 + $0x7c] sm:$0xf] %vm1224, %v1191
      %v1257 = vpack.c.bf16 %v942, %v938
      %v1258 = vpack.c.bf16 %v944, %v940
      %v1259 = vpack.c.bf16 %v952, %v948
      %v1260 = vpack.c.bf16 %v954, %v950
      %v1261 = vpack.c.bf16 %v962, %v958
      %v1262 = vpack.c.bf16 %v964, %v960
      %v1263 = vpack.c.bf16 %v972, %v968
      %v1264 = vpack.c.bf16 %v974, %v970
      %v1273 = vunpack.c.l.b16 %v1257
      %v1274 = vunpack.c.l.b16 %v1258
      %v1275 = vunpack.c.h.b16 %v1257
      %v1276 = vunpack.c.h.b16 %v1258
      %v1277 = vunpack.c.l.b16 %v1259
      %v1278 = vunpack.c.l.b16 %v1260
      %v1279 = vunpack.c.h.b16 %v1259
      %v1280 = vunpack.c.h.b16 %v1260
      %v1281 = vunpack.c.l.b16 %v1261
      %v1282 = vunpack.c.l.b16 %v1262
      %v1283 = vunpack.c.h.b16 %v1261
      %v1284 = vunpack.c.h.b16 %v1262
      %v1285 = vunpack.c.l.b16 %v1263
      %v1286 = vunpack.c.l.b16 %v1264
      %v1287 = vunpack.c.h.b16 %v1263
      %v1288 = vunpack.c.h.b16 %v1264
      %v1289 = vpack.c.b16 %v1274, %v1273
      %v1290 = vpack.c.b16 %v1276, %v1275
      %v1291 = vpack.c.b16 %v1278, %v1277
      %v1292 = vpack.c.b16 %v1280, %v1279
      %v1293 = vpack.c.b16 %v1282, %v1281
      %v1294 = vpack.c.b16 %v1284, %v1283
      %v1295 = vpack.c.b16 %v1286, %v1285
      %v1296 = vpack.c.b16 %v1288, %v1287
      %1305 = vst [vmem:[%s403] sm:$0xff] %v1289
      %1306 = vst [vmem:[%s403 + $0x8] sm:$0xff] %v1290
      %1307 = vst [vmem:[%s403 + $0x10] sm:$0xff] %v1291
      %1308 = vst [vmem:[%s403 + $0x18] sm:$0xff] %v1292
      %1309 = vst [vmem:[%s403 + $0x20] sm:$0xff] %v1293
      %1310 = vst [vmem:[%s403 + $0x28] sm:$0xff] %v1294
      %1311 = vst [vmem:[%s403 + $0x30] sm:$0xff] %v1295
      %1312 = vst [vmem:[%s403 + $0x38] sm:$0xff] %v1296
      %s1313 = smul.u32 2, %s24
      %p1314 = scmp.lt.s32.totalorder %s23, 1
      %s1315 = scalar_select %p1314, %s23, 1
      %p1316 = scmp.lt.s32.totalorder %s1313, 1
      %s1317 = scalar_select %p1316, %s1313, 1
      %s1318 = smul.addr %s1315, 16
      %s1319 = sadd.s32 %s1317, %s1318
      %s1320 = smul.addr %s1319, 4
      %s1321 = scalar_lea.vmem %s5, %s1320
      %s1322 = smul.u32 32, %s24
      %p1323 = scmp.lt.s32.totalorder %s23, 1
      %s1324 = scalar_select %p1323, %s23, 1
      %p1325 = scmp.lt.s32.totalorder %s1322, 31
      %s1326 = scalar_select %p1325, %s1322, 31
      %s1327 = smul.addr %s1324, 32
      %s1328 = sadd.s32 %s1326, %s1327
      %s1329 = smul.addr %s1328, 4
      %s1330 = scalar_lea.vmem %s6, %s1329
      %s1331 = smul.u32 2, %s24
      %p1332 = scmp.lt.s32.totalorder %s23, 1
      %s1333 = scalar_select %p1332, %s23, 1
      %p1334 = scmp.lt.s32.totalorder %s1331, 1
      %s1335 = scalar_select %p1334, %s1331, 1
      %s1336 = smul.addr %s1333, 16
      %s1337 = sadd.s32 %s1335, %s1336
      %s1338 = smul.addr %s1337, 4
      %s1339 = scalar_lea.vmem %s7, %s1338
      // Predicated region
      $region41: #{non_local_attn.4} parent=39 // pred_check
        %p1340 = pneg %p173
      $region42: #{non_local_attn.4} parent=39 // pred_check_branch
        %1342 = sbr.rel (%p1340) target = $region44
      $region43: #{non_local_attn.4} parent=39 // pred_region
        %s1343 = smul.u32 2, %s24
      $region44: #{non_local_attn.4} parent=39 // pred_fallthru
        _
      // Predicated region
      $region45: #{non_local_attn.4} parent=39 // pred_check
        %p1344 = pneg %p201
      $region46: #{non_local_attn.4} parent=39 // pred_check_branch
        %1346 = sbr.rel (%p1344) target = $region48
      $region47: #{non_local_attn.4} parent=39 // pred_region
        %s1347 = smul.u32 32, %s24
      $region48: #{non_local_attn.4} parent=39 // pred_fallthru
        _
      // Predicated region
      $region49: #{non_local_attn.4} parent=39 // pred_check
        %p1348 = pneg %p229
      $region50: #{non_local_attn.4} parent=39 // pred_check_branch
        %1350 = sbr.rel (%p1348) target = $region52
      $region51: #{non_local_attn.4} parent=39 // pred_region
        %s1351 = smul.u32 2, %s24
      $region52: #{non_local_attn.4} parent=39 // pred_fallthru
        _
    $region40: #{non_local_attn.4} parent=5 // pred_fallthru
      _
    %p1352 = scmp.le.s32.totalorder 2, %s14
    // Predicated region
    $region53: #{non_local_attn.4} parent=5 // pred_check
      %p1353 = pneg %p1352
    $region54: #{non_local_attn.4} parent=5 // pred_check_branch
      %1355 = sbr.rel (%p1353) target = $region56
    $region55: #{non_local_attn.4} parent=5 // pred_region
      %s1356 = ssub.s32 %s14, 2
      // Predicated region
      $region57: #{non_local_attn.4} parent=55 // pred_check
        %p1357 = pneg %p179
      $region58: #{non_local_attn.4} parent=55 // pred_check_branch
        %1359 = sbr.rel (%p1357) target = $region60
      $region59: #{non_local_attn.4} parent=55 // pred_region
        %s1360 = smul.u32 2, %s26
        %p1361 = scmp.lt.s32.totalorder %s25, 1
        %s1362 = scalar_select %p1361, %s25, 1
        %p1363 = scmp.lt.s32.totalorder %s1360, 1
        %s1364 = scalar_select %p1363, %s1360, 1
        %s1365 = smul.addr %s1362, 16
        %s1366 = sadd.s32 %s1364, %s1365
        %s1367 = smul.addr %s1366, 4
        %s1368 = scalar_lea.vmem %s5, %s1367
      $region60: #{non_local_attn.4} parent=55 // pred_fallthru
        _
      // Predicated region
      $region61: #{non_local_attn.4} parent=55 // pred_check
        %p1369 = pneg %p207
      $region62: #{non_local_attn.4} parent=55 // pred_check_branch
        %1371 = sbr.rel (%p1369) target = $region64
      $region63: #{non_local_attn.4} parent=55 // pred_region
        %s1372 = smul.u32 32, %s26
        %p1373 = scmp.lt.s32.totalorder %s25, 1
        %s1374 = scalar_select %p1373, %s25, 1
        %p1375 = scmp.lt.s32.totalorder %s1372, 31
        %s1376 = scalar_select %p1375, %s1372, 31
        %s1377 = smul.addr %s1374, 32
        %s1378 = sadd.s32 %s1376, %s1377
        %s1379 = smul.addr %s1378, 4
        %s1380 = scalar_lea.vmem %s6, %s1379
      $region64: #{non_local_attn.4} parent=55 // pred_fallthru
        _
      // Predicated region
      $region65: #{non_local_attn.4} parent=55 // pred_check
        %p1381 = pneg %p235
      $region66: #{non_local_attn.4} parent=55 // pred_check_branch
        %1383 = sbr.rel (%p1381) target = $region68
      $region67: #{non_local_attn.4} parent=55 // pred_region
        %s1384 = smul.u32 2, %s26
        %p1385 = scmp.lt.s32.totalorder %s25, 1
        %s1386 = scalar_select %p1385, %s25, 1
        %p1387 = scmp.lt.s32.totalorder %s1384, 1
        %s1388 = scalar_select %p1387, %s1384, 1
        %s1389 = smul.addr %s1386, 16
        %s1390 = sadd.s32 %s1388, %s1389
        %s1391 = smul.addr %s1390, 4
        %s1392 = scalar_lea.vmem %s7, %s1391
      $region68: #{non_local_attn.4} parent=55 // pred_fallthru
        _
    $region56: #{non_local_attn.4} parent=5 // pred_fallthru
      _
  $region6: #{non_local_attn.4} parent=0 // loop_footer
    %s18 = sadd.s32 1, %s14
  $region7: #{non_local_attn.4} parent=0 // loop_footer_branch
    %13 = sbr.rel target = $region3
  $region8: #{non_local_attn.4} parent=0 // loop_exit
    _

</llo_original>
